<compile_context>
chip_gen: v7x
topology: tpu7x:2x2x1
jax: 0.10.0
libtpu: 0.0.40
codegen_flags: <defaults>
</compile_context>

<pallas_src>
import functools

import jax
import jax.numpy as jnp
from jax.experimental import pallas as pl
from jax.experimental.pallas import tpu as pltpu

NEG_SLOPE = 0.01              # nn.LeakyReLU default
BN_EPS = 1e-5                 # nn.BatchNorm2d default
_KS = 5                       # conv kernel size fixed by the module
_VMEM_LIMIT = 32 * 1024 * 1024  # explicit scoped-VMEM limit (safe on v5e/v6e/v7x)


# ----------------------------- Pallas kernels ------------------------------

def _make_conv_kernel(Ho, Wo, apply_lrelu, emit_stats):
    """Direct 5x5 / stride-2 conv over one batch element.

    Inputs are the 4 stride-2 phases of the (already spatially padded) input, each of
    shape (1, Ho+2, Wo+2, Cin).  Tap (kh, kw) of the conv reads the contiguous window
    phase[kh%2, kw%2][kh//2 : kh//2+Ho, kw//2 : kw//2+Wo, :], so the whole conv is 25
    small MXU matmuls accumulated in f32 -- no im2col is ever materialized.
    """

    def kernel(p00_ref, p01_ref, p10_ref, p11_ref, w_ref, b_ref, out_ref, *stat_refs):
        phase_refs = ((p00_ref, p01_ref), (p10_ref, p11_ref))
        phases = {}
        for r in range(2):
            for c in range(2):
                x = phase_refs[r][c][0]                       # (Ho+2, Wo+2, Cin), f32
                if apply_lrelu:
                    # activation applied once per loaded element, not per patch copy
                    x = jnp.where(x > 0, x, NEG_SLOPE * x)
                phases[(r, c)] = x

        cout = w_ref.shape[-1]
        acc = jnp.zeros((Ho * Wo, cout), jnp.float32)
        for kh in range(_KS):
            for kw in range(_KS):
                xt = phases[(kh % 2, kw % 2)][kh // 2:kh // 2 + Ho,
                                              kw // 2:kw // 2 + Wo, :]
                xt = xt.reshape(Ho * Wo, xt.shape[-1])
                # bf16 operands -> native MXU throughput; f32 accumulation.
                acc = acc + jnp.dot(xt.astype(jnp.bfloat16),
                                    w_ref[kh * _KS + kw],
                                    preferred_element_type=jnp.float32)

        y = acc + b_ref[...]                                   # (Ho*Wo, Cout), f32
        out_ref[0] = y.reshape(Ho, Wo, cout).astype(out_ref.dtype)

        if emit_stats:
            # Per-grid-step BatchNorm partial statistics (fused into the conv epilogue).
            sum_ref, sq_ref = stat_refs
            sum_ref[0] = jnp.sum(y, axis=0, keepdims=True)     # (1, Cout)
            sq_ref[0] = jnp.sum(y * y, axis=0, keepdims=True)  # (1, Cout)

    return kernel


def _bn_apply_kernel(y_ref, s_ref, q_ref, g_ref, b_ref, o_ref, *, m_total):
    # Training-mode BatchNorm2d (biased variance), applied as y*scale + shift to an
    # (TM, C) row tile using globally reduced per-channel sum / sum-of-squares.
    mean = s_ref[...] / m_total
    var = jnp.maximum(q_ref[...] / m_total - mean * mean, 0.0)
    inv = jax.lax.rsqrt(var + BN_EPS)
    scale = g_ref[...] * inv
    shift = b_ref[...] - mean * scale
    o_ref[...] = y_ref[...] * scale + shift


# ------------------------------ wrappers ------------------------------------

def _pad_and_phase_split(x_nhwc):
    """Pad (p=2) and split into the 4 stride-2 phases.

    phase[r, c][n, i, j, :] == x_padded[n, 2*i + r, 2*j + c, :]
    Returned in order (r, c) = (0,0), (0,1), (1,0), (1,1); each (N, H//2+2, W//2+2, C).
    """
    N, H, W, C = x_nhwc.shape
    assert H % 2 == 0 and W % 2 == 0, "even spatial dims required for stride-2 phases"
    xp = jnp.pad(x_nhwc, ((0, 0), (2, 2), (2, 2), (0, 0)))
    return [xp[:, r::2, c::2, :] for r in (0, 1) for c in (0, 1)]


def _conv5x5_s2(phases, w, b, *, apply_lrelu, emit_stats):
    """phases: 4x (N, Ho+2, Wo+2, Cin); w: (25, Cin, Cout) bf16; b: (1, Cout) f32."""
    N, Hh, Wh, Cin = phases[0].shape
    Cout = w.shape[-1]
    Ho, Wo = Hh - 2, Wh - 2

    kernel = _make_conv_kernel(Ho, Wo, apply_lrelu, emit_stats)

    phase_spec = pl.BlockSpec((1, Hh, Wh, Cin), lambda n: (n, 0, 0, 0))
    in_specs = [phase_spec] * 4 + [
        pl.BlockSpec((_KS * _KS, Cin, Cout), lambda n: (0, 0, 0)),  # resident weights
        pl.BlockSpec((1, Cout), lambda n: (0, 0)),                  # bias row
    ]
    out_shape = [jax.ShapeDtypeStruct((N, Ho, Wo, Cout), jnp.float32)]
    out_specs = [pl.BlockSpec((1, Ho, Wo, Cout), lambda n: (n, 0, 0, 0))]
    if emit_stats:
        out_shape += [jax.ShapeDtypeStruct((N, 1, Cout), jnp.float32)] * 2
        out_specs += [pl.BlockSpec((1, 1, Cout), lambda n: (n, 0, 0))] * 2

    return pl.pallas_call(
        kernel,
        out_shape=tuple(out_shape) if emit_stats else out_shape[0],
        grid=(N,),
        in_specs=in_specs,
        out_specs=tuple(out_specs) if emit_stats else out_specs[0],
        compiler_params=pltpu.CompilerParams(
            dimension_semantics=("parallel",),       # batch axis shards across TCs (v7x)
            vmem_limit_bytes=_VMEM_LIMIT),
    )(*phases, w, b)


def _bn_apply(y_flat, ssum, ssq, gamma_row, beta_row):
    """Tiled BN apply: y_flat (M, C) row tiles; stats/gamma/beta as (1, C) rows."""
    M, C = y_flat.shape
    TM = M if M <= 512 else 512            # large row tiles amortize per-step overhead
    row_spec = pl.BlockSpec((1, C), lambda i: (0, 0))
    return pl.pallas_call(
        functools.partial(_bn_apply_kernel, m_total=float(M)),
        out_shape=jax.ShapeDtypeStruct((M, C), jnp.float32),
        grid=(pl.cdiv(M, TM),),
        in_specs=[pl.BlockSpec((TM, C), lambda i: (i, 0)),
                  row_spec, row_spec, row_spec, row_spec],
        out_specs=pl.BlockSpec((TM, C), lambda i: (i, 0)),
        compiler_params=pltpu.CompilerParams(
            dimension_semantics=("parallel",),
            vmem_limit_bytes=_VMEM_LIMIT),
    )(y_flat, ssum, ssq, gamma_row, beta_row)


def prepare_params(params):
    """One-time repack of PyTorch-layout parameters (hoisted out of the per-call path)."""
    def prep_w(w):  # (Cout, Cin, 5, 5) OIHW -> (25, Cin, Cout), bf16 for the MXU
        cout, cin = w.shape[0], w.shape[1]
        return (jnp.transpose(w, (2, 3, 1, 0))
                .reshape(_KS * _KS, cin, cout).astype(jnp.bfloat16))
    return {
        "w1": prep_w(params["w1"]),
        "b1": params["b1"].reshape(1, -1).astype(jnp.float32),
        "w2": prep_w(params["w2"]),
        "b2": params["b2"].reshape(1, -1).astype(jnp.float32),
        "gamma": params["gamma"].reshape(1, -1).astype(jnp.float32),
        "beta": params["beta"].reshape(1, -1).astype(jnp.float32),
    }


def encoder_forward(x_nchw, prepared):
    """Returns (x1, x2) in NCHW, matching PyTorch Encoder.forward (training mode)."""
    # NCHW -> NHWC for the kernels (tiny tensors here; a production pipeline would stay
    # NHWC end-to-end and drop these layout passes entirely).
    x = jnp.transpose(x_nchw, (0, 2, 3, 1))

    # conv1
    ph1 = _pad_and_phase_split(x)
    x1_nhwc = _conv5x5_s2(ph1, prepared["w1"], prepared["b1"],
                          apply_lrelu=False, emit_stats=False)

    # conv2: LeakyReLU fused on the loaded input, BN partial stats fused in the epilogue.
    ph2 = _pad_and_phase_split(x1_nhwc)
    y2, psum, psq = _conv5x5_s2(ph2, prepared["w2"], prepared["b2"],
                                apply_lrelu=True, emit_stats=True)

    N2, H2, W2, C2 = y2.shape
    M2 = N2 * H2 * W2
    ssum = jnp.sum(psum, axis=0)            # (1, C2) global per-channel sum
    ssq = jnp.sum(psq, axis=0)              # (1, C2) global per-channel sum of squares
    x2_flat = _bn_apply(y2.reshape(M2, C2), ssum, ssq,
                        prepared["gamma"], prepared["beta"])
    x2_nhwc = x2_flat.reshape(N2, H2, W2, C2)

    x1 = jnp.transpose(x1_nhwc, (0, 3, 1, 2))
    x2 = jnp.transpose(x2_nhwc, (0, 3, 1, 2))
    return x1, x2
    # TODO(synk): BatchNorm running-stats (momentum buffer) update is training-only
    # bookkeeping with no effect on the returned tensors; not modeled here.


# ------------------------- pure-JAX reference ------------------------------

def _reference_forward(x, params):
    dn = ("NCHW", "OIHW", "NCHW")
    x1 = jax.lax.conv_general_dilated(
        x, params["w1"], (2, 2), ((2, 2), (2, 2)), dimension_numbers=dn
    ) + params["b1"].reshape(1, -1, 1, 1)
    a = jnp.where(x1 > 0, x1, NEG_SLOPE * x1)
    y = jax.lax.conv_general_dilated(
        a, params["w2"], (2, 2), ((2, 2), (2, 2)), dimension_numbers=dn
    ) + params["b2"].reshape(1, -1, 1, 1)
    mean = jnp.mean(y, axis=(0, 2, 3), keepdims=True)
    var = jnp.mean((y - mean) ** 2, axis=(0, 2, 3), keepdims=True)
    x2 = (y - mean) * jax.lax.rsqrt(var + BN_EPS) * params["gamma"].reshape(1, -1, 1, 1) \
        + params["beta"].reshape(1, -1, 1, 1)
    return x1, x2


# --------------------------------- main -------------------------------------

if __name__ == "__main__":
    key = jax.random.PRNGKey(0)
    k_x, k_w1, k_b1, k_w2, k_b2, k_g, k_be = jax.random.split(key, 7)

    batch, in_channels, spatial, nFeat = 2, 4, 16, 8

    x = jax.random.normal(k_x, (batch, in_channels, spatial, spatial), jnp.float32)

    fan1 = in_channels * 5 * 5
    fan2 = nFeat * 5 * 5
    params = {
        "w1": jax.random.normal(k_w1, (nFeat, in_channels, 5, 5), jnp.float32)
              / jnp.sqrt(fan1),
        "b1": 0.1 * jax.random.normal(k_b1, (nFeat,), jnp.float32),
        "w2": jax.random.normal(k_w2, (nFeat * 2, nFeat, 5, 5), jnp.float32)
              / jnp.sqrt(fan2),
        "b2": 0.1 * jax.random.normal(k_b2, (nFeat * 2,), jnp.float32),
        # non-trivial affine params to exercise the full BN path
        "gamma": 1.0 + 0.1 * jax.random.normal(k_g, (nFeat * 2,), jnp.float32),
        "beta": 0.1 * jax.random.normal(k_be, (nFeat * 2,), jnp.float32),
    }

    prepared = prepare_params(params)        # one-time weight repack (hoisted)
    fwd = jax.jit(encoder_forward)
    x1, x2 = fwd(x, prepared)
    jax.block_until_ready((x1, x2))

    assert x1.shape == (batch, nFeat, spatial // 2, spatial // 2), x1.shape
    assert x2.shape == (batch, nFeat * 2, spatial // 4, spatial // 4), x2.shape

    r1, r2 = _reference_forward(x, params)
    err1 = float(jnp.max(jnp.abs(x1 - r1)))
    err2 = float(jnp.max(jnp.abs(x2 - r2)))
    assert err1 < 5e-2 and err2 < 5e-2, (err1, err2)

    print("KERNEL_OK")
</pallas_src>

<mosaic_0001>
module attributes {stable_mosaic.version = 11 : i64} {
  func.func @kernel(%arg0: i32, %arg1: memref<1x10x10x4xf32, #tpu.memory_space<vmem>>, %arg2: memref<1x10x10x4xf32, #tpu.memory_space<vmem>>, %arg3: memref<1x10x10x4xf32, #tpu.memory_space<vmem>>, %arg4: memref<1x10x10x4xf32, #tpu.memory_space<vmem>>, %arg5: memref<25x4x8xbf16, #tpu.memory_space<vmem>>, %arg6: memref<1x8xf32, #tpu.memory_space<vmem>>, %arg7: memref<1x8x8x8xf32, #tpu.memory_space<vmem>>) attributes {dimension_semantics = [#tpu.dimension_semantics<parallel>], iteration_bounds = array<i64: 2>, scalar_prefetch = 0 : i64, scratch_operands = 0 : i64, tpu.core_type = #tpu.core_type<tc>, window_params = [{transform_indices = @transform_0, window_bounds = array<i64: 1, 10, 10, 4>}, {transform_indices = @transform_1, window_bounds = array<i64: 1, 10, 10, 4>}, {transform_indices = @transform_2, window_bounds = array<i64: 1, 10, 10, 4>}, {transform_indices = @transform_3, window_bounds = array<i64: 1, 10, 10, 4>}, {pipeline_mode = #tpu.pipeline_mode<synchronous>, transform_indices = @transform_4, window_bounds = array<i64: 25, 4, 8>}, {pipeline_mode = #tpu.pipeline_mode<synchronous>, transform_indices = @transform_5, window_bounds = array<i64: 1, 8>}, {transform_indices = @transform_6, window_bounds = array<i64: 1, 8, 8, 8>}]} {
    %c0 = arith.constant 0 : index
    %c0_0 = arith.constant 0 : index
    %c0_1 = arith.constant 0 : index
    %c0_2 = arith.constant 0 : index
    %0 = vector.load %arg1[%c0, %c0_0, %c0_1, %c0_2] : memref<1x10x10x4xf32, #tpu.memory_space<vmem>>, vector<1x10x10x4xf32>
    %1 = vector.shape_cast %0 : vector<1x10x10x4xf32> to vector<10x10x4xf32>
    %c0_3 = arith.constant 0 : index
    %c0_4 = arith.constant 0 : index
    %c0_5 = arith.constant 0 : index
    %c0_6 = arith.constant 0 : index
    %2 = vector.load %arg2[%c0_3, %c0_4, %c0_5, %c0_6] : memref<1x10x10x4xf32, #tpu.memory_space<vmem>>, vector<1x10x10x4xf32>
    %3 = vector.shape_cast %2 : vector<1x10x10x4xf32> to vector<10x10x4xf32>
    %c0_7 = arith.constant 0 : index
    %c0_8 = arith.constant 0 : index
    %c0_9 = arith.constant 0 : index
    %c0_10 = arith.constant 0 : index
    %4 = vector.load %arg3[%c0_7, %c0_8, %c0_9, %c0_10] : memref<1x10x10x4xf32, #tpu.memory_space<vmem>>, vector<1x10x10x4xf32>
    %5 = vector.shape_cast %4 : vector<1x10x10x4xf32> to vector<10x10x4xf32>
    %c0_11 = arith.constant 0 : index
    %c0_12 = arith.constant 0 : index
    %c0_13 = arith.constant 0 : index
    %c0_14 = arith.constant 0 : index
    %6 = vector.load %arg4[%c0_11, %c0_12, %c0_13, %c0_14] : memref<1x10x10x4xf32, #tpu.memory_space<vmem>>, vector<1x10x10x4xf32>
    %7 = vector.shape_cast %6 : vector<1x10x10x4xf32> to vector<10x10x4xf32>
    %cst = arith.constant 0.000000e+00 : f32
    %8 = vector.broadcast %cst : f32 to vector<64x8xf32>
    %9 = vector.extract_strided_slice %1 {offsets = [0, 0, 0], sizes = [8, 8, 4], strides = [1, 1, 1]} : vector<10x10x4xf32> to vector<8x8x4xf32>
    %10 = vector.shape_cast %9 : vector<8x8x4xf32> to vector<64x4xf32>
    %11 = arith.truncf %10 : vector<64x4xf32> to vector<64x4xbf16>
    %c0_15 = arith.constant 0 : index
    %c0_16 = arith.constant 0 : index
    %c0_17 = arith.constant 0 : index
    %12 = vector.load %arg5[%c0_15, %c0_16, %c0_17] : memref<25x4x8xbf16, #tpu.memory_space<vmem>>, vector<1x4x8xbf16>
    %13 = vector.shape_cast %12 : vector<1x4x8xbf16> to vector<4x8xbf16>
    %cst_18 = arith.constant dense<0.000000e+00> : vector<64x8xf32>
    %14 = tpu.matmul %11, %13, %cst_18 {dimension_numbers = #tpu.dot_dimension_numbers<[1], [0], [0], [1], [0, 0, 1, 1], [], []>} : vector<64x4xbf16>, vector<4x8xbf16>, vector<64x8xf32> -> vector<64x8xf32>
    %15 = arith.addf %8, %14 : vector<64x8xf32>
    %16 = vector.extract_strided_slice %3 {offsets = [0, 0, 0], sizes = [8, 8, 4], strides = [1, 1, 1]} : vector<10x10x4xf32> to vector<8x8x4xf32>
    %17 = vector.shape_cast %16 : vector<8x8x4xf32> to vector<64x4xf32>
    %18 = arith.truncf %17 : vector<64x4xf32> to vector<64x4xbf16>
    %c1 = arith.constant 1 : index
    %c0_19 = arith.constant 0 : index
    %c0_20 = arith.constant 0 : index
    %19 = vector.load %arg5[%c1, %c0_19, %c0_20] : memref<25x4x8xbf16, #tpu.memory_space<vmem>>, vector<1x4x8xbf16>
    %20 = vector.shape_cast %19 : vector<1x4x8xbf16> to vector<4x8xbf16>
    %cst_21 = arith.constant dense<0.000000e+00> : vector<64x8xf32>
    %21 = tpu.matmul %18, %20, %cst_21 {dimension_numbers = #tpu.dot_dimension_numbers<[1], [0], [0], [1], [0, 0, 1, 1], [], []>} : vector<64x4xbf16>, vector<4x8xbf16>, vector<64x8xf32> -> vector<64x8xf32>
    %22 = arith.addf %15, %21 : vector<64x8xf32>
    %23 = vector.extract_strided_slice %1 {offsets = [0, 1, 0], sizes = [8, 8, 4], strides = [1, 1, 1]} : vector<10x10x4xf32> to vector<8x8x4xf32>
    %24 = vector.shape_cast %23 : vector<8x8x4xf32> to vector<64x4xf32>
    %25 = arith.truncf %24 : vector<64x4xf32> to vector<64x4xbf16>
    %c2 = arith.constant 2 : index
    %c0_22 = arith.constant 0 : index
    %c0_23 = arith.constant 0 : index
    %26 = vector.load %arg5[%c2, %c0_22, %c0_23] : memref<25x4x8xbf16, #tpu.memory_space<vmem>>, vector<1x4x8xbf16>
    %27 = vector.shape_cast %26 : vector<1x4x8xbf16> to vector<4x8xbf16>
    %cst_24 = arith.constant dense<0.000000e+00> : vector<64x8xf32>
    %28 = tpu.matmul %25, %27, %cst_24 {dimension_numbers = #tpu.dot_dimension_numbers<[1], [0], [0], [1], [0, 0, 1, 1], [], []>} : vector<64x4xbf16>, vector<4x8xbf16>, vector<64x8xf32> -> vector<64x8xf32>
    %29 = arith.addf %22, %28 : vector<64x8xf32>
    %30 = vector.extract_strided_slice %3 {offsets = [0, 1, 0], sizes = [8, 8, 4], strides = [1, 1, 1]} : vector<10x10x4xf32> to vector<8x8x4xf32>
    %31 = vector.shape_cast %30 : vector<8x8x4xf32> to vector<64x4xf32>
    %32 = arith.truncf %31 : vector<64x4xf32> to vector<64x4xbf16>
    %c3 = arith.constant 3 : index
    %c0_25 = arith.constant 0 : index
    %c0_26 = arith.constant 0 : index
    %33 = vector.load %arg5[%c3, %c0_25, %c0_26] : memref<25x4x8xbf16, #tpu.memory_space<vmem>>, vector<1x4x8xbf16>
    %34 = vector.shape_cast %33 : vector<1x4x8xbf16> to vector<4x8xbf16>
    %cst_27 = arith.constant dense<0.000000e+00> : vector<64x8xf32>
    %35 = tpu.matmul %32, %34, %cst_27 {dimension_numbers = #tpu.dot_dimension_numbers<[1], [0], [0], [1], [0, 0, 1, 1], [], []>} : vector<64x4xbf16>, vector<4x8xbf16>, vector<64x8xf32> -> vector<64x8xf32>
    %36 = arith.addf %29, %35 : vector<64x8xf32>
    %37 = vector.extract_strided_slice %1 {offsets = [0, 2, 0], sizes = [8, 8, 4], strides = [1, 1, 1]} : vector<10x10x4xf32> to vector<8x8x4xf32>
    %38 = vector.shape_cast %37 : vector<8x8x4xf32> to vector<64x4xf32>
    %39 = arith.truncf %38 : vector<64x4xf32> to vector<64x4xbf16>
    %c4 = arith.constant 4 : index
    %c0_28 = arith.constant 0 : index
    %c0_29 = arith.constant 0 : index
    %40 = vector.load %arg5[%c4, %c0_28, %c0_29] : memref<25x4x8xbf16, #tpu.memory_space<vmem>>, vector<1x4x8xbf16>
    %41 = vector.shape_cast %40 : vector<1x4x8xbf16> to vector<4x8xbf16>
    %cst_30 = arith.constant dense<0.000000e+00> : vector<64x8xf32>
    %42 = tpu.matmul %39, %41, %cst_30 {dimension_numbers = #tpu.dot_dimension_numbers<[1], [0], [0], [1], [0, 0, 1, 1], [], []>} : vector<64x4xbf16>, vector<4x8xbf16>, vector<64x8xf32> -> vector<64x8xf32>
    %43 = arith.addf %36, %42 : vector<64x8xf32>
    %44 = vector.extract_strided_slice %5 {offsets = [0, 0, 0], sizes = [8, 8, 4], strides = [1, 1, 1]} : vector<10x10x4xf32> to vector<8x8x4xf32>
    %45 = vector.shape_cast %44 : vector<8x8x4xf32> to vector<64x4xf32>
    %46 = arith.truncf %45 : vector<64x4xf32> to vector<64x4xbf16>
    %c5 = arith.constant 5 : index
    %c0_31 = arith.constant 0 : index
    %c0_32 = arith.constant 0 : index
    %47 = vector.load %arg5[%c5, %c0_31, %c0_32] : memref<25x4x8xbf16, #tpu.memory_space<vmem>>, vector<1x4x8xbf16>
    %48 = vector.shape_cast %47 : vector<1x4x8xbf16> to vector<4x8xbf16>
    %cst_33 = arith.constant dense<0.000000e+00> : vector<64x8xf32>
    %49 = tpu.matmul %46, %48, %cst_33 {dimension_numbers = #tpu.dot_dimension_numbers<[1], [0], [0], [1], [0, 0, 1, 1], [], []>} : vector<64x4xbf16>, vector<4x8xbf16>, vector<64x8xf32> -> vector<64x8xf32>
    %50 = arith.addf %43, %49 : vector<64x8xf32>
    %51 = vector.extract_strided_slice %7 {offsets = [0, 0, 0], sizes = [8, 8, 4], strides = [1, 1, 1]} : vector<10x10x4xf32> to vector<8x8x4xf32>
    %52 = vector.shape_cast %51 : vector<8x8x4xf32> to vector<64x4xf32>
    %53 = arith.truncf %52 : vector<64x4xf32> to vector<64x4xbf16>
    %c6 = arith.constant 6 : index
    %c0_34 = arith.constant 0 : index
    %c0_35 = arith.constant 0 : index
    %54 = vector.load %arg5[%c6, %c0_34, %c0_35] : memref<25x4x8xbf16, #tpu.memory_space<vmem>>, vector<1x4x8xbf16>
    %55 = vector.shape_cast %54 : vector<1x4x8xbf16> to vector<4x8xbf16>
    %cst_36 = arith.constant dense<0.000000e+00> : vector<64x8xf32>
    %56 = tpu.matmul %53, %55, %cst_36 {dimension_numbers = #tpu.dot_dimension_numbers<[1], [0], [0], [1], [0, 0, 1, 1], [], []>} : vector<64x4xbf16>, vector<4x8xbf16>, vector<64x8xf32> -> vector<64x8xf32>
    %57 = arith.addf %50, %56 : vector<64x8xf32>
    %58 = vector.extract_strided_slice %5 {offsets = [0, 1, 0], sizes = [8, 8, 4], strides = [1, 1, 1]} : vector<10x10x4xf32> to vector<8x8x4xf32>
    %59 = vector.shape_cast %58 : vector<8x8x4xf32> to vector<64x4xf32>
    %60 = arith.truncf %59 : vector<64x4xf32> to vector<64x4xbf16>
    %c7 = arith.constant 7 : index
    %c0_37 = arith.constant 0 : index
    %c0_38 = arith.constant 0 : index
    %61 = vector.load %arg5[%c7, %c0_37, %c0_38] : memref<25x4x8xbf16, #tpu.memory_space<vmem>>, vector<1x4x8xbf16>
    %62 = vector.shape_cast %61 : vector<1x4x8xbf16> to vector<4x8xbf16>
    %cst_39 = arith.constant dense<0.000000e+00> : vector<64x8xf32>
    %63 = tpu.matmul %60, %62, %cst_39 {dimension_numbers = #tpu.dot_dimension_numbers<[1], [0], [0], [1], [0, 0, 1, 1], [], []>} : vector<64x4xbf16>, vector<4x8xbf16>, vector<64x8xf32> -> vector<64x8xf32>
    %64 = arith.addf %57, %63 : vector<64x8xf32>
    %65 = vector.extract_strided_slice %7 {offsets = [0, 1, 0], sizes = [8, 8, 4], strides = [1, 1, 1]} : vector<10x10x4xf32> to vector<8x8x4xf32>
    %66 = vector.shape_cast %65 : vector<8x8x4xf32> to vector<64x4xf32>
    %67 = arith.truncf %66 : vector<64x4xf32> to vector<64x4xbf16>
    %c8 = arith.constant 8 : index
    %c0_40 = arith.constant 0 : index
    %c0_41 = arith.constant 0 : index
    %68 = vector.load %arg5[%c8, %c0_40, %c0_41] : memref<25x4x8xbf16, #tpu.memory_space<vmem>>, vector<1x4x8xbf16>
    %69 = vector.shape_cast %68 : vector<1x4x8xbf16> to vector<4x8xbf16>
    %cst_42 = arith.constant dense<0.000000e+00> : vector<64x8xf32>
    %70 = tpu.matmul %67, %69, %cst_42 {dimension_numbers = #tpu.dot_dimension_numbers<[1], [0], [0], [1], [0, 0, 1, 1], [], []>} : vector<64x4xbf16>, vector<4x8xbf16>, vector<64x8xf32> -> vector<64x8xf32>
    %71 = arith.addf %64, %70 : vector<64x8xf32>
    %72 = vector.extract_strided_slice %5 {offsets = [0, 2, 0], sizes = [8, 8, 4], strides = [1, 1, 1]} : vector<10x10x4xf32> to vector<8x8x4xf32>
    %73 = vector.shape_cast %72 : vector<8x8x4xf32> to vector<64x4xf32>
    %74 = arith.truncf %73 : vector<64x4xf32> to vector<64x4xbf16>
    %c9 = arith.constant 9 : index
    %c0_43 = arith.constant 0 : index
    %c0_44 = arith.constant 0 : index
    %75 = vector.load %arg5[%c9, %c0_43, %c0_44] : memref<25x4x8xbf16, #tpu.memory_space<vmem>>, vector<1x4x8xbf16>
    %76 = vector.shape_cast %75 : vector<1x4x8xbf16> to vector<4x8xbf16>
    %cst_45 = arith.constant dense<0.000000e+00> : vector<64x8xf32>
    %77 = tpu.matmul %74, %76, %cst_45 {dimension_numbers = #tpu.dot_dimension_numbers<[1], [0], [0], [1], [0, 0, 1, 1], [], []>} : vector<64x4xbf16>, vector<4x8xbf16>, vector<64x8xf32> -> vector<64x8xf32>
    %78 = arith.addf %71, %77 : vector<64x8xf32>
    %79 = vector.extract_strided_slice %1 {offsets = [1, 0, 0], sizes = [8, 8, 4], strides = [1, 1, 1]} : vector<10x10x4xf32> to vector<8x8x4xf32>
    %80 = vector.shape_cast %79 : vector<8x8x4xf32> to vector<64x4xf32>
    %81 = arith.truncf %80 : vector<64x4xf32> to vector<64x4xbf16>
    %c10 = arith.constant 10 : index
    %c0_46 = arith.constant 0 : index
    %c0_47 = arith.constant 0 : index
    %82 = vector.load %arg5[%c10, %c0_46, %c0_47] : memref<25x4x8xbf16, #tpu.memory_space<vmem>>, vector<1x4x8xbf16>
    %83 = vector.shape_cast %82 : vector<1x4x8xbf16> to vector<4x8xbf16>
    %cst_48 = arith.constant dense<0.000000e+00> : vector<64x8xf32>
    %84 = tpu.matmul %81, %83, %cst_48 {dimension_numbers = #tpu.dot_dimension_numbers<[1], [0], [0], [1], [0, 0, 1, 1], [], []>} : vector<64x4xbf16>, vector<4x8xbf16>, vector<64x8xf32> -> vector<64x8xf32>
    %85 = arith.addf %78, %84 : vector<64x8xf32>
    %86 = vector.extract_strided_slice %3 {offsets = [1, 0, 0], sizes = [8, 8, 4], strides = [1, 1, 1]} : vector<10x10x4xf32> to vector<8x8x4xf32>
    %87 = vector.shape_cast %86 : vector<8x8x4xf32> to vector<64x4xf32>
    %88 = arith.truncf %87 : vector<64x4xf32> to vector<64x4xbf16>
    %c11 = arith.constant 11 : index
    %c0_49 = arith.constant 0 : index
    %c0_50 = arith.constant 0 : index
    %89 = vector.load %arg5[%c11, %c0_49, %c0_50] : memref<25x4x8xbf16, #tpu.memory_space<vmem>>, vector<1x4x8xbf16>
    %90 = vector.shape_cast %89 : vector<1x4x8xbf16> to vector<4x8xbf16>
    %cst_51 = arith.constant dense<0.000000e+00> : vector<64x8xf32>
    %91 = tpu.matmul %88, %90, %cst_51 {dimension_numbers = #tpu.dot_dimension_numbers<[1], [0], [0], [1], [0, 0, 1, 1], [], []>} : vector<64x4xbf16>, vector<4x8xbf16>, vector<64x8xf32> -> vector<64x8xf32>
    %92 = arith.addf %85, %91 : vector<64x8xf32>
    %93 = vector.extract_strided_slice %1 {offsets = [1, 1, 0], sizes = [8, 8, 4], strides = [1, 1, 1]} : vector<10x10x4xf32> to vector<8x8x4xf32>
    %94 = vector.shape_cast %93 : vector<8x8x4xf32> to vector<64x4xf32>
    %95 = arith.truncf %94 : vector<64x4xf32> to vector<64x4xbf16>
    %c12 = arith.constant 12 : index
    %c0_52 = arith.constant 0 : index
    %c0_53 = arith.constant 0 : index
    %96 = vector.load %arg5[%c12, %c0_52, %c0_53] : memref<25x4x8xbf16, #tpu.memory_space<vmem>>, vector<1x4x8xbf16>
    %97 = vector.shape_cast %96 : vector<1x4x8xbf16> to vector<4x8xbf16>
    %cst_54 = arith.constant dense<0.000000e+00> : vector<64x8xf32>
    %98 = tpu.matmul %95, %97, %cst_54 {dimension_numbers = #tpu.dot_dimension_numbers<[1], [0], [0], [1], [0, 0, 1, 1], [], []>} : vector<64x4xbf16>, vector<4x8xbf16>, vector<64x8xf32> -> vector<64x8xf32>
    %99 = arith.addf %92, %98 : vector<64x8xf32>
    %100 = vector.extract_strided_slice %3 {offsets = [1, 1, 0], sizes = [8, 8, 4], strides = [1, 1, 1]} : vector<10x10x4xf32> to vector<8x8x4xf32>
    %101 = vector.shape_cast %100 : vector<8x8x4xf32> to vector<64x4xf32>
    %102 = arith.truncf %101 : vector<64x4xf32> to vector<64x4xbf16>
    %c13 = arith.constant 13 : index
    %c0_55 = arith.constant 0 : index
    %c0_56 = arith.constant 0 : index
    %103 = vector.load %arg5[%c13, %c0_55, %c0_56] : memref<25x4x8xbf16, #tpu.memory_space<vmem>>, vector<1x4x8xbf16>
    %104 = vector.shape_cast %103 : vector<1x4x8xbf16> to vector<4x8xbf16>
    %cst_57 = arith.constant dense<0.000000e+00> : vector<64x8xf32>
    %105 = tpu.matmul %102, %104, %cst_57 {dimension_numbers = #tpu.dot_dimension_numbers<[1], [0], [0], [1], [0, 0, 1, 1], [], []>} : vector<64x4xbf16>, vector<4x8xbf16>, vector<64x8xf32> -> vector<64x8xf32>
    %106 = arith.addf %99, %105 : vector<64x8xf32>
    %107 = vector.extract_strided_slice %1 {offsets = [1, 2, 0], sizes = [8, 8, 4], strides = [1, 1, 1]} : vector<10x10x4xf32> to vector<8x8x4xf32>
    %108 = vector.shape_cast %107 : vector<8x8x4xf32> to vector<64x4xf32>
    %109 = arith.truncf %108 : vector<64x4xf32> to vector<64x4xbf16>
    %c14 = arith.constant 14 : index
    %c0_58 = arith.constant 0 : index
    %c0_59 = arith.constant 0 : index
    %110 = vector.load %arg5[%c14, %c0_58, %c0_59] : memref<25x4x8xbf16, #tpu.memory_space<vmem>>, vector<1x4x8xbf16>
    %111 = vector.shape_cast %110 : vector<1x4x8xbf16> to vector<4x8xbf16>
    %cst_60 = arith.constant dense<0.000000e+00> : vector<64x8xf32>
    %112 = tpu.matmul %109, %111, %cst_60 {dimension_numbers = #tpu.dot_dimension_numbers<[1], [0], [0], [1], [0, 0, 1, 1], [], []>} : vector<64x4xbf16>, vector<4x8xbf16>, vector<64x8xf32> -> vector<64x8xf32>
    %113 = arith.addf %106, %112 : vector<64x8xf32>
    %114 = vector.extract_strided_slice %5 {offsets = [1, 0, 0], sizes = [8, 8, 4], strides = [1, 1, 1]} : vector<10x10x4xf32> to vector<8x8x4xf32>
    %115 = vector.shape_cast %114 : vector<8x8x4xf32> to vector<64x4xf32>
    %116 = arith.truncf %115 : vector<64x4xf32> to vector<64x4xbf16>
    %c15 = arith.constant 15 : index
    %c0_61 = arith.constant 0 : index
    %c0_62 = arith.constant 0 : index
    %117 = vector.load %arg5[%c15, %c0_61, %c0_62] : memref<25x4x8xbf16, #tpu.memory_space<vmem>>, vector<1x4x8xbf16>
    %118 = vector.shape_cast %117 : vector<1x4x8xbf16> to vector<4x8xbf16>
    %cst_63 = arith.constant dense<0.000000e+00> : vector<64x8xf32>
    %119 = tpu.matmul %116, %118, %cst_63 {dimension_numbers = #tpu.dot_dimension_numbers<[1], [0], [0], [1], [0, 0, 1, 1], [], []>} : vector<64x4xbf16>, vector<4x8xbf16>, vector<64x8xf32> -> vector<64x8xf32>
    %120 = arith.addf %113, %119 : vector<64x8xf32>
    %121 = vector.extract_strided_slice %7 {offsets = [1, 0, 0], sizes = [8, 8, 4], strides = [1, 1, 1]} : vector<10x10x4xf32> to vector<8x8x4xf32>
    %122 = vector.shape_cast %121 : vector<8x8x4xf32> to vector<64x4xf32>
    %123 = arith.truncf %122 : vector<64x4xf32> to vector<64x4xbf16>
    %c16 = arith.constant 16 : index
    %c0_64 = arith.constant 0 : index
    %c0_65 = arith.constant 0 : index
    %124 = vector.load %arg5[%c16, %c0_64, %c0_65] : memref<25x4x8xbf16, #tpu.memory_space<vmem>>, vector<1x4x8xbf16>
    %125 = vector.shape_cast %124 : vector<1x4x8xbf16> to vector<4x8xbf16>
    %cst_66 = arith.constant dense<0.000000e+00> : vector<64x8xf32>
    %126 = tpu.matmul %123, %125, %cst_66 {dimension_numbers = #tpu.dot_dimension_numbers<[1], [0], [0], [1], [0, 0, 1, 1], [], []>} : vector<64x4xbf16>, vector<4x8xbf16>, vector<64x8xf32> -> vector<64x8xf32>
    %127 = arith.addf %120, %126 : vector<64x8xf32>
    %128 = vector.extract_strided_slice %5 {offsets = [1, 1, 0], sizes = [8, 8, 4], strides = [1, 1, 1]} : vector<10x10x4xf32> to vector<8x8x4xf32>
    %129 = vector.shape_cast %128 : vector<8x8x4xf32> to vector<64x4xf32>
    %130 = arith.truncf %129 : vector<64x4xf32> to vector<64x4xbf16>
    %c17 = arith.constant 17 : index
    %c0_67 = arith.constant 0 : index
    %c0_68 = arith.constant 0 : index
    %131 = vector.load %arg5[%c17, %c0_67, %c0_68] : memref<25x4x8xbf16, #tpu.memory_space<vmem>>, vector<1x4x8xbf16>
    %132 = vector.shape_cast %131 : vector<1x4x8xbf16> to vector<4x8xbf16>
    %cst_69 = arith.constant dense<0.000000e+00> : vector<64x8xf32>
    %133 = tpu.matmul %130, %132, %cst_69 {dimension_numbers = #tpu.dot_dimension_numbers<[1], [0], [0], [1], [0, 0, 1, 1], [], []>} : vector<64x4xbf16>, vector<4x8xbf16>, vector<64x8xf32> -> vector<64x8xf32>
    %134 = arith.addf %127, %133 : vector<64x8xf32>
    %135 = vector.extract_strided_slice %7 {offsets = [1, 1, 0], sizes = [8, 8, 4], strides = [1, 1, 1]} : vector<10x10x4xf32> to vector<8x8x4xf32>
    %136 = vector.shape_cast %135 : vector<8x8x4xf32> to vector<64x4xf32>
    %137 = arith.truncf %136 : vector<64x4xf32> to vector<64x4xbf16>
    %c18 = arith.constant 18 : index
    %c0_70 = arith.constant 0 : index
    %c0_71 = arith.constant 0 : index
    %138 = vector.load %arg5[%c18, %c0_70, %c0_71] : memref<25x4x8xbf16, #tpu.memory_space<vmem>>, vector<1x4x8xbf16>
    %139 = vector.shape_cast %138 : vector<1x4x8xbf16> to vector<4x8xbf16>
    %cst_72 = arith.constant dense<0.000000e+00> : vector<64x8xf32>
    %140 = tpu.matmul %137, %139, %cst_72 {dimension_numbers = #tpu.dot_dimension_numbers<[1], [0], [0], [1], [0, 0, 1, 1], [], []>} : vector<64x4xbf16>, vector<4x8xbf16>, vector<64x8xf32> -> vector<64x8xf32>
    %141 = arith.addf %134, %140 : vector<64x8xf32>
    %142 = vector.extract_strided_slice %5 {offsets = [1, 2, 0], sizes = [8, 8, 4], strides = [1, 1, 1]} : vector<10x10x4xf32> to vector<8x8x4xf32>
    %143 = vector.shape_cast %142 : vector<8x8x4xf32> to vector<64x4xf32>
    %144 = arith.truncf %143 : vector<64x4xf32> to vector<64x4xbf16>
    %c19 = arith.constant 19 : index
    %c0_73 = arith.constant 0 : index
    %c0_74 = arith.constant 0 : index
    %145 = vector.load %arg5[%c19, %c0_73, %c0_74] : memref<25x4x8xbf16, #tpu.memory_space<vmem>>, vector<1x4x8xbf16>
    %146 = vector.shape_cast %145 : vector<1x4x8xbf16> to vector<4x8xbf16>
    %cst_75 = arith.constant dense<0.000000e+00> : vector<64x8xf32>
    %147 = tpu.matmul %144, %146, %cst_75 {dimension_numbers = #tpu.dot_dimension_numbers<[1], [0], [0], [1], [0, 0, 1, 1], [], []>} : vector<64x4xbf16>, vector<4x8xbf16>, vector<64x8xf32> -> vector<64x8xf32>
    %148 = arith.addf %141, %147 : vector<64x8xf32>
    %149 = vector.extract_strided_slice %1 {offsets = [2, 0, 0], sizes = [8, 8, 4], strides = [1, 1, 1]} : vector<10x10x4xf32> to vector<8x8x4xf32>
    %150 = vector.shape_cast %149 : vector<8x8x4xf32> to vector<64x4xf32>
    %151 = arith.truncf %150 : vector<64x4xf32> to vector<64x4xbf16>
    %c20 = arith.constant 20 : index
    %c0_76 = arith.constant 0 : index
    %c0_77 = arith.constant 0 : index
    %152 = vector.load %arg5[%c20, %c0_76, %c0_77] : memref<25x4x8xbf16, #tpu.memory_space<vmem>>, vector<1x4x8xbf16>
    %153 = vector.shape_cast %152 : vector<1x4x8xbf16> to vector<4x8xbf16>
    %cst_78 = arith.constant dense<0.000000e+00> : vector<64x8xf32>
    %154 = tpu.matmul %151, %153, %cst_78 {dimension_numbers = #tpu.dot_dimension_numbers<[1], [0], [0], [1], [0, 0, 1, 1], [], []>} : vector<64x4xbf16>, vector<4x8xbf16>, vector<64x8xf32> -> vector<64x8xf32>
    %155 = arith.addf %148, %154 : vector<64x8xf32>
    %156 = vector.extract_strided_slice %3 {offsets = [2, 0, 0], sizes = [8, 8, 4], strides = [1, 1, 1]} : vector<10x10x4xf32> to vector<8x8x4xf32>
    %157 = vector.shape_cast %156 : vector<8x8x4xf32> to vector<64x4xf32>
    %158 = arith.truncf %157 : vector<64x4xf32> to vector<64x4xbf16>
    %c21 = arith.constant 21 : index
    %c0_79 = arith.constant 0 : index
    %c0_80 = arith.constant 0 : index
    %159 = vector.load %arg5[%c21, %c0_79, %c0_80] : memref<25x4x8xbf16, #tpu.memory_space<vmem>>, vector<1x4x8xbf16>
    %160 = vector.shape_cast %159 : vector<1x4x8xbf16> to vector<4x8xbf16>
    %cst_81 = arith.constant dense<0.000000e+00> : vector<64x8xf32>
    %161 = tpu.matmul %158, %160, %cst_81 {dimension_numbers = #tpu.dot_dimension_numbers<[1], [0], [0], [1], [0, 0, 1, 1], [], []>} : vector<64x4xbf16>, vector<4x8xbf16>, vector<64x8xf32> -> vector<64x8xf32>
    %162 = arith.addf %155, %161 : vector<64x8xf32>
    %163 = vector.extract_strided_slice %1 {offsets = [2, 1, 0], sizes = [8, 8, 4], strides = [1, 1, 1]} : vector<10x10x4xf32> to vector<8x8x4xf32>
    %164 = vector.shape_cast %163 : vector<8x8x4xf32> to vector<64x4xf32>
    %165 = arith.truncf %164 : vector<64x4xf32> to vector<64x4xbf16>
    %c22 = arith.constant 22 : index
    %c0_82 = arith.constant 0 : index
    %c0_83 = arith.constant 0 : index
    %166 = vector.load %arg5[%c22, %c0_82, %c0_83] : memref<25x4x8xbf16, #tpu.memory_space<vmem>>, vector<1x4x8xbf16>
    %167 = vector.shape_cast %166 : vector<1x4x8xbf16> to vector<4x8xbf16>
    %cst_84 = arith.constant dense<0.000000e+00> : vector<64x8xf32>
    %168 = tpu.matmul %165, %167, %cst_84 {dimension_numbers = #tpu.dot_dimension_numbers<[1], [0], [0], [1], [0, 0, 1, 1], [], []>} : vector<64x4xbf16>, vector<4x8xbf16>, vector<64x8xf32> -> vector<64x8xf32>
    %169 = arith.addf %162, %168 : vector<64x8xf32>
    %170 = vector.extract_strided_slice %3 {offsets = [2, 1, 0], sizes = [8, 8, 4], strides = [1, 1, 1]} : vector<10x10x4xf32> to vector<8x8x4xf32>
    %171 = vector.shape_cast %170 : vector<8x8x4xf32> to vector<64x4xf32>
    %172 = arith.truncf %171 : vector<64x4xf32> to vector<64x4xbf16>
    %c23 = arith.constant 23 : index
    %c0_85 = arith.constant 0 : index
    %c0_86 = arith.constant 0 : index
    %173 = vector.load %arg5[%c23, %c0_85, %c0_86] : memref<25x4x8xbf16, #tpu.memory_space<vmem>>, vector<1x4x8xbf16>
    %174 = vector.shape_cast %173 : vector<1x4x8xbf16> to vector<4x8xbf16>
    %cst_87 = arith.constant dense<0.000000e+00> : vector<64x8xf32>
    %175 = tpu.matmul %172, %174, %cst_87 {dimension_numbers = #tpu.dot_dimension_numbers<[1], [0], [0], [1], [0, 0, 1, 1], [], []>} : vector<64x4xbf16>, vector<4x8xbf16>, vector<64x8xf32> -> vector<64x8xf32>
    %176 = arith.addf %169, %175 : vector<64x8xf32>
    %177 = vector.extract_strided_slice %1 {offsets = [2, 2, 0], sizes = [8, 8, 4], strides = [1, 1, 1]} : vector<10x10x4xf32> to vector<8x8x4xf32>
    %178 = vector.shape_cast %177 : vector<8x8x4xf32> to vector<64x4xf32>
    %179 = arith.truncf %178 : vector<64x4xf32> to vector<64x4xbf16>
    %c24 = arith.constant 24 : index
    %c0_88 = arith.constant 0 : index
    %c0_89 = arith.constant 0 : index
    %180 = vector.load %arg5[%c24, %c0_88, %c0_89] : memref<25x4x8xbf16, #tpu.memory_space<vmem>>, vector<1x4x8xbf16>
    %181 = vector.shape_cast %180 : vector<1x4x8xbf16> to vector<4x8xbf16>
    %cst_90 = arith.constant dense<0.000000e+00> : vector<64x8xf32>
    %182 = tpu.matmul %179, %181, %cst_90 {dimension_numbers = #tpu.dot_dimension_numbers<[1], [0], [0], [1], [0, 0, 1, 1], [], []>} : vector<64x4xbf16>, vector<4x8xbf16>, vector<64x8xf32> -> vector<64x8xf32>
    %183 = arith.addf %176, %182 : vector<64x8xf32>
    %c0_91 = arith.constant 0 : index
    %c0_92 = arith.constant 0 : index
    %184 = vector.load %arg6[%c0_91, %c0_92] : memref<1x8xf32, #tpu.memory_space<vmem>>, vector<1x8xf32>
    %185 = vector.broadcast %184 : vector<1x8xf32> to vector<64x8xf32>
    %186 = arith.addf %183, %185 : vector<64x8xf32>
    %187 = vector.shape_cast %186 : vector<64x8xf32> to vector<8x8x8xf32>
    %c0_93 = arith.constant 0 : index
    %c0_94 = arith.constant 0 : index
    %c0_95 = arith.constant 0 : index
    %c0_96 = arith.constant 0 : index
    %188 = vector.load %arg7[%c0_93, %c0_94, %c0_95, %c0_96] : memref<1x8x8x8xf32, #tpu.memory_space<vmem>>, vector<1x8x8x8xf32>
    %189 = vector.shape_cast %188 : vector<1x8x8x8xf32> to vector<8x8x8xf32>
    %190 = vector.shape_cast %187 : vector<8x8x8xf32> to vector<1x8x8x8xf32>
    tpu.vector_store %arg7[%c0_93, %c0_94, %c0_95, %c0_96], %190 {strides = array<i32>} : memref<1x8x8x8xf32, #tpu.memory_space<vmem>>, vector<1x8x8x8xf32>,
    return
  }
  func.func @transform_0(%arg0: i32) -> (i32, i32, i32, i32) {
    %c0_i32 = arith.constant 0 : i32
    %c0_i32_0 = arith.constant 0 : i32
    %c0_i32_1 = arith.constant 0 : i32
    %c0_i32_2 = arith.constant 0 : i32
    return %arg0, %c0_i32, %c0_i32_0, %c0_i32_1 : i32, i32, i32, i32
  }
  func.func @transform_1(%arg0: i32) -> (i32, i32, i32, i32) {
    %c0_i32 = arith.constant 0 : i32
    %c0_i32_0 = arith.constant 0 : i32
    %c0_i32_1 = arith.constant 0 : i32
    %c0_i32_2 = arith.constant 0 : i32
    return %arg0, %c0_i32, %c0_i32_0, %c0_i32_1 : i32, i32, i32, i32
  }
  func.func @transform_2(%arg0: i32) -> (i32, i32, i32, i32) {
    %c0_i32 = arith.constant 0 : i32
    %c0_i32_0 = arith.constant 0 : i32
    %c0_i32_1 = arith.constant 0 : i32
    %c0_i32_2 = arith.constant 0 : i32
    return %arg0, %c0_i32, %c0_i32_0, %c0_i32_1 : i32, i32, i32, i32
  }
  func.func @transform_3(%arg0: i32) -> (i32, i32, i32, i32) {
    %c0_i32 = arith.constant 0 : i32
    %c0_i32_0 = arith.constant 0 : i32
    %c0_i32_1 = arith.constant 0 : i32
    %c0_i32_2 = arith.constant 0 : i32
    return %arg0, %c0_i32, %c0_i32_0, %c0_i32_1 : i32, i32, i32, i32
  }
  func.func @transform_4(%arg0: i32) -> (i32, i32, i32) {
    %c0_i32 = arith.constant 0 : i32
    %c0_i32_0 = arith.constant 0 : i32
    %c0_i32_1 = arith.constant 0 : i32
    %c0_i32_2 = arith.constant 0 : i32
    return %c0_i32, %c0_i32_0, %c0_i32_1 : i32, i32, i32
  }
  func.func @transform_5(%arg0: i32) -> (i32, i32) {
    %c0_i32 = arith.constant 0 : i32
    %c0_i32_0 = arith.constant 0 : i32
    %c0_i32_1 = arith.constant 0 : i32
    return %c0_i32, %c0_i32_0 : i32, i32
  }
  func.func @transform_6(%arg0: i32) -> (i32, i32, i32, i32) {
    %c0_i32 = arith.constant 0 : i32
    %c0_i32_0 = arith.constant 0 : i32
    %c0_i32_1 = arith.constant 0 : i32
    %c0_i32_2 = arith.constant 0 : i32
    return %arg0, %c0_i32, %c0_i32_0, %c0_i32_1 : i32, i32, i32, i32
  }
}

module attributes {stable_mosaic.version = 11 : i64} {
  func.func @kernel(%arg0: i32, %arg1: memref<1x6x6x8xf32, #tpu.memory_space<vmem>>, %arg2: memref<1x6x6x8xf32, #tpu.memory_space<vmem>>, %arg3: memref<1x6x6x8xf32, #tpu.memory_space<vmem>>, %arg4: memref<1x6x6x8xf32, #tpu.memory_space<vmem>>, %arg5: memref<25x8x16xbf16, #tpu.memory_space<vmem>>, %arg6: memref<1x16xf32, #tpu.memory_space<vmem>>, %arg7: memref<1x4x4x16xf32, #tpu.memory_space<vmem>>, %arg8: memref<1x1x16xf32, #tpu.memory_space<vmem>>, %arg9: memref<1x1x16xf32, #tpu.memory_space<vmem>>) attributes {dimension_semantics = [#tpu.dimension_semantics<parallel>], iteration_bounds = array<i64: 2>, scalar_prefetch = 0 : i64, scratch_operands = 0 : i64, tpu.core_type = #tpu.core_type<tc>, window_params = [{transform_indices = @transform_0, window_bounds = array<i64: 1, 6, 6, 8>}, {transform_indices = @transform_1, window_bounds = array<i64: 1, 6, 6, 8>}, {transform_indices = @transform_2, window_bounds = array<i64: 1, 6, 6, 8>}, {transform_indices = @transform_3, window_bounds = array<i64: 1, 6, 6, 8>}, {pipeline_mode = #tpu.pipeline_mode<synchronous>, transform_indices = @transform_4, window_bounds = array<i64: 25, 8, 16>}, {pipeline_mode = #tpu.pipeline_mode<synchronous>, transform_indices = @transform_5, window_bounds = array<i64: 1, 16>}, {transform_indices = @transform_6, window_bounds = array<i64: 1, 4, 4, 16>}, {transform_indices = @transform_7, window_bounds = array<i64: 1, 1, 16>}, {transform_indices = @transform_8, window_bounds = array<i64: 1, 1, 16>}]} {
    %c0 = arith.constant 0 : index
    %c0_0 = arith.constant 0 : index
    %c0_1 = arith.constant 0 : index
    %c0_2 = arith.constant 0 : index
    %0 = vector.load %arg1[%c0, %c0_0, %c0_1, %c0_2] : memref<1x6x6x8xf32, #tpu.memory_space<vmem>>, vector<1x6x6x8xf32>
    %1 = vector.shape_cast %0 : vector<1x6x6x8xf32> to vector<6x6x8xf32>
    %cst = arith.constant 0.000000e+00 : f32
    %2 = vector.broadcast %cst : f32 to vector<6x6x8xf32>
    %3 = arith.cmpf ogt, %1, %2 : vector<6x6x8xf32>
    %cst_3 = arith.constant 0.00999999977 : f32
    %4 = vector.broadcast %cst_3 : f32 to vector<6x6x8xf32>
    %5 = arith.mulf %4, %1 : vector<6x6x8xf32>
    %6 = arith.select %3, %1, %5 : vector<6x6x8xi1>, vector<6x6x8xf32>
    %c0_4 = arith.constant 0 : index
    %c0_5 = arith.constant 0 : index
    %c0_6 = arith.constant 0 : index
    %c0_7 = arith.constant 0 : index
    %7 = vector.load %arg2[%c0_4, %c0_5, %c0_6, %c0_7] : memref<1x6x6x8xf32, #tpu.memory_space<vmem>>, vector<1x6x6x8xf32>
    %8 = vector.shape_cast %7 : vector<1x6x6x8xf32> to vector<6x6x8xf32>
    %cst_8 = arith.constant 0.000000e+00 : f32
    %9 = vector.broadcast %cst_8 : f32 to vector<6x6x8xf32>
    %10 = arith.cmpf ogt, %8, %9 : vector<6x6x8xf32>
    %cst_9 = arith.constant 0.00999999977 : f32
    %11 = vector.broadcast %cst_9 : f32 to vector<6x6x8xf32>
    %12 = arith.mulf %11, %8 : vector<6x6x8xf32>
    %13 = arith.select %10, %8, %12 : vector<6x6x8xi1>, vector<6x6x8xf32>
    %c0_10 = arith.constant 0 : index
    %c0_11 = arith.constant 0 : index
    %c0_12 = arith.constant 0 : index
    %c0_13 = arith.constant 0 : index
    %14 = vector.load %arg3[%c0_10, %c0_11, %c0_12, %c0_13] : memref<1x6x6x8xf32, #tpu.memory_space<vmem>>, vector<1x6x6x8xf32>
    %15 = vector.shape_cast %14 : vector<1x6x6x8xf32> to vector<6x6x8xf32>
    %cst_14 = arith.constant 0.000000e+00 : f32
    %16 = vector.broadcast %cst_14 : f32 to vector<6x6x8xf32>
    %17 = arith.cmpf ogt, %15, %16 : vector<6x6x8xf32>
    %cst_15 = arith.constant 0.00999999977 : f32
    %18 = vector.broadcast %cst_15 : f32 to vector<6x6x8xf32>
    %19 = arith.mulf %18, %15 : vector<6x6x8xf32>
    %20 = arith.select %17, %15, %19 : vector<6x6x8xi1>, vector<6x6x8xf32>
    %c0_16 = arith.constant 0 : index
    %c0_17 = arith.constant 0 : index
    %c0_18 = arith.constant 0 : index
    %c0_19 = arith.constant 0 : index
    %21 = vector.load %arg4[%c0_16, %c0_17, %c0_18, %c0_19] : memref<1x6x6x8xf32, #tpu.memory_space<vmem>>, vector<1x6x6x8xf32>
    %22 = vector.shape_cast %21 : vector<1x6x6x8xf32> to vector<6x6x8xf32>
    %cst_20 = arith.constant 0.000000e+00 : f32
    %23 = vector.broadcast %cst_20 : f32 to vector<6x6x8xf32>
    %24 = arith.cmpf ogt, %22, %23 : vector<6x6x8xf32>
    %cst_21 = arith.constant 0.00999999977 : f32
    %25 = vector.broadcast %cst_21 : f32 to vector<6x6x8xf32>
    %26 = arith.mulf %25, %22 : vector<6x6x8xf32>
    %27 = arith.select %24, %22, %26 : vector<6x6x8xi1>, vector<6x6x8xf32>
    %cst_22 = arith.constant 0.000000e+00 : f32
    %28 = vector.broadcast %cst_22 : f32 to vector<16x16xf32>
    %29 = vector.extract_strided_slice %6 {offsets = [0, 0, 0], sizes = [4, 4, 8], strides = [1, 1, 1]} : vector<6x6x8xf32> to vector<4x4x8xf32>
    %30 = vector.shape_cast %29 : vector<4x4x8xf32> to vector<16x8xf32>
    %31 = arith.truncf %30 : vector<16x8xf32> to vector<16x8xbf16>
    %c0_23 = arith.constant 0 : index
    %c0_24 = arith.constant 0 : index
    %c0_25 = arith.constant 0 : index
    %32 = vector.load %arg5[%c0_23, %c0_24, %c0_25] : memref<25x8x16xbf16, #tpu.memory_space<vmem>>, vector<1x8x16xbf16>
    %33 = vector.shape_cast %32 : vector<1x8x16xbf16> to vector<8x16xbf16>
    %cst_26 = arith.constant dense<0.000000e+00> : vector<16x16xf32>
    %34 = tpu.matmul %31, %33, %cst_26 {dimension_numbers = #tpu.dot_dimension_numbers<[1], [0], [0], [1], [0, 0, 1, 1], [], []>} : vector<16x8xbf16>, vector<8x16xbf16>, vector<16x16xf32> -> vector<16x16xf32>
    %35 = arith.addf %28, %34 : vector<16x16xf32>
    %36 = vector.extract_strided_slice %13 {offsets = [0, 0, 0], sizes = [4, 4, 8], strides = [1, 1, 1]} : vector<6x6x8xf32> to vector<4x4x8xf32>
    %37 = vector.shape_cast %36 : vector<4x4x8xf32> to vector<16x8xf32>
    %38 = arith.truncf %37 : vector<16x8xf32> to vector<16x8xbf16>
    %c1 = arith.constant 1 : index
    %c0_27 = arith.constant 0 : index
    %c0_28 = arith.constant 0 : index
    %39 = vector.load %arg5[%c1, %c0_27, %c0_28] : memref<25x8x16xbf16, #tpu.memory_space<vmem>>, vector<1x8x16xbf16>
    %40 = vector.shape_cast %39 : vector<1x8x16xbf16> to vector<8x16xbf16>
    %cst_29 = arith.constant dense<0.000000e+00> : vector<16x16xf32>
    %41 = tpu.matmul %38, %40, %cst_29 {dimension_numbers = #tpu.dot_dimension_numbers<[1], [0], [0], [1], [0, 0, 1, 1], [], []>} : vector<16x8xbf16>, vector<8x16xbf16>, vector<16x16xf32> -> vector<16x16xf32>
    %42 = arith.addf %35, %41 : vector<16x16xf32>
    %43 = vector.extract_strided_slice %6 {offsets = [0, 1, 0], sizes = [4, 4, 8], strides = [1, 1, 1]} : vector<6x6x8xf32> to vector<4x4x8xf32>
    %44 = vector.shape_cast %43 : vector<4x4x8xf32> to vector<16x8xf32>
    %45 = arith.truncf %44 : vector<16x8xf32> to vector<16x8xbf16>
    %c2 = arith.constant 2 : index
    %c0_30 = arith.constant 0 : index
    %c0_31 = arith.constant 0 : index
    %46 = vector.load %arg5[%c2, %c0_30, %c0_31] : memref<25x8x16xbf16, #tpu.memory_space<vmem>>, vector<1x8x16xbf16>
    %47 = vector.shape_cast %46 : vector<1x8x16xbf16> to vector<8x16xbf16>
    %cst_32 = arith.constant dense<0.000000e+00> : vector<16x16xf32>
    %48 = tpu.matmul %45, %47, %cst_32 {dimension_numbers = #tpu.dot_dimension_numbers<[1], [0], [0], [1], [0, 0, 1, 1], [], []>} : vector<16x8xbf16>, vector<8x16xbf16>, vector<16x16xf32> -> vector<16x16xf32>
    %49 = arith.addf %42, %48 : vector<16x16xf32>
    %50 = vector.extract_strided_slice %13 {offsets = [0, 1, 0], sizes = [4, 4, 8], strides = [1, 1, 1]} : vector<6x6x8xf32> to vector<4x4x8xf32>
    %51 = vector.shape_cast %50 : vector<4x4x8xf32> to vector<16x8xf32>
    %52 = arith.truncf %51 : vector<16x8xf32> to vector<16x8xbf16>
    %c3 = arith.constant 3 : index
    %c0_33 = arith.constant 0 : index
    %c0_34 = arith.constant 0 : index
    %53 = vector.load %arg5[%c3, %c0_33, %c0_34] : memref<25x8x16xbf16, #tpu.memory_space<vmem>>, vector<1x8x16xbf16>
    %54 = vector.shape_cast %53 : vector<1x8x16xbf16> to vector<8x16xbf16>
    %cst_35 = arith.constant dense<0.000000e+00> : vector<16x16xf32>
    %55 = tpu.matmul %52, %54, %cst_35 {dimension_numbers = #tpu.dot_dimension_numbers<[1], [0], [0], [1], [0, 0, 1, 1], [], []>} : vector<16x8xbf16>, vector<8x16xbf16>, vector<16x16xf32> -> vector<16x16xf32>
    %56 = arith.addf %49, %55 : vector<16x16xf32>
    %57 = vector.extract_strided_slice %6 {offsets = [0, 2, 0], sizes = [4, 4, 8], strides = [1, 1, 1]} : vector<6x6x8xf32> to vector<4x4x8xf32>
    %58 = vector.shape_cast %57 : vector<4x4x8xf32> to vector<16x8xf32>
    %59 = arith.truncf %58 : vector<16x8xf32> to vector<16x8xbf16>
    %c4 = arith.constant 4 : index
    %c0_36 = arith.constant 0 : index
    %c0_37 = arith.constant 0 : index
    %60 = vector.load %arg5[%c4, %c0_36, %c0_37] : memref<25x8x16xbf16, #tpu.memory_space<vmem>>, vector<1x8x16xbf16>
    %61 = vector.shape_cast %60 : vector<1x8x16xbf16> to vector<8x16xbf16>
    %cst_38 = arith.constant dense<0.000000e+00> : vector<16x16xf32>
    %62 = tpu.matmul %59, %61, %cst_38 {dimension_numbers = #tpu.dot_dimension_numbers<[1], [0], [0], [1], [0, 0, 1, 1], [], []>} : vector<16x8xbf16>, vector<8x16xbf16>, vector<16x16xf32> -> vector<16x16xf32>
    %63 = arith.addf %56, %62 : vector<16x16xf32>
    %64 = vector.extract_strided_slice %20 {offsets = [0, 0, 0], sizes = [4, 4, 8], strides = [1, 1, 1]} : vector<6x6x8xf32> to vector<4x4x8xf32>
    %65 = vector.shape_cast %64 : vector<4x4x8xf32> to vector<16x8xf32>
    %66 = arith.truncf %65 : vector<16x8xf32> to vector<16x8xbf16>
    %c5 = arith.constant 5 : index
    %c0_39 = arith.constant 0 : index
    %c0_40 = arith.constant 0 : index
    %67 = vector.load %arg5[%c5, %c0_39, %c0_40] : memref<25x8x16xbf16, #tpu.memory_space<vmem>>, vector<1x8x16xbf16>
    %68 = vector.shape_cast %67 : vector<1x8x16xbf16> to vector<8x16xbf16>
    %cst_41 = arith.constant dense<0.000000e+00> : vector<16x16xf32>
    %69 = tpu.matmul %66, %68, %cst_41 {dimension_numbers = #tpu.dot_dimension_numbers<[1], [0], [0], [1], [0, 0, 1, 1], [], []>} : vector<16x8xbf16>, vector<8x16xbf16>, vector<16x16xf32> -> vector<16x16xf32>
    %70 = arith.addf %63, %69 : vector<16x16xf32>
    %71 = vector.extract_strided_slice %27 {offsets = [0, 0, 0], sizes = [4, 4, 8], strides = [1, 1, 1]} : vector<6x6x8xf32> to vector<4x4x8xf32>
    %72 = vector.shape_cast %71 : vector<4x4x8xf32> to vector<16x8xf32>
    %73 = arith.truncf %72 : vector<16x8xf32> to vector<16x8xbf16>
    %c6 = arith.constant 6 : index
    %c0_42 = arith.constant 0 : index
    %c0_43 = arith.constant 0 : index
    %74 = vector.load %arg5[%c6, %c0_42, %c0_43] : memref<25x8x16xbf16, #tpu.memory_space<vmem>>, vector<1x8x16xbf16>
    %75 = vector.shape_cast %74 : vector<1x8x16xbf16> to vector<8x16xbf16>
    %cst_44 = arith.constant dense<0.000000e+00> : vector<16x16xf32>
    %76 = tpu.matmul %73, %75, %cst_44 {dimension_numbers = #tpu.dot_dimension_numbers<[1], [0], [0], [1], [0, 0, 1, 1], [], []>} : vector<16x8xbf16>, vector<8x16xbf16>, vector<16x16xf32> -> vector<16x16xf32>
    %77 = arith.addf %70, %76 : vector<16x16xf32>
    %78 = vector.extract_strided_slice %20 {offsets = [0, 1, 0], sizes = [4, 4, 8], strides = [1, 1, 1]} : vector<6x6x8xf32> to vector<4x4x8xf32>
    %79 = vector.shape_cast %78 : vector<4x4x8xf32> to vector<16x8xf32>
    %80 = arith.truncf %79 : vector<16x8xf32> to vector<16x8xbf16>
    %c7 = arith.constant 7 : index
    %c0_45 = arith.constant 0 : index
    %c0_46 = arith.constant 0 : index
    %81 = vector.load %arg5[%c7, %c0_45, %c0_46] : memref<25x8x16xbf16, #tpu.memory_space<vmem>>, vector<1x8x16xbf16>
    %82 = vector.shape_cast %81 : vector<1x8x16xbf16> to vector<8x16xbf16>
    %cst_47 = arith.constant dense<0.000000e+00> : vector<16x16xf32>
    %83 = tpu.matmul %80, %82, %cst_47 {dimension_numbers = #tpu.dot_dimension_numbers<[1], [0], [0], [1], [0, 0, 1, 1], [], []>} : vector<16x8xbf16>, vector<8x16xbf16>, vector<16x16xf32> -> vector<16x16xf32>
    %84 = arith.addf %77, %83 : vector<16x16xf32>
    %85 = vector.extract_strided_slice %27 {offsets = [0, 1, 0], sizes = [4, 4, 8], strides = [1, 1, 1]} : vector<6x6x8xf32> to vector<4x4x8xf32>
    %86 = vector.shape_cast %85 : vector<4x4x8xf32> to vector<16x8xf32>
    %87 = arith.truncf %86 : vector<16x8xf32> to vector<16x8xbf16>
    %c8 = arith.constant 8 : index
    %c0_48 = arith.constant 0 : index
    %c0_49 = arith.constant 0 : index
    %88 = vector.load %arg5[%c8, %c0_48, %c0_49] : memref<25x8x16xbf16, #tpu.memory_space<vmem>>, vector<1x8x16xbf16>
    %89 = vector.shape_cast %88 : vector<1x8x16xbf16> to vector<8x16xbf16>
    %cst_50 = arith.constant dense<0.000000e+00> : vector<16x16xf32>
    %90 = tpu.matmul %87, %89, %cst_50 {dimension_numbers = #tpu.dot_dimension_numbers<[1], [0], [0], [1], [0, 0, 1, 1], [], []>} : vector<16x8xbf16>, vector<8x16xbf16>, vector<16x16xf32> -> vector<16x16xf32>
    %91 = arith.addf %84, %90 : vector<16x16xf32>
    %92 = vector.extract_strided_slice %20 {offsets = [0, 2, 0], sizes = [4, 4, 8], strides = [1, 1, 1]} : vector<6x6x8xf32> to vector<4x4x8xf32>
    %93 = vector.shape_cast %92 : vector<4x4x8xf32> to vector<16x8xf32>
    %94 = arith.truncf %93 : vector<16x8xf32> to vector<16x8xbf16>
    %c9 = arith.constant 9 : index
    %c0_51 = arith.constant 0 : index
    %c0_52 = arith.constant 0 : index
    %95 = vector.load %arg5[%c9, %c0_51, %c0_52] : memref<25x8x16xbf16, #tpu.memory_space<vmem>>, vector<1x8x16xbf16>
    %96 = vector.shape_cast %95 : vector<1x8x16xbf16> to vector<8x16xbf16>
    %cst_53 = arith.constant dense<0.000000e+00> : vector<16x16xf32>
    %97 = tpu.matmul %94, %96, %cst_53 {dimension_numbers = #tpu.dot_dimension_numbers<[1], [0], [0], [1], [0, 0, 1, 1], [], []>} : vector<16x8xbf16>, vector<8x16xbf16>, vector<16x16xf32> -> vector<16x16xf32>
    %98 = arith.addf %91, %97 : vector<16x16xf32>
    %99 = vector.extract_strided_slice %6 {offsets = [1, 0, 0], sizes = [4, 4, 8], strides = [1, 1, 1]} : vector<6x6x8xf32> to vector<4x4x8xf32>
    %100 = vector.shape_cast %99 : vector<4x4x8xf32> to vector<16x8xf32>
    %101 = arith.truncf %100 : vector<16x8xf32> to vector<16x8xbf16>
    %c10 = arith.constant 10 : index
    %c0_54 = arith.constant 0 : index
    %c0_55 = arith.constant 0 : index
    %102 = vector.load %arg5[%c10, %c0_54, %c0_55] : memref<25x8x16xbf16, #tpu.memory_space<vmem>>, vector<1x8x16xbf16>
    %103 = vector.shape_cast %102 : vector<1x8x16xbf16> to vector<8x16xbf16>
    %cst_56 = arith.constant dense<0.000000e+00> : vector<16x16xf32>
    %104 = tpu.matmul %101, %103, %cst_56 {dimension_numbers = #tpu.dot_dimension_numbers<[1], [0], [0], [1], [0, 0, 1, 1], [], []>} : vector<16x8xbf16>, vector<8x16xbf16>, vector<16x16xf32> -> vector<16x16xf32>
    %105 = arith.addf %98, %104 : vector<16x16xf32>
    %106 = vector.extract_strided_slice %13 {offsets = [1, 0, 0], sizes = [4, 4, 8], strides = [1, 1, 1]} : vector<6x6x8xf32> to vector<4x4x8xf32>
    %107 = vector.shape_cast %106 : vector<4x4x8xf32> to vector<16x8xf32>
    %108 = arith.truncf %107 : vector<16x8xf32> to vector<16x8xbf16>
    %c11 = arith.constant 11 : index
    %c0_57 = arith.constant 0 : index
    %c0_58 = arith.constant 0 : index
    %109 = vector.load %arg5[%c11, %c0_57, %c0_58] : memref<25x8x16xbf16, #tpu.memory_space<vmem>>, vector<1x8x16xbf16>
    %110 = vector.shape_cast %109 : vector<1x8x16xbf16> to vector<8x16xbf16>
    %cst_59 = arith.constant dense<0.000000e+00> : vector<16x16xf32>
    %111 = tpu.matmul %108, %110, %cst_59 {dimension_numbers = #tpu.dot_dimension_numbers<[1], [0], [0], [1], [0, 0, 1, 1], [], []>} : vector<16x8xbf16>, vector<8x16xbf16>, vector<16x16xf32> -> vector<16x16xf32>
    %112 = arith.addf %105, %111 : vector<16x16xf32>
    %113 = vector.extract_strided_slice %6 {offsets = [1, 1, 0], sizes = [4, 4, 8], strides = [1, 1, 1]} : vector<6x6x8xf32> to vector<4x4x8xf32>
    %114 = vector.shape_cast %113 : vector<4x4x8xf32> to vector<16x8xf32>
    %115 = arith.truncf %114 : vector<16x8xf32> to vector<16x8xbf16>
    %c12 = arith.constant 12 : index
    %c0_60 = arith.constant 0 : index
    %c0_61 = arith.constant 0 : index
    %116 = vector.load %arg5[%c12, %c0_60, %c0_61] : memref<25x8x16xbf16, #tpu.memory_space<vmem>>, vector<1x8x16xbf16>
    %117 = vector.shape_cast %116 : vector<1x8x16xbf16> to vector<8x16xbf16>
    %cst_62 = arith.constant dense<0.000000e+00> : vector<16x16xf32>
    %118 = tpu.matmul %115, %117, %cst_62 {dimension_numbers = #tpu.dot_dimension_numbers<[1], [0], [0], [1], [0, 0, 1, 1], [], []>} : vector<16x8xbf16>, vector<8x16xbf16>, vector<16x16xf32> -> vector<16x16xf32>
    %119 = arith.addf %112, %118 : vector<16x16xf32>
    %120 = vector.extract_strided_slice %13 {offsets = [1, 1, 0], sizes = [4, 4, 8], strides = [1, 1, 1]} : vector<6x6x8xf32> to vector<4x4x8xf32>
    %121 = vector.shape_cast %120 : vector<4x4x8xf32> to vector<16x8xf32>
    %122 = arith.truncf %121 : vector<16x8xf32> to vector<16x8xbf16>
    %c13 = arith.constant 13 : index
    %c0_63 = arith.constant 0 : index
    %c0_64 = arith.constant 0 : index
    %123 = vector.load %arg5[%c13, %c0_63, %c0_64] : memref<25x8x16xbf16, #tpu.memory_space<vmem>>, vector<1x8x16xbf16>
    %124 = vector.shape_cast %123 : vector<1x8x16xbf16> to vector<8x16xbf16>
    %cst_65 = arith.constant dense<0.000000e+00> : vector<16x16xf32>
    %125 = tpu.matmul %122, %124, %cst_65 {dimension_numbers = #tpu.dot_dimension_numbers<[1], [0], [0], [1], [0, 0, 1, 1], [], []>} : vector<16x8xbf16>, vector<8x16xbf16>, vector<16x16xf32> -> vector<16x16xf32>
    %126 = arith.addf %119, %125 : vector<16x16xf32>
    %127 = vector.extract_strided_slice %6 {offsets = [1, 2, 0], sizes = [4, 4, 8], strides = [1, 1, 1]} : vector<6x6x8xf32> to vector<4x4x8xf32>
    %128 = vector.shape_cast %127 : vector<4x4x8xf32> to vector<16x8xf32>
    %129 = arith.truncf %128 : vector<16x8xf32> to vector<16x8xbf16>
    %c14 = arith.constant 14 : index
    %c0_66 = arith.constant 0 : index
    %c0_67 = arith.constant 0 : index
    %130 = vector.load %arg5[%c14, %c0_66, %c0_67] : memref<25x8x16xbf16, #tpu.memory_space<vmem>>, vector<1x8x16xbf16>
    %131 = vector.shape_cast %130 : vector<1x8x16xbf16> to vector<8x16xbf16>
    %cst_68 = arith.constant dense<0.000000e+00> : vector<16x16xf32>
    %132 = tpu.matmul %129, %131, %cst_68 {dimension_numbers = #tpu.dot_dimension_numbers<[1], [0], [0], [1], [0, 0, 1, 1], [], []>} : vector<16x8xbf16>, vector<8x16xbf16>, vector<16x16xf32> -> vector<16x16xf32>
    %133 = arith.addf %126, %132 : vector<16x16xf32>
    %134 = vector.extract_strided_slice %20 {offsets = [1, 0, 0], sizes = [4, 4, 8], strides = [1, 1, 1]} : vector<6x6x8xf32> to vector<4x4x8xf32>
    %135 = vector.shape_cast %134 : vector<4x4x8xf32> to vector<16x8xf32>
    %136 = arith.truncf %135 : vector<16x8xf32> to vector<16x8xbf16>
    %c15 = arith.constant 15 : index
    %c0_69 = arith.constant 0 : index
    %c0_70 = arith.constant 0 : index
    %137 = vector.load %arg5[%c15, %c0_69, %c0_70] : memref<25x8x16xbf16, #tpu.memory_space<vmem>>, vector<1x8x16xbf16>
    %138 = vector.shape_cast %137 : vector<1x8x16xbf16> to vector<8x16xbf16>
    %cst_71 = arith.constant dense<0.000000e+00> : vector<16x16xf32>
    %139 = tpu.matmul %136, %138, %cst_71 {dimension_numbers = #tpu.dot_dimension_numbers<[1], [0], [0], [1], [0, 0, 1, 1], [], []>} : vector<16x8xbf16>, vector<8x16xbf16>, vector<16x16xf32> -> vector<16x16xf32>
    %140 = arith.addf %133, %139 : vector<16x16xf32>
    %141 = vector.extract_strided_slice %27 {offsets = [1, 0, 0], sizes = [4, 4, 8], strides = [1, 1, 1]} : vector<6x6x8xf32> to vector<4x4x8xf32>
    %142 = vector.shape_cast %141 : vector<4x4x8xf32> to vector<16x8xf32>
    %143 = arith.truncf %142 : vector<16x8xf32> to vector<16x8xbf16>
    %c16 = arith.constant 16 : index
    %c0_72 = arith.constant 0 : index
    %c0_73 = arith.constant 0 : index
    %144 = vector.load %arg5[%c16, %c0_72, %c0_73] : memref<25x8x16xbf16, #tpu.memory_space<vmem>>, vector<1x8x16xbf16>
    %145 = vector.shape_cast %144 : vector<1x8x16xbf16> to vector<8x16xbf16>
    %cst_74 = arith.constant dense<0.000000e+00> : vector<16x16xf32>
    %146 = tpu.matmul %143, %145, %cst_74 {dimension_numbers = #tpu.dot_dimension_numbers<[1], [0], [0], [1], [0, 0, 1, 1], [], []>} : vector<16x8xbf16>, vector<8x16xbf16>, vector<16x16xf32> -> vector<16x16xf32>
    %147 = arith.addf %140, %146 : vector<16x16xf32>
    %148 = vector.extract_strided_slice %20 {offsets = [1, 1, 0], sizes = [4, 4, 8], strides = [1, 1, 1]} : vector<6x6x8xf32> to vector<4x4x8xf32>
    %149 = vector.shape_cast %148 : vector<4x4x8xf32> to vector<16x8xf32>
    %150 = arith.truncf %149 : vector<16x8xf32> to vector<16x8xbf16>
    %c17 = arith.constant 17 : index
    %c0_75 = arith.constant 0 : index
    %c0_76 = arith.constant 0 : index
    %151 = vector.load %arg5[%c17, %c0_75, %c0_76] : memref<25x8x16xbf16, #tpu.memory_space<vmem>>, vector<1x8x16xbf16>
    %152 = vector.shape_cast %151 : vector<1x8x16xbf16> to vector<8x16xbf16>
    %cst_77 = arith.constant dense<0.000000e+00> : vector<16x16xf32>
    %153 = tpu.matmul %150, %152, %cst_77 {dimension_numbers = #tpu.dot_dimension_numbers<[1], [0], [0], [1], [0, 0, 1, 1], [], []>} : vector<16x8xbf16>, vector<8x16xbf16>, vector<16x16xf32> -> vector<16x16xf32>
    %154 = arith.addf %147, %153 : vector<16x16xf32>
    %155 = vector.extract_strided_slice %27 {offsets = [1, 1, 0], sizes = [4, 4, 8], strides = [1, 1, 1]} : vector<6x6x8xf32> to vector<4x4x8xf32>
    %156 = vector.shape_cast %155 : vector<4x4x8xf32> to vector<16x8xf32>
    %157 = arith.truncf %156 : vector<16x8xf32> to vector<16x8xbf16>
    %c18 = arith.constant 18 : index
    %c0_78 = arith.constant 0 : index
    %c0_79 = arith.constant 0 : index
    %158 = vector.load %arg5[%c18, %c0_78, %c0_79] : memref<25x8x16xbf16, #tpu.memory_space<vmem>>, vector<1x8x16xbf16>
    %159 = vector.shape_cast %158 : vector<1x8x16xbf16> to vector<8x16xbf16>
    %cst_80 = arith.constant dense<0.000000e+00> : vector<16x16xf32>
    %160 = tpu.matmul %157, %159, %cst_80 {dimension_numbers = #tpu.dot_dimension_numbers<[1], [0], [0], [1], [0, 0, 1, 1], [], []>} : vector<16x8xbf16>, vector<8x16xbf16>, vector<16x16xf32> -> vector<16x16xf32>
    %161 = arith.addf %154, %160 : vector<16x16xf32>
    %162 = vector.extract_strided_slice %20 {offsets = [1, 2, 0], sizes = [4, 4, 8], strides = [1, 1, 1]} : vector<6x6x8xf32> to vector<4x4x8xf32>
    %163 = vector.shape_cast %162 : vector<4x4x8xf32> to vector<16x8xf32>
    %164 = arith.truncf %163 : vector<16x8xf32> to vector<16x8xbf16>
    %c19 = arith.constant 19 : index
    %c0_81 = arith.constant 0 : index
    %c0_82 = arith.constant 0 : index
    %165 = vector.load %arg5[%c19, %c0_81, %c0_82] : memref<25x8x16xbf16, #tpu.memory_space<vmem>>, vector<1x8x16xbf16>
    %166 = vector.shape_cast %165 : vector<1x8x16xbf16> to vector<8x16xbf16>
    %cst_83 = arith.constant dense<0.000000e+00> : vector<16x16xf32>
    %167 = tpu.matmul %164, %166, %cst_83 {dimension_numbers = #tpu.dot_dimension_numbers<[1], [0], [0], [1], [0, 0, 1, 1], [], []>} : vector<16x8xbf16>, vector<8x16xbf16>, vector<16x16xf32> -> vector<16x16xf32>
    %168 = arith.addf %161, %167 : vector<16x16xf32>
    %169 = vector.extract_strided_slice %6 {offsets = [2, 0, 0], sizes = [4, 4, 8], strides = [1, 1, 1]} : vector<6x6x8xf32> to vector<4x4x8xf32>
    %170 = vector.shape_cast %169 : vector<4x4x8xf32> to vector<16x8xf32>
    %171 = arith.truncf %170 : vector<16x8xf32> to vector<16x8xbf16>
    %c20 = arith.constant 20 : index
    %c0_84 = arith.constant 0 : index
    %c0_85 = arith.constant 0 : index
    %172 = vector.load %arg5[%c20, %c0_84, %c0_85] : memref<25x8x16xbf16, #tpu.memory_space<vmem>>, vector<1x8x16xbf16>
    %173 = vector.shape_cast %172 : vector<1x8x16xbf16> to vector<8x16xbf16>
    %cst_86 = arith.constant dense<0.000000e+00> : vector<16x16xf32>
    %174 = tpu.matmul %171, %173, %cst_86 {dimension_numbers = #tpu.dot_dimension_numbers<[1], [0], [0], [1], [0, 0, 1, 1], [], []>} : vector<16x8xbf16>, vector<8x16xbf16>, vector<16x16xf32> -> vector<16x16xf32>
    %175 = arith.addf %168, %174 : vector<16x16xf32>
    %176 = vector.extract_strided_slice %13 {offsets = [2, 0, 0], sizes = [4, 4, 8], strides = [1, 1, 1]} : vector<6x6x8xf32> to vector<4x4x8xf32>
    %177 = vector.shape_cast %176 : vector<4x4x8xf32> to vector<16x8xf32>
    %178 = arith.truncf %177 : vector<16x8xf32> to vector<16x8xbf16>
    %c21 = arith.constant 21 : index
    %c0_87 = arith.constant 0 : index
    %c0_88 = arith.constant 0 : index
    %179 = vector.load %arg5[%c21, %c0_87, %c0_88] : memref<25x8x16xbf16, #tpu.memory_space<vmem>>, vector<1x8x16xbf16>
    %180 = vector.shape_cast %179 : vector<1x8x16xbf16> to vector<8x16xbf16>
    %cst_89 = arith.constant dense<0.000000e+00> : vector<16x16xf32>
    %181 = tpu.matmul %178, %180, %cst_89 {dimension_numbers = #tpu.dot_dimension_numbers<[1], [0], [0], [1], [0, 0, 1, 1], [], []>} : vector<16x8xbf16>, vector<8x16xbf16>, vector<16x16xf32> -> vector<16x16xf32>
    %182 = arith.addf %175, %181 : vector<16x16xf32>
    %183 = vector.extract_strided_slice %6 {offsets = [2, 1, 0], sizes = [4, 4, 8], strides = [1, 1, 1]} : vector<6x6x8xf32> to vector<4x4x8xf32>
    %184 = vector.shape_cast %183 : vector<4x4x8xf32> to vector<16x8xf32>
    %185 = arith.truncf %184 : vector<16x8xf32> to vector<16x8xbf16>
    %c22 = arith.constant 22 : index
    %c0_90 = arith.constant 0 : index
    %c0_91 = arith.constant 0 : index
    %186 = vector.load %arg5[%c22, %c0_90, %c0_91] : memref<25x8x16xbf16, #tpu.memory_space<vmem>>, vector<1x8x16xbf16>
    %187 = vector.shape_cast %186 : vector<1x8x16xbf16> to vector<8x16xbf16>
    %cst_92 = arith.constant dense<0.000000e+00> : vector<16x16xf32>
    %188 = tpu.matmul %185, %187, %cst_92 {dimension_numbers = #tpu.dot_dimension_numbers<[1], [0], [0], [1], [0, 0, 1, 1], [], []>} : vector<16x8xbf16>, vector<8x16xbf16>, vector<16x16xf32> -> vector<16x16xf32>
    %189 = arith.addf %182, %188 : vector<16x16xf32>
    %190 = vector.extract_strided_slice %13 {offsets = [2, 1, 0], sizes = [4, 4, 8], strides = [1, 1, 1]} : vector<6x6x8xf32> to vector<4x4x8xf32>
    %191 = vector.shape_cast %190 : vector<4x4x8xf32> to vector<16x8xf32>
    %192 = arith.truncf %191 : vector<16x8xf32> to vector<16x8xbf16>
    %c23 = arith.constant 23 : index
    %c0_93 = arith.constant 0 : index
    %c0_94 = arith.constant 0 : index
    %193 = vector.load %arg5[%c23, %c0_93, %c0_94] : memref<25x8x16xbf16, #tpu.memory_space<vmem>>, vector<1x8x16xbf16>
    %194 = vector.shape_cast %193 : vector<1x8x16xbf16> to vector<8x16xbf16>
    %cst_95 = arith.constant dense<0.000000e+00> : vector<16x16xf32>
    %195 = tpu.matmul %192, %194, %cst_95 {dimension_numbers = #tpu.dot_dimension_numbers<[1], [0], [0], [1], [0, 0, 1, 1], [], []>} : vector<16x8xbf16>, vector<8x16xbf16>, vector<16x16xf32> -> vector<16x16xf32>
    %196 = arith.addf %189, %195 : vector<16x16xf32>
    %197 = vector.extract_strided_slice %6 {offsets = [2, 2, 0], sizes = [4, 4, 8], strides = [1, 1, 1]} : vector<6x6x8xf32> to vector<4x4x8xf32>
    %198 = vector.shape_cast %197 : vector<4x4x8xf32> to vector<16x8xf32>
    %199 = arith.truncf %198 : vector<16x8xf32> to vector<16x8xbf16>
    %c24 = arith.constant 24 : index
    %c0_96 = arith.constant 0 : index
    %c0_97 = arith.constant 0 : index
    %200 = vector.load %arg5[%c24, %c0_96, %c0_97] : memref<25x8x16xbf16, #tpu.memory_space<vmem>>, vector<1x8x16xbf16>
    %201 = vector.shape_cast %200 : vector<1x8x16xbf16> to vector<8x16xbf16>
    %cst_98 = arith.constant dense<0.000000e+00> : vector<16x16xf32>
    %202 = tpu.matmul %199, %201, %cst_98 {dimension_numbers = #tpu.dot_dimension_numbers<[1], [0], [0], [1], [0, 0, 1, 1], [], []>} : vector<16x8xbf16>, vector<8x16xbf16>, vector<16x16xf32> -> vector<16x16xf32>
    %203 = arith.addf %196, %202 : vector<16x16xf32>
    %c0_99 = arith.constant 0 : index
    %c0_100 = arith.constant 0 : index
    %204 = vector.load %arg6[%c0_99, %c0_100] : memref<1x16xf32, #tpu.memory_space<vmem>>, vector<1x16xf32>
    %205 = vector.broadcast %204 : vector<1x16xf32> to vector<16x16xf32>
    %206 = arith.addf %203, %205 : vector<16x16xf32>
    %207 = vector.shape_cast %206 : vector<16x16xf32> to vector<4x4x16xf32>
    %c0_101 = arith.constant 0 : index
    %c0_102 = arith.constant 0 : index
    %c0_103 = arith.constant 0 : index
    %c0_104 = arith.constant 0 : index
    %208 = vector.load %arg7[%c0_101, %c0_102, %c0_103, %c0_104] : memref<1x4x4x16xf32, #tpu.memory_space<vmem>>, vector<1x4x4x16xf32>
    %209 = vector.shape_cast %208 : vector<1x4x4x16xf32> to vector<4x4x16xf32>
    %210 = vector.shape_cast %207 : vector<4x4x16xf32> to vector<1x4x4x16xf32>
    tpu.vector_store %arg7[%c0_101, %c0_102, %c0_103, %c0_104], %210 {strides = array<i32>} : memref<1x4x4x16xf32, #tpu.memory_space<vmem>>, vector<1x4x4x16xf32>,
    %cst_105 = arith.constant dense<0.000000e+00> : vector<16xf32>
    %211 = vector.multi_reduction <add>, %206, %cst_105 [0] : vector<16x16xf32> to vector<16xf32>
    %212 = vector.shape_cast %211 : vector<16xf32> to vector<1x16xf32>
    %c0_106 = arith.constant 0 : index
    %c0_107 = arith.constant 0 : index
    %c0_108 = arith.constant 0 : index
    %213 = vector.load %arg8[%c0_106, %c0_107, %c0_108] : memref<1x1x16xf32, #tpu.memory_space<vmem>>, vector<1x1x16xf32>
    %214 = vector.shape_cast %213 : vector<1x1x16xf32> to vector<1x16xf32>
    %215 = vector.shape_cast %212 : vector<1x16xf32> to vector<1x1x16xf32>
    tpu.vector_store %arg8[%c0_106, %c0_107, %c0_108], %215 {strides = array<i32>} : memref<1x1x16xf32, #tpu.memory_space<vmem>>, vector<1x1x16xf32>,
    %216 = arith.mulf %206, %206 : vector<16x16xf32>
    %cst_109 = arith.constant dense<0.000000e+00> : vector<16xf32>
    %217 = vector.multi_reduction <add>, %216, %cst_109 [0] : vector<16x16xf32> to vector<16xf32>
    %218 = vector.shape_cast %217 : vector<16xf32> to vector<1x16xf32>
    %c0_110 = arith.constant 0 : index
    %c0_111 = arith.constant 0 : index
    %c0_112 = arith.constant 0 : index
    %219 = vector.load %arg9[%c0_110, %c0_111, %c0_112] : memref<1x1x16xf32, #tpu.memory_space<vmem>>, vector<1x1x16xf32>
    %220 = vector.shape_cast %219 : vector<1x1x16xf32> to vector<1x16xf32>
    %221 = vector.shape_cast %218 : vector<1x16xf32> to vector<1x1x16xf32>
    tpu.vector_store %arg9[%c0_110, %c0_111, %c0_112], %221 {strides = array<i32>} : memref<1x1x16xf32, #tpu.memory_space<vmem>>, vector<1x1x16xf32>,
    return
  }
  func.func @transform_0(%arg0: i32) -> (i32, i32, i32, i32) {
    %c0_i32 = arith.constant 0 : i32
    %c0_i32_0 = arith.constant 0 : i32
    %c0_i32_1 = arith.constant 0 : i32
    %c0_i32_2 = arith.constant 0 : i32
    return %arg0, %c0_i32, %c0_i32_0, %c0_i32_1 : i32, i32, i32, i32
  }
  func.func @transform_1(%arg0: i32) -> (i32, i32, i32, i32) {
    %c0_i32 = arith.constant 0 : i32
    %c0_i32_0 = arith.constant 0 : i32
    %c0_i32_1 = arith.constant 0 : i32
    %c0_i32_2 = arith.constant 0 : i32
    return %arg0, %c0_i32, %c0_i32_0, %c0_i32_1 : i32, i32, i32, i32
  }
  func.func @transform_2(%arg0: i32) -> (i32, i32, i32, i32) {
    %c0_i32 = arith.constant 0 : i32
    %c0_i32_0 = arith.constant 0 : i32
    %c0_i32_1 = arith.constant 0 : i32
    %c0_i32_2 = arith.constant 0 : i32
    return %arg0, %c0_i32, %c0_i32_0, %c0_i32_1 : i32, i32, i32, i32
  }
  func.func @transform_3(%arg0: i32) -> (i32, i32, i32, i32) {
    %c0_i32 = arith.constant 0 : i32
    %c0_i32_0 = arith.constant 0 : i32
    %c0_i32_1 = arith.constant 0 : i32
    %c0_i32_2 = arith.constant 0 : i32
    return %arg0, %c0_i32, %c0_i32_0, %c0_i32_1 : i32, i32, i32, i32
  }
  func.func @transform_4(%arg0: i32) -> (i32, i32, i32) {
    %c0_i32 = arith.constant 0 : i32
    %c0_i32_0 = arith.constant 0 : i32
    %c0_i32_1 = arith.constant 0 : i32
    %c0_i32_2 = arith.constant 0 : i32
    return %c0_i32, %c0_i32_0, %c0_i32_1 : i32, i32, i32
  }
  func.func @transform_5(%arg0: i32) -> (i32, i32) {
    %c0_i32 = arith.constant 0 : i32
    %c0_i32_0 = arith.constant 0 : i32
    %c0_i32_1 = arith.constant 0 : i32
    return %c0_i32, %c0_i32_0 : i32, i32
  }
  func.func @transform_6(%arg0: i32) -> (i32, i32, i32, i32) {
    %c0_i32 = arith.constant 0 : i32
    %c0_i32_0 = arith.constant 0 : i32
    %c0_i32_1 = arith.constant 0 : i32
    %c0_i32_2 = arith.constant 0 : i32
    return %arg0, %c0_i32, %c0_i32_0, %c0_i32_1 : i32, i32, i32, i32
  }
  func.func @transform_7(%arg0: i32) -> (i32, i32, i32) {
    %c0_i32 = arith.constant 0 : i32
    %c0_i32_0 = arith.constant 0 : i32
    %c0_i32_1 = arith.constant 0 : i32
    return %arg0, %c0_i32, %c0_i32_0 : i32, i32, i32
  }
  func.func @transform_8(%arg0: i32) -> (i32, i32, i32) {
    %c0_i32 = arith.constant 0 : i32
    %c0_i32_0 = arith.constant 0 : i32
    %c0_i32_1 = arith.constant 0 : i32
    return %arg0, %c0_i32, %c0_i32_0 : i32, i32, i32
  }
}

module attributes {stable_mosaic.version = 11 : i64} {
  func.func @_bn_apply_kernel(%arg0: i32, %arg1: memref<32x16xf32, #tpu.memory_space<vmem>>, %arg2: memref<1x16xf32, #tpu.memory_space<vmem>>, %arg3: memref<1x16xf32, #tpu.memory_space<vmem>>, %arg4: memref<1x16xf32, #tpu.memory_space<vmem>>, %arg5: memref<1x16xf32, #tpu.memory_space<vmem>>, %arg6: memref<32x16xf32, #tpu.memory_space<vmem>>) attributes {dimension_semantics = [#tpu.dimension_semantics<parallel>], iteration_bounds = array<i64: 1>, scalar_prefetch = 0 : i64, scratch_operands = 0 : i64, tpu.core_type = #tpu.core_type<tc>, window_params = [{transform_indices = @transform_0, window_bounds = array<i64: 32, 16>}, {pipeline_mode = #tpu.pipeline_mode<synchronous>, transform_indices = @transform_1, window_bounds = array<i64: 1, 16>}, {pipeline_mode = #tpu.pipeline_mode<synchronous>, transform_indices = @transform_2, window_bounds = array<i64: 1, 16>}, {pipeline_mode = #tpu.pipeline_mode<synchronous>, transform_indices = @transform_3, window_bounds = array<i64: 1, 16>}, {pipeline_mode = #tpu.pipeline_mode<synchronous>, transform_indices = @transform_4, window_bounds = array<i64: 1, 16>}, {transform_indices = @transform_5, window_bounds = array<i64: 32, 16>}]} {
    %c0 = arith.constant 0 : index
    %c0_0 = arith.constant 0 : index
    %0 = vector.load %arg2[%c0, %c0_0] : memref<1x16xf32, #tpu.memory_space<vmem>>, vector<1x16xf32>
    %cst = arith.constant 3.200000e+01 : f32
    %1 = vector.broadcast %cst : f32 to vector<1x16xf32>
    %2 = arith.divf %0, %1 : vector<1x16xf32>
    %c0_1 = arith.constant 0 : index
    %c0_2 = arith.constant 0 : index
    %3 = vector.load %arg3[%c0_1, %c0_2] : memref<1x16xf32, #tpu.memory_space<vmem>>, vector<1x16xf32>
    %cst_3 = arith.constant 3.200000e+01 : f32
    %4 = vector.broadcast %cst_3 : f32 to vector<1x16xf32>
    %5 = arith.divf %3, %4 : vector<1x16xf32>
    %6 = arith.mulf %2, %2 : vector<1x16xf32>
    %7 = arith.subf %5, %6 : vector<1x16xf32>
    %cst_4 = arith.constant 0.000000e+00 : f32
    %8 = vector.broadcast %cst_4 : f32 to vector<1x16xf32>
    %9 = arith.maximumf %7, %8 : vector<1x16xf32>
    %cst_5 = arith.constant 9.99999974E-6 : f32
    %10 = vector.broadcast %cst_5 : f32 to vector<1x16xf32>
    %11 = arith.addf %9, %10 : vector<1x16xf32>
    %12 = math.rsqrt %11 : vector<1x16xf32>
    %c0_6 = arith.constant 0 : index
    %c0_7 = arith.constant 0 : index
    %13 = vector.load %arg4[%c0_6, %c0_7] : memref<1x16xf32, #tpu.memory_space<vmem>>, vector<1x16xf32>
    %14 = arith.mulf %13, %12 : vector<1x16xf32>
    %c0_8 = arith.constant 0 : index
    %c0_9 = arith.constant 0 : index
    %15 = vector.load %arg5[%c0_8, %c0_9] : memref<1x16xf32, #tpu.memory_space<vmem>>, vector<1x16xf32>
    %16 = arith.mulf %2, %14 : vector<1x16xf32>
    %17 = arith.subf %15, %16 : vector<1x16xf32>
    %c0_10 = arith.constant 0 : index
    %c0_11 = arith.constant 0 : index
    %18 = vector.load %arg1[%c0_10, %c0_11] : memref<32x16xf32, #tpu.memory_space<vmem>>, vector<32x16xf32>
    %19 = vector.broadcast %14 : vector<1x16xf32> to vector<32x16xf32>
    %20 = arith.mulf %18, %19 : vector<32x16xf32>
    %21 = vector.broadcast %17 : vector<1x16xf32> to vector<32x16xf32>
    %22 = arith.addf %20, %21 : vector<32x16xf32>
    %c0_12 = arith.constant 0 : index
    %c0_13 = arith.constant 0 : index
    %23 = vector.load %arg6[%c0_12, %c0_13] : memref<32x16xf32, #tpu.memory_space<vmem>>, vector<32x16xf32>
    tpu.vector_store %arg6[%c0_12, %c0_13], %22 {strides = array<i32>} : memref<32x16xf32, #tpu.memory_space<vmem>>, vector<32x16xf32>,
    return
  }
  func.func @transform_0(%arg0: i32) -> (i32, i32) {
    %c0_i32 = arith.constant 0 : i32
    %c0_i32_0 = arith.constant 0 : i32
    return %arg0, %c0_i32 : i32, i32
  }
  func.func @transform_1(%arg0: i32) -> (i32, i32) {
    %c0_i32 = arith.constant 0 : i32
    %c0_i32_0 = arith.constant 0 : i32
    %c0_i32_1 = arith.constant 0 : i32
    return %c0_i32, %c0_i32_0 : i32, i32
  }
  func.func @transform_2(%arg0: i32) -> (i32, i32) {
    %c0_i32 = arith.constant 0 : i32
    %c0_i32_0 = arith.constant 0 : i32
    %c0_i32_1 = arith.constant 0 : i32
    return %c0_i32, %c0_i32_0 : i32, i32
  }
  func.func @transform_3(%arg0: i32) -> (i32, i32) {
    %c0_i32 = arith.constant 0 : i32
    %c0_i32_0 = arith.constant 0 : i32
    %c0_i32_1 = arith.constant 0 : i32
    return %c0_i32, %c0_i32_0 : i32, i32
  }
  func.func @transform_4(%arg0: i32) -> (i32, i32) {
    %c0_i32 = arith.constant 0 : i32
    %c0_i32_0 = arith.constant 0 : i32
    %c0_i32_1 = arith.constant 0 : i32
    return %c0_i32, %c0_i32_0 : i32, i32
  }
  func.func @transform_5(%arg0: i32) -> (i32, i32) {
    %c0_i32 = arith.constant 0 : i32
    %c0_i32_0 = arith.constant 0 : i32
    return %arg0, %c0_i32 : i32, i32
  }
}

</mosaic_0001>

<llo_original>
// kernel: encoder_forward.5
$region0: #{encoder_forward.5}
  #allocation0 [shape = 'u32[]', space=smem, size = 0x4, offset = 0x4, fixed_abs, tag = 'smem constant byte address 0x4 - core index']
  #allocation1 [shape = 'u32[144,128]{1,0:T(1,128)}', space=vmem, size = 0x12000, scoped, tag = 'internal scratch']
  %s0 = inlined_call_operand.vmem [shape: f32[32,16], index: 0, kind: input, shape index: {}]
  %s1 = inlined_call_operand.vmem [shape: f32[1,16], index: 1, kind: input, shape index: {}]
  %s2 = inlined_call_operand.vmem [shape: f32[1,16], index: 2, kind: input, shape index: {}]
  %s3 = inlined_call_operand.vmem [shape: f32[1,16], index: 3, kind: input, shape index: {}]
  %s4 = inlined_call_operand.vmem [shape: f32[1,16], index: 4, kind: input, shape index: {}]
  %s5 = inlined_call_operand.hbm [shape: f32[32,16], index: 5, kind: output, shape index: {}]
  %s6 = sld [smem:[#allocation0]]
  $region30: #{encoder_forward.5} parent=0
    _
  %s8 = ssub.s32 1, %s6
  %s9 = scalar_select 0, %s8, %s6
  $region1: #{encoder_forward.5} parent=0
    #allocation2 [shape = 'u8[16384]{0}', space=vmem, size = 0x4000, scoped, tag = 'output window, operand 0, single buffered']
    #allocation3 [shape = 's32[1]{0}', space=sflag, size = 0x4, scoped, tag = 'scoped memory for encoder_forward.5']
    %10 = vsyncpa [#allocation3], 0
    // Predicated region
    $region2: #{encoder_forward.5} parent=1 // pred_check
      _
    $region3: #{encoder_forward.5} parent=1 // pred_check_branch
      %12 = sbr.rel (0) target = $region5
    $region4: #{encoder_forward.5} parent=1 // pred_region
      _
    $region5: #{encoder_forward.5} parent=1 // pred_fallthru
      _
    // Predicated region
    $region6: #{encoder_forward.5} parent=1 // pred_check
      _
    $region7: #{encoder_forward.5} parent=1 // pred_check_branch
      %14 = sbr.rel (0) target = $region9
    $region8: #{encoder_forward.5} parent=1 // pred_region
      _
    $region9: #{encoder_forward.5} parent=1 // pred_fallthru
      _
    // Predicated region
    $region10: #{encoder_forward.5} parent=1 // pred_check
      _
    $region11: #{encoder_forward.5} parent=1 // pred_check_branch
      %16 = sbr.rel (0) target = $region13
    $region12: #{encoder_forward.5} parent=1 // pred_region
      _
    $region13: #{encoder_forward.5} parent=1 // pred_fallthru
      _
    // Predicated region
    $region14: #{encoder_forward.5} parent=1 // pred_check
      _
    $region15: #{encoder_forward.5} parent=1 // pred_check_branch
      %18 = sbr.rel (0) target = $region17
    $region16: #{encoder_forward.5} parent=1 // pred_region
      _
    $region17: #{encoder_forward.5} parent=1 // pred_fallthru
      _
    // Predicated region
    $region18: #{encoder_forward.5} parent=1 // pred_check
      _
    $region19: #{encoder_forward.5} parent=1 // pred_check_branch
      %20 = sbr.rel (0) target = $region21
    $region20: #{encoder_forward.5} parent=1 // pred_region
      _
    $region21: #{encoder_forward.5} parent=1 // pred_fallthru
      _
    %v21 = vld [vmem:[%s1] sm:$0x1]
    %v22 = vrcp.pop 32.0
    %v23 = vmul.f32 %v21, %v22
    %v24 = vld [vmem:[%s2] sm:$0x1]
    %v25 = vmul.f32 %v24, %v22
    %v26 = vmul.f32 %v23, %v23
    %v27 = vsub.f32 %v25, %v26
    %v28 = vmax.f32 %v27, 0.0
    %v29 = vadd.f32 %v28, 1e-05
    %v30 = vrsqrt.pop %v29
    %v31 = vld [vmem:[%s3] sm:$0x1]
    %v32 = vmul.f32 %v31, %v30
    %v33 = vld [vmem:[%s4] sm:$0x1]
    %v34 = vmul.f32 %v23, %v32
    %v35 = vsub.f32 %v33, %v34
    %v36 = vld [vmem:[%s0] sm:$0xff]
    %v37 = vld [vmem:[%s0 + $0x8] sm:$0xff]
    %v38 = vld [vmem:[%s0 + $0x10] sm:$0xff]
    %v39 = vld [vmem:[%s0 + $0x18] sm:$0xff]
    %v41 = vlaneseq
    %v42 = vshrl.u32 %v41, 7
    %v43 = vsub.s32 0, %v42
    %v44 = vrot.slane %v32, %v43
    %v46 = vmul.f32 %v36, %v44
    %v47 = vmul.f32 %v37, %v44
    %v48 = vmul.f32 %v38, %v44
    %v49 = vmul.f32 %v39, %v44
    %v51 = vlaneseq
    %v52 = vshrl.u32 %v51, 7
    %v53 = vsub.s32 0, %v52
    %v54 = vrot.slane %v35, %v53
    %v56 = vadd.f32 %v46, %v54
    %v57 = vadd.f32 %v47, %v54
    %v58 = vadd.f32 %v48, %v54
    %v59 = vadd.f32 %v49, %v54
    %vm60 = vcmask 130048
    %61 = vst.msk [vmem:[#allocation2] sm:$0xff] %vm60, %v56
    %62 = vst.msk [vmem:[#allocation2 + $0x8] sm:$0xff] %vm60, %v57
    %63 = vst.msk [vmem:[#allocation2 + $0x10] sm:$0xff] %vm60, %v58
    %64 = vst.msk [vmem:[#allocation2 + $0x18] sm:$0xff] %vm60, %v59
    // Predicated region
    $region22: #{encoder_forward.5} parent=1 // pred_check
      _
    $region23: #{encoder_forward.5} parent=1 // pred_check_branch
      %66 = sbr.rel (0) target = $region25
    $region24: #{encoder_forward.5} parent=1 // pred_region
      %s68 = ssub.s32 512, 512
      %69 = vsyncadd [#allocation3], %s68
      %s70 = sshll.u32 [#allocation2], 4
      %s71 = int_to_ptr.vmem [resolvable:$true] %s70
      %76 = dma.vmem_to_hbm [thread:$0]  %s71, 512, %s5, [#allocation3], 128, 128, 8
    $region25: #{encoder_forward.5} parent=1 // pred_fallthru
      _
    // Predicated region
    $region26: #{encoder_forward.5} parent=1 // pred_check
      _
    $region27: #{encoder_forward.5} parent=1 // pred_check_branch
      %78 = sbr.rel (0) target = $region29
    $region28: #{encoder_forward.5} parent=1 // pred_region
      %79 = dma.done [#allocation3], 512
    $region29: #{encoder_forward.5} parent=1 // pred_fallthru
      _
    %80 = vsyncpa [#allocation3], 1

// kernel: encoder_forward.4
$region0: #{encoder_forward.4}
  #allocation0 [shape = 'u32[]', space=smem, size = 0x4, offset = 0x4, fixed_abs, tag = 'smem constant byte address 0x4 - core index']
  #allocation1 [shape = 'u32[144,128]{1,0:T(1,128)}', space=vmem, size = 0x12000, scoped, tag = 'internal scratch']
  %s0 = inlined_call_operand.vmem [shape: f32[2,6,6,8], index: 0, kind: input, shape index: {}]
  %s1 = inlined_call_operand.vmem [shape: f32[2,6,6,8], index: 1, kind: input, shape index: {}]
  %s2 = inlined_call_operand.vmem [shape: f32[2,6,6,8], index: 2, kind: input, shape index: {}]
  %s3 = inlined_call_operand.vmem [shape: f32[2,6,6,8], index: 3, kind: input, shape index: {}]
  %s4 = inlined_call_operand.vmem [shape: bf16[25,8,16], index: 4, kind: input, shape index: {}]
  %s5 = inlined_call_operand.vmem [shape: f32[1,16], index: 5, kind: input, shape index: {}]
  %s6 = inlined_call_operand.vmem [shape: f32[2,4,4,16], index: 6, kind: output, shape index: {0}]
  %s7 = inlined_call_operand.vmem [shape: f32[2,1,16], index: 7, kind: output, shape index: {1}]
  %s8 = inlined_call_operand.vmem [shape: f32[2,1,16], index: 8, kind: output, shape index: {2}]
  %9 = xla_tuple %s6, %s7, %s8
  %s10 = sld [smem:[#allocation0]]
  $region73: #{encoder_forward.4} parent=0
    _
  %s12 = ssub.s32 1, %s10
  %s13 = scalar_select 0, %s12, %s10
  loop: start=0, step=1, limit=4
  $region2: #{encoder_forward.4} parent=0 // loop_pre_header
    _
  $region3: #{encoder_forward.4} parent=0 // loop_header
    %s15 = sphi 0, %s19
    %p16 = scmp.ge.s32.totalorder %s15, 4
    %s25 = sphi 0, %s27
    %s28 = sphi 0, %s25
    %s29 = sphi 0, %s28
    %s45 = sphi 0, %s29
    %s51 = sphi 0, %s53
    %s54 = sphi 0, %s51
    %s55 = sphi 0, %s54
    %s71 = sphi 0, %s55
    %s77 = sphi 0, %s79
    %s80 = sphi 0, %s77
    %s81 = sphi 0, %s80
    %s97 = sphi 0, %s81
    %s103 = sphi 0, %s105
    %s106 = sphi 0, %s103
    %s107 = sphi 0, %s106
    %s123 = sphi 0, %s107
    %s127 = sphi 0, %s127
    %s129 = sphi 0, %s127
    %s130 = sphi 0, %s129
    %s144 = sphi 0, %s130
    %s148 = sphi 0, %s148
    %s150 = sphi 0, %s148
    %s151 = sphi 0, %s150
    %s165 = sphi 0, %s151
    %s171 = sphi 0, %s173
    %s174 = sphi 0, %s171
    %s175 = sphi 0, %s174
    %s191 = sphi 0, %s175
    %s197 = sphi 0, %s199
    %s200 = sphi 0, %s197
    %s201 = sphi 0, %s200
    %s217 = sphi 0, %s201
    %s223 = sphi 0, %s225
    %s226 = sphi 0, %s223
    %s227 = sphi 0, %s226
    %s243 = sphi 0, %s227
  $region4: #{encoder_forward.4} parent=0 // loop_header_branch
    %18 = sbr.rel (%p16) target = $region8
  $region5: #{encoder_forward.4} parent=0 // loop_body
    %s20 = ssub.s32 %s15, 1
    %s21 = ssub.s32 %s15, 2
    %s22 = sadd.s32 %s15, 1
    %s23 = ssub.s32 %s15, %s22
    %p24 = scmp.eq.s32.totalorder %s23, 0
    %s26 = sadd.s32 %s25, 1
    %s27 = scalar_select %p24, %s25, %s26
    %p30 = pneg %p24
    %p31 = scmp.eq.s32.totalorder %s15, 1
    %p32 = por %p30, %p31
    %p33 = scmp.ne.s32.totalorder %s25, %s28
    %p34 = scmp.eq.s32.totalorder %s15, 0
    %p35 = por %p33, %p34
    %p36 = scmp.ne.s32.totalorder %s25, %s28
    %p37 = scmp.eq.s32.totalorder %s20, 1
    %p38 = por %p36, %p37
    %p39 = scmp.ne.s32.totalorder %s28, %s29
    %p40 = scmp.eq.s32.totalorder %s20, 0
    %p41 = por %p39, %p40
    %p42 = scmp.ne.s32.totalorder %s28, %s29
    %p43 = scmp.eq.s32.totalorder %s21, 1
    %p44 = por %p42, %p43
    %p46 = scmp.ne.s32.totalorder %s29, %s45
    %p47 = scmp.eq.s32.totalorder %s21, 0
    %p48 = por %p46, %p47
    %s49 = ssub.s32 %s15, %s22
    %p50 = scmp.eq.s32.totalorder %s49, 0
    %s52 = sadd.s32 %s51, 1
    %s53 = scalar_select %p50, %s51, %s52
    %p56 = pneg %p50
    %p57 = scmp.eq.s32.totalorder %s15, 1
    %p58 = por %p56, %p57
    %p59 = scmp.ne.s32.totalorder %s51, %s54
    %p60 = scmp.eq.s32.totalorder %s15, 0
    %p61 = por %p59, %p60
    %p62 = scmp.ne.s32.totalorder %s51, %s54
    %p63 = scmp.eq.s32.totalorder %s20, 1
    %p64 = por %p62, %p63
    %p65 = scmp.ne.s32.totalorder %s54, %s55
    %p66 = scmp.eq.s32.totalorder %s20, 0
    %p67 = por %p65, %p66
    %p68 = scmp.ne.s32.totalorder %s54, %s55
    %p69 = scmp.eq.s32.totalorder %s21, 1
    %p70 = por %p68, %p69
    %p72 = scmp.ne.s32.totalorder %s55, %s71
    %p73 = scmp.eq.s32.totalorder %s21, 0
    %p74 = por %p72, %p73
    %s75 = ssub.s32 %s15, %s22
    %p76 = scmp.eq.s32.totalorder %s75, 0
    %s78 = sadd.s32 %s77, 1
    %s79 = scalar_select %p76, %s77, %s78
    %p82 = pneg %p76
    %p83 = scmp.eq.s32.totalorder %s15, 1
    %p84 = por %p82, %p83
    %p85 = scmp.ne.s32.totalorder %s77, %s80
    %p86 = scmp.eq.s32.totalorder %s15, 0
    %p87 = por %p85, %p86
    %p88 = scmp.ne.s32.totalorder %s77, %s80
    %p89 = scmp.eq.s32.totalorder %s20, 1
    %p90 = por %p88, %p89
    %p91 = scmp.ne.s32.totalorder %s80, %s81
    %p92 = scmp.eq.s32.totalorder %s20, 0
    %p93 = por %p91, %p92
    %p94 = scmp.ne.s32.totalorder %s80, %s81
    %p95 = scmp.eq.s32.totalorder %s21, 1
    %p96 = por %p94, %p95
    %p98 = scmp.ne.s32.totalorder %s81, %s97
    %p99 = scmp.eq.s32.totalorder %s21, 0
    %p100 = por %p98, %p99
    %s101 = ssub.s32 %s15, %s22
    %p102 = scmp.eq.s32.totalorder %s101, 0
    %s104 = sadd.s32 %s103, 1
    %s105 = scalar_select %p102, %s103, %s104
    %p108 = pneg %p102
    %p109 = scmp.eq.s32.totalorder %s15, 1
    %p110 = por %p108, %p109
    %p111 = scmp.ne.s32.totalorder %s103, %s106
    %p112 = scmp.eq.s32.totalorder %s15, 0
    %p113 = por %p111, %p112
    %p114 = scmp.ne.s32.totalorder %s103, %s106
    %p115 = scmp.eq.s32.totalorder %s20, 1
    %p116 = por %p114, %p115
    %p117 = scmp.ne.s32.totalorder %s106, %s107
    %p118 = scmp.eq.s32.totalorder %s20, 0
    %p119 = por %p117, %p118
    %p120 = scmp.ne.s32.totalorder %s106, %s107
    %p121 = scmp.eq.s32.totalorder %s21, 1
    %p122 = por %p120, %p121
    %p124 = scmp.ne.s32.totalorder %s107, %s123
    %p125 = scmp.eq.s32.totalorder %s21, 0
    %p126 = por %p124, %p125
    %s128 = sadd.s32 %s127, 1
    %p131 = scmp.eq.s32.totalorder %s15, 1
    %p132 = scmp.ne.s32.totalorder %s127, %s129
    %p133 = scmp.eq.s32.totalorder %s15, 0
    %p134 = por %p132, %p133
    %p135 = scmp.ne.s32.totalorder %s127, %s129
    %p136 = scmp.eq.s32.totalorder %s20, 1
    %p137 = por %p135, %p136
    %p138 = scmp.ne.s32.totalorder %s129, %s130
    %p139 = scmp.eq.s32.totalorder %s20, 0
    %p140 = por %p138, %p139
    %p141 = scmp.ne.s32.totalorder %s129, %s130
    %p142 = scmp.eq.s32.totalorder %s21, 1
    %p143 = por %p141, %p142
    %p145 = scmp.ne.s32.totalorder %s130, %s144
    %p146 = scmp.eq.s32.totalorder %s21, 0
    %p147 = por %p145, %p146
    %s149 = sadd.s32 %s148, 1
    %p152 = scmp.eq.s32.totalorder %s15, 1
    %p153 = scmp.ne.s32.totalorder %s148, %s150
    %p154 = scmp.eq.s32.totalorder %s15, 0
    %p155 = por %p153, %p154
    %p156 = scmp.ne.s32.totalorder %s148, %s150
    %p157 = scmp.eq.s32.totalorder %s20, 1
    %p158 = por %p156, %p157
    %p159 = scmp.ne.s32.totalorder %s150, %s151
    %p160 = scmp.eq.s32.totalorder %s20, 0
    %p161 = por %p159, %p160
    %p162 = scmp.ne.s32.totalorder %s150, %s151
    %p163 = scmp.eq.s32.totalorder %s21, 1
    %p164 = por %p162, %p163
    %p166 = scmp.ne.s32.totalorder %s151, %s165
    %p167 = scmp.eq.s32.totalorder %s21, 0
    %p168 = por %p166, %p167
    %s169 = ssub.s32 %s15, %s22
    %p170 = scmp.eq.s32.totalorder %s169, 0
    %s172 = sadd.s32 %s171, 1
    %s173 = scalar_select %p170, %s171, %s172
    %p176 = pneg %p170
    %p177 = scmp.eq.s32.totalorder %s15, 1
    %p178 = por %p176, %p177
    %p179 = scmp.ne.s32.totalorder %s171, %s174
    %p180 = scmp.eq.s32.totalorder %s15, 0
    %p181 = por %p179, %p180
    %p182 = scmp.ne.s32.totalorder %s171, %s174
    %p183 = scmp.eq.s32.totalorder %s20, 1
    %p184 = por %p182, %p183
    %p185 = scmp.ne.s32.totalorder %s174, %s175
    %p186 = scmp.eq.s32.totalorder %s20, 0
    %p187 = por %p185, %p186
    %p188 = scmp.ne.s32.totalorder %s174, %s175
    %p189 = scmp.eq.s32.totalorder %s21, 1
    %p190 = por %p188, %p189
    %p192 = scmp.ne.s32.totalorder %s175, %s191
    %p193 = scmp.eq.s32.totalorder %s21, 0
    %p194 = por %p192, %p193
    %s195 = ssub.s32 %s15, %s22
    %p196 = scmp.eq.s32.totalorder %s195, 0
    %s198 = sadd.s32 %s197, 1
    %s199 = scalar_select %p196, %s197, %s198
    %p202 = pneg %p196
    %p203 = scmp.eq.s32.totalorder %s15, 1
    %p204 = por %p202, %p203
    %p205 = scmp.ne.s32.totalorder %s197, %s200
    %p206 = scmp.eq.s32.totalorder %s15, 0
    %p207 = por %p205, %p206
    %p208 = scmp.ne.s32.totalorder %s197, %s200
    %p209 = scmp.eq.s32.totalorder %s20, 1
    %p210 = por %p208, %p209
    %p211 = scmp.ne.s32.totalorder %s200, %s201
    %p212 = scmp.eq.s32.totalorder %s20, 0
    %p213 = por %p211, %p212
    %p214 = scmp.ne.s32.totalorder %s200, %s201
    %p215 = scmp.eq.s32.totalorder %s21, 1
    %p216 = por %p214, %p215
    %p218 = scmp.ne.s32.totalorder %s201, %s217
    %p219 = scmp.eq.s32.totalorder %s21, 0
    %p220 = por %p218, %p219
    %s221 = ssub.s32 %s15, %s22
    %p222 = scmp.eq.s32.totalorder %s221, 0
    %s224 = sadd.s32 %s223, 1
    %s225 = scalar_select %p222, %s223, %s224
    %p228 = pneg %p222
    %p229 = scmp.eq.s32.totalorder %s15, 1
    %p230 = por %p228, %p229
    %p231 = scmp.ne.s32.totalorder %s223, %s226
    %p232 = scmp.eq.s32.totalorder %s15, 0
    %p233 = por %p231, %p232
    %p234 = scmp.ne.s32.totalorder %s223, %s226
    %p235 = scmp.eq.s32.totalorder %s20, 1
    %p236 = por %p234, %p235
    %p237 = scmp.ne.s32.totalorder %s226, %s227
    %p238 = scmp.eq.s32.totalorder %s20, 0
    %p239 = por %p237, %p238
    %p240 = scmp.ne.s32.totalorder %s226, %s227
    %p241 = scmp.eq.s32.totalorder %s21, 1
    %p242 = por %p240, %p241
    %p244 = scmp.ne.s32.totalorder %s227, %s243
    %p245 = scmp.eq.s32.totalorder %s21, 0
    %p246 = por %p244, %p245
    %p247 = scmp.le.s32.totalorder 1, %s15
    %p248 = scmp.lt.s32.totalorder %s15, 3
    %p249 = pnand %p247, %p248
    %p250 = pneg %p249
    // Predicated region
    $region9: #{encoder_forward.4} parent=5 // pred_check
      _
    $region10: #{encoder_forward.4} parent=5 // pred_check_branch
      %252 = sbr.rel (%p249) target = $region12
    $region11: #{encoder_forward.4} parent=5 // pred_region
      %s253 = ssub.s32 %s15, 1
      // Predicated region
      $region13: #{encoder_forward.4} parent=11 // pred_check
        %p254 = pneg %p140
      $region14: #{encoder_forward.4} parent=11 // pred_check_branch
        %256 = sbr.rel (%p254) target = $region16
      $region15: #{encoder_forward.4} parent=11 // pred_region
        _
      $region16: #{encoder_forward.4} parent=11 // pred_fallthru
        _
      // Predicated region
      $region17: #{encoder_forward.4} parent=11 // pred_check
        %p257 = pneg %p161
      $region18: #{encoder_forward.4} parent=11 // pred_check_branch
        %259 = sbr.rel (%p257) target = $region20
      $region19: #{encoder_forward.4} parent=11 // pred_region
        _
      $region20: #{encoder_forward.4} parent=11 // pred_fallthru
        _
    $region12: #{encoder_forward.4} parent=5 // pred_fallthru
      _
    %p260 = scmp.lt.s32.totalorder %s15, 2
    // Predicated region
    $region21: #{encoder_forward.4} parent=5 // pred_check
      %p261 = pneg %p260
    $region22: #{encoder_forward.4} parent=5 // pred_check_branch
      %263 = sbr.rel (%p261) target = $region24
    $region23: #{encoder_forward.4} parent=5 // pred_region
      // Predicated region
      $region25: #{encoder_forward.4} parent=23 // pred_check
        %p264 = pneg %p35
      $region26: #{encoder_forward.4} parent=23 // pred_check_branch
        %266 = sbr.rel (%p264) target = $region28
      $region27: #{encoder_forward.4} parent=23 // pred_region
        %p267 = scmp.lt.s32.totalorder %s15, 1
        %s268 = scalar_select %p267, %s15, 1
        %s269 = smul.addr %s268, 6
        %s270 = smul.addr %s269, 8
        %s271 = scalar_lea.vmem %s0, %s270
      $region28: #{encoder_forward.4} parent=23 // pred_fallthru
        _
      // Predicated region
      $region29: #{encoder_forward.4} parent=23 // pred_check
        %p272 = pneg %p61
      $region30: #{encoder_forward.4} parent=23 // pred_check_branch
        %274 = sbr.rel (%p272) target = $region32
      $region31: #{encoder_forward.4} parent=23 // pred_region
        %p275 = scmp.lt.s32.totalorder %s15, 1
        %s276 = scalar_select %p275, %s15, 1
        %s277 = smul.addr %s276, 6
        %s278 = smul.addr %s277, 8
        %s279 = scalar_lea.vmem %s1, %s278
      $region32: #{encoder_forward.4} parent=23 // pred_fallthru
        _
      // Predicated region
      $region33: #{encoder_forward.4} parent=23 // pred_check
        %p280 = pneg %p87
      $region34: #{encoder_forward.4} parent=23 // pred_check_branch
        %282 = sbr.rel (%p280) target = $region36
      $region35: #{encoder_forward.4} parent=23 // pred_region
        %p283 = scmp.lt.s32.totalorder %s15, 1
        %s284 = scalar_select %p283, %s15, 1
        %s285 = smul.addr %s284, 6
        %s286 = smul.addr %s285, 8
        %s287 = scalar_lea.vmem %s2, %s286
      $region36: #{encoder_forward.4} parent=23 // pred_fallthru
        _
      // Predicated region
      $region37: #{encoder_forward.4} parent=23 // pred_check
        %p288 = pneg %p113
      $region38: #{encoder_forward.4} parent=23 // pred_check_branch
        %290 = sbr.rel (%p288) target = $region40
      $region39: #{encoder_forward.4} parent=23 // pred_region
        %p291 = scmp.lt.s32.totalorder %s15, 1
        %s292 = scalar_select %p291, %s15, 1
        %s293 = smul.addr %s292, 6
        %s294 = smul.addr %s293, 8
        %s295 = scalar_lea.vmem %s3, %s294
      $region40: #{encoder_forward.4} parent=23 // pred_fallthru
        _
    $region24: #{encoder_forward.4} parent=5 // pred_fallthru
      _
    %p296 = scmp.le.s32.totalorder 1, %s15
    %p297 = scmp.lt.s32.totalorder %s15, 3
    %p298 = pnand %p296, %p297
    %p299 = pneg %p298
    // Predicated region
    $region41: #{encoder_forward.4} parent=5 // pred_check
      _
    $region42: #{encoder_forward.4} parent=5 // pred_check_branch
      %301 = sbr.rel (%p298) target = $region44
    $region43: #{encoder_forward.4} parent=5 // pred_region
      %s302 = ssub.s32 %s15, 1
      %p303 = scmp.lt.s32.totalorder %s20, 1
      %s304 = scalar_select %p303, %s20, 1
      %s305 = smul.addr %s304, 6
      %s306 = smul.addr %s305, 8
      %s307 = scalar_lea.vmem %s0, %s306
      %p308 = pneg %p41
      %p309 = pneg %p38
      %p310 = scmp.lt.s32.totalorder %s20, 1
      %s311 = scalar_select %p310, %s20, 1
      %s312 = smul.addr %s311, 6
      %s313 = smul.addr %s312, 8
      %s314 = scalar_lea.vmem %s1, %s313
      %p315 = pneg %p67
      %p316 = pneg %p64
      %p317 = scmp.lt.s32.totalorder %s20, 1
      %s318 = scalar_select %p317, %s20, 1
      %s319 = smul.addr %s318, 6
      %s320 = smul.addr %s319, 8
      %s321 = scalar_lea.vmem %s2, %s320
      %p322 = pneg %p93
      %p323 = pneg %p90
      %p324 = scmp.lt.s32.totalorder %s20, 1
      %s325 = scalar_select %p324, %s20, 1
      %s326 = smul.addr %s325, 6
      %s327 = smul.addr %s326, 8
      %s328 = scalar_lea.vmem %s3, %s327
      %p329 = pneg %p119
      %p330 = pneg %p116
      %p331 = pneg %p140
      %p332 = pneg %p137
      %p333 = pneg %p161
      %p334 = pneg %p158
      %p335 = pneg %p187
      %p336 = pneg %p184
      %p337 = scmp.lt.s32.totalorder %s20, 1
      %s338 = scalar_select %p337, %s20, 1
      %s339 = smul.addr %s338, 4
      %s340 = smul.addr %s339, 4
      %s341 = scalar_lea.vmem %s6, %s340
      %p342 = pneg %p213
      %p343 = pneg %p210
      %p344 = scmp.lt.s32.totalorder %s20, 1
      %s345 = scalar_select %p344, %s20, 1
      %s346 = scalar_lea.vmem %s7, %s345
      %p347 = pneg %p239
      %p348 = pneg %p236
      %p349 = scmp.lt.s32.totalorder %s20, 1
      %s350 = scalar_select %p349, %s20, 1
      %s351 = scalar_lea.vmem %s8, %s350
      %p352 = scmp.lt.s32.totalorder %s20, 1
      %s353 = scalar_select %p352, %s20, 1
      %s354 = smul.addr %s353, 6
      %s355 = smul.addr %s354, 8
      %s356 = scalar_lea.vmem %s0, %s355
      %p357 = scmp.lt.s32.totalorder %s20, 1
      %s358 = scalar_select %p357, %s20, 1
      %s359 = smul.addr %s358, 6
      %s360 = smul.addr %s359, 8
      %s361 = scalar_lea.vmem %s1, %s360
      %p362 = scmp.lt.s32.totalorder %s20, 1
      %s363 = scalar_select %p362, %s20, 1
      %s364 = smul.addr %s363, 6
      %s365 = smul.addr %s364, 8
      %s366 = scalar_lea.vmem %s2, %s365
      %p367 = scmp.lt.s32.totalorder %s20, 1
      %s368 = scalar_select %p367, %s20, 1
      %s369 = smul.addr %s368, 6
      %s370 = smul.addr %s369, 8
      %s371 = scalar_lea.vmem %s3, %s370
      %p372 = scmp.lt.s32.totalorder %s20, 1
      %s373 = scalar_select %p372, %s20, 1
      %s374 = smul.addr %s373, 4
      %s375 = smul.addr %s374, 4
      %s376 = scalar_lea.vmem %s6, %s375
      %p377 = scmp.lt.s32.totalorder %s20, 1
      %s378 = scalar_select %p377, %s20, 1
      %s379 = scalar_lea.vmem %s7, %s378
      %p380 = scmp.lt.s32.totalorder %s20, 1
      %s381 = scalar_select %p380, %s20, 1
      %s382 = scalar_lea.vmem %s8, %s381
      %v384 = vld [vmem:[%s356] sm:$0x3f]
      %v385 = vld [vmem:[%s356 + $0x8] sm:$0x3f]
      %v386 = vld [vmem:[%s356 + $0x10] sm:$0x3f]
      %v387 = vld [vmem:[%s356 + $0x18] sm:$0x3f]
      %v388 = vld [vmem:[%s356 + $0x20] sm:$0x3f]
      %v389 = vld [vmem:[%s356 + $0x28] sm:$0x3f]
      %vm390 = vcmp.gt.f32.partialorder %v384, 0.0
      %vm391 = vcmp.gt.f32.partialorder %v385, 0.0
      %vm392 = vcmp.gt.f32.partialorder %v386, 0.0
      %vm393 = vcmp.gt.f32.partialorder %v387, 0.0
      %vm394 = vcmp.gt.f32.partialorder %v388, 0.0
      %vm395 = vcmp.gt.f32.partialorder %v389, 0.0
      %v396 = vmul.f32 %v384, 0.01
      %v397 = vmul.f32 %v385, 0.01
      %v398 = vmul.f32 %v386, 0.01
      %v399 = vmul.f32 %v387, 0.01
      %v400 = vmul.f32 %v388, 0.01
      %v401 = vmul.f32 %v389, 0.01
      %v402 = vsel %vm390, %v384, %v396
      %v403 = vsel %vm391, %v385, %v397
      %v404 = vsel %vm392, %v386, %v398
      %v405 = vsel %vm393, %v387, %v399
      %v406 = vsel %vm394, %v388, %v400
      %v407 = vsel %vm395, %v389, %v401
      %v408 = vld [vmem:[%s361] sm:$0x3f]
      %v409 = vld [vmem:[%s361 + $0x8] sm:$0x3f]
      %v410 = vld [vmem:[%s361 + $0x10] sm:$0x3f]
      %v411 = vld [vmem:[%s361 + $0x18] sm:$0x3f]
      %v412 = vld [vmem:[%s361 + $0x20] sm:$0x3f]
      %v413 = vld [vmem:[%s361 + $0x28] sm:$0x3f]
      %vm414 = vcmp.gt.f32.partialorder %v408, 0.0
      %vm415 = vcmp.gt.f32.partialorder %v409, 0.0
      %vm416 = vcmp.gt.f32.partialorder %v410, 0.0
      %vm417 = vcmp.gt.f32.partialorder %v411, 0.0
      %vm418 = vcmp.gt.f32.partialorder %v412, 0.0
      %vm419 = vcmp.gt.f32.partialorder %v413, 0.0
      %v420 = vmul.f32 %v408, 0.01
      %v421 = vmul.f32 %v409, 0.01
      %v422 = vmul.f32 %v410, 0.01
      %v423 = vmul.f32 %v411, 0.01
      %v424 = vmul.f32 %v412, 0.01
      %v425 = vmul.f32 %v413, 0.01
      %v426 = vsel %vm414, %v408, %v420
      %v427 = vsel %vm415, %v409, %v421
      %v428 = vsel %vm416, %v410, %v422
      %v429 = vsel %vm417, %v411, %v423
      %v430 = vsel %vm418, %v412, %v424
      %v431 = vsel %vm419, %v413, %v425
      %v432 = vld [vmem:[%s366] sm:$0x3f]
      %v433 = vld [vmem:[%s366 + $0x8] sm:$0x3f]
      %v434 = vld [vmem:[%s366 + $0x10] sm:$0x3f]
      %v435 = vld [vmem:[%s366 + $0x18] sm:$0x3f]
      %v436 = vld [vmem:[%s366 + $0x20] sm:$0x3f]
      %vm437 = vcmp.gt.f32.partialorder %v432, 0.0
      %vm438 = vcmp.gt.f32.partialorder %v433, 0.0
      %vm439 = vcmp.gt.f32.partialorder %v434, 0.0
      %vm440 = vcmp.gt.f32.partialorder %v435, 0.0
      %vm441 = vcmp.gt.f32.partialorder %v436, 0.0
      %v442 = vmul.f32 %v432, 0.01
      %v443 = vmul.f32 %v433, 0.01
      %v444 = vmul.f32 %v434, 0.01
      %v445 = vmul.f32 %v435, 0.01
      %v446 = vmul.f32 %v436, 0.01
      %v447 = vsel %vm437, %v432, %v442
      %v448 = vsel %vm438, %v433, %v443
      %v449 = vsel %vm439, %v434, %v444
      %v450 = vsel %vm440, %v435, %v445
      %v451 = vsel %vm441, %v436, %v446
      %v452 = vld [vmem:[%s371] sm:$0x3f]
      %v453 = vld [vmem:[%s371 + $0x8] sm:$0x3f]
      %v454 = vld [vmem:[%s371 + $0x10] sm:$0x3f]
      %v455 = vld [vmem:[%s371 + $0x18] sm:$0x3f]
      %v456 = vld [vmem:[%s371 + $0x20] sm:$0x3f]
      %vm457 = vcmp.gt.f32.partialorder %v452, 0.0
      %vm458 = vcmp.gt.f32.partialorder %v453, 0.0
      %vm459 = vcmp.gt.f32.partialorder %v454, 0.0
      %vm460 = vcmp.gt.f32.partialorder %v455, 0.0
      %vm461 = vcmp.gt.f32.partialorder %v456, 0.0
      %v462 = vmul.f32 %v452, 0.01
      %v463 = vmul.f32 %v453, 0.01
      %v464 = vmul.f32 %v454, 0.01
      %v465 = vmul.f32 %v455, 0.01
      %v466 = vmul.f32 %v456, 0.01
      %v467 = vsel %vm457, %v452, %v462
      %v468 = vsel %vm458, %v453, %v463
      %v469 = vsel %vm459, %v454, %v464
      %v470 = vsel %vm460, %v455, %v465
      %v471 = vsel %vm461, %v456, %v466
      %v476 = vcombine.low %v402, %v403
      %v477 = vcombine.low %v404, %v405
      %v480 = vpack.c.bf16 %v477, %v476
      %v481 = vld [vmem:[%s4] sm:$0xf]
      %v486 = vcombine.low %v426, %v427
      %v487 = vcombine.low %v428, %v429
      %v490 = vpack.c.bf16 %v487, %v486
      %s491 = scalar_lea.vmem %s4, 4
      %v492 = vld [vmem:[%s491] sm:$0xf]
      %vm493 = vcmask 64512
      %v495 = vsel %vm493, %v490, 0
      %vm497 = vcmask 1043456
      %v499 = vsel %vm497, %v492, 0
      %501 = vmatprep.subr.bf16.mxu0 0
      %502 = vmatpush1.bf16.msra.mxu0 %v499
      %503 = vmatprep.subr.bf16.mxu0 0
      %504 = vmatpush1.bf16.msra.mxu0 0
      %505 = vmatprep.subr.bf16.mxu0 0
      %506 = vmatpush1.bf16.msra.mxu0 0
      %507 = vmatprep.subr.bf16.mxu0 0
      %508 = vmatpush1.bf16.msra.mxu0 0
      %509 = vmatprep.subr.bf16.mxu0 0
      %510 = vmatpush1.bf16.msra.mxu0 0
      %511 = vmatprep.subr.bf16.mxu0 0
      %512 = vmatpush1.bf16.msra.mxu0 0
      %513 = vmatprep.subr.bf16.mxu0 0
      %514 = vmatpush1.bf16.msra.mxu0 0
      %515 = vmatprep.subr.bf16.mxu0 0
      %516 = vmatpush1.bf16.msra.mxu0 0
      %517 = vmatprep.subr.bf16.mxu0 0
      %518 = vmatpush1.bf16.msra.mxu0 0
      %519 = vmatprep.subr.bf16.mxu0 0
      %520 = vmatpush1.bf16.msra.mxu0 0
      %521 = vmatprep.subr.bf16.mxu0 0
      %522 = vmatpush1.bf16.msra.mxu0 0
      %523 = vmatprep.subr.bf16.mxu0 0
      %524 = vmatpush1.bf16.msra.mxu0 0
      %525 = vmatprep.subr.bf16.mxu0 0
      %526 = vmatpush1.bf16.msra.mxu0 0
      %527 = vmatprep.subr.bf16.mxu0 0
      %528 = vmatpush1.bf16.msra.mxu0 0
      %529 = vmatprep.subr.bf16.mxu0 0
      %530 = vmatpush1.bf16.msra.mxu0 0
      %531 = vmatprep.subr.bf16.mxu0 0
      %532 = vmatpush1.bf16.msra.mxu0 0
      %533 = vmatprep.mubr.bf16.mxu0 0
      %534 = vmatmul.mubr.bf16.gmra.mrb[0].mxu0 %v495
      %v535 = vpop.f32.mrb[0].mxu0
      %v536 = vadd.f32 0.0, %v535
      %v537 = vpop.f32.mrb[0].mxu0
      %v538 = vpop.f32.mrb[0].mxu0
      %v539 = vadd.f32 0.0, %v538
      %v540 = vpop.f32.mrb[0].mxu0
      %541 = vdwg.mxu0
      %v543 = vsel %vm493, %v480, 0
      %v546 = vsel %vm497, %v481, 0
      %548 = vmatprep.subr.bf16.mxu0 0
      %549 = vmatpush1.bf16.msra.mxu0 %v546
      %550 = vmatprep.subr.bf16.mxu0 0
      %551 = vmatpush1.bf16.msra.mxu0 0
      %552 = vmatprep.subr.bf16.mxu0 0
      %553 = vmatpush1.bf16.msra.mxu0 0
      %554 = vmatprep.subr.bf16.mxu0 0
      %555 = vmatpush1.bf16.msra.mxu0 0
      %556 = vmatprep.subr.bf16.mxu0 0
      %557 = vmatpush1.bf16.msra.mxu0 0
      %558 = vmatprep.subr.bf16.mxu0 0
      %559 = vmatpush1.bf16.msra.mxu0 0
      %560 = vmatprep.subr.bf16.mxu0 0
      %561 = vmatpush1.bf16.msra.mxu0 0
      %562 = vmatprep.subr.bf16.mxu0 0
      %563 = vmatpush1.bf16.msra.mxu0 0
      %564 = vmatprep.subr.bf16.mxu0 0
      %565 = vmatpush1.bf16.msra.mxu0 0
      %566 = vmatprep.subr.bf16.mxu0 0
      %567 = vmatpush1.bf16.msra.mxu0 0
      %568 = vmatprep.subr.bf16.mxu0 0
      %569 = vmatpush1.bf16.msra.mxu0 0
      %570 = vmatprep.subr.bf16.mxu0 0
      %571 = vmatpush1.bf16.msra.mxu0 0
      %572 = vmatprep.subr.bf16.mxu0 0
      %573 = vmatpush1.bf16.msra.mxu0 0
      %574 = vmatprep.subr.bf16.mxu0 0
      %575 = vmatpush1.bf16.msra.mxu0 0
      %576 = vmatprep.subr.bf16.mxu0 0
      %577 = vmatpush1.bf16.msra.mxu0 0
      %578 = vmatprep.subr.bf16.mxu0 0
      %579 = vmatpush1.bf16.msra.mxu0 0
      %580 = vmatprep.mubr.bf16.mxu0 0
      %581 = vmatmul.mubr.bf16.gmra.mrb[0].mxu0 %v543
      %v582 = vpop.f32.mrb[0].mxu0
      %v583 = vadd.f32 %v536, %v582
      %v584 = vpop.f32.mrb[0].mxu0
      %v585 = vpop.f32.mrb[0].mxu0
      %v586 = vadd.f32 %v539, %v585
      %v587 = vpop.f32.mrb[0].mxu0
      %588 = vdwg.mxu0
      %v589 = vcombine.high %v402, %v402
      %v590 = vcombine.high %v403, %v403
      %v591 = vcombine.high %v404, %v404
      %v592 = vcombine.high %v405, %v405
      %vm593 = vcmask 1042432
      %vm594 = vcmask 1046532
      %vm595 = vmor %vm593, %vm594
      %v596 = vrot.slane %v402, 5
      %v597 = vrot.slane %v596, 4
      %v598 = vrot.slane %v589, 5
      %v599 = vsel %vm595, %v597, %v598
      %v600 = vrot.slane %v403, 5
      %v601 = vrot.slane %v600, 4
      %v602 = vrot.slane %v590, 5
      %v603 = vsel %vm595, %v601, %v602
      %v604 = vrot.slane %v404, 5
      %v605 = vrot.slane %v604, 4
      %v606 = vrot.slane %v591, 5
      %v607 = vsel %vm595, %v605, %v606
      %v608 = vrot.slane %v405, 5
      %v609 = vrot.slane %v608, 4
      %v610 = vrot.slane %v592, 5
      %v611 = vsel %vm595, %v609, %v610
      %v612 = vcombine.low %v599, %v603
      %v613 = vcombine.low %v607, %v611
      %v616 = vpack.c.bf16 %v613, %v612
      %s617 = scalar_lea.vmem %s4, 8
      %v618 = vld [vmem:[%s617] sm:$0xf]
      %v620 = vsel %vm493, %v616, 0
      %v623 = vsel %vm497, %v618, 0
      %625 = vmatprep.subr.bf16.mxu0 0
      %626 = vmatpush1.bf16.msra.mxu0 %v623
      %627 = vmatprep.subr.bf16.mxu0 0
      %628 = vmatpush1.bf16.msra.mxu0 0
      %629 = vmatprep.subr.bf16.mxu0 0
      %630 = vmatpush1.bf16.msra.mxu0 0
      %631 = vmatprep.subr.bf16.mxu0 0
      %632 = vmatpush1.bf16.msra.mxu0 0
      %633 = vmatprep.subr.bf16.mxu0 0
      %634 = vmatpush1.bf16.msra.mxu0 0
      %635 = vmatprep.subr.bf16.mxu0 0
      %636 = vmatpush1.bf16.msra.mxu0 0
      %637 = vmatprep.subr.bf16.mxu0 0
      %638 = vmatpush1.bf16.msra.mxu0 0
      %639 = vmatprep.subr.bf16.mxu0 0
      %640 = vmatpush1.bf16.msra.mxu0 0
      %641 = vmatprep.subr.bf16.mxu0 0
      %642 = vmatpush1.bf16.msra.mxu0 0
      %643 = vmatprep.subr.bf16.mxu0 0
      %644 = vmatpush1.bf16.msra.mxu0 0
      %645 = vmatprep.subr.bf16.mxu0 0
      %646 = vmatpush1.bf16.msra.mxu0 0
      %647 = vmatprep.subr.bf16.mxu0 0
      %648 = vmatpush1.bf16.msra.mxu0 0
      %649 = vmatprep.subr.bf16.mxu0 0
      %650 = vmatpush1.bf16.msra.mxu0 0
      %651 = vmatprep.subr.bf16.mxu0 0
      %652 = vmatpush1.bf16.msra.mxu0 0
      %653 = vmatprep.subr.bf16.mxu0 0
      %654 = vmatpush1.bf16.msra.mxu0 0
      %655 = vmatprep.subr.bf16.mxu0 0
      %656 = vmatpush1.bf16.msra.mxu0 0
      %657 = vmatprep.mubr.bf16.mxu0 0
      %658 = vmatmul.mubr.bf16.gmra.mrb[0].mxu0 %v620
      %v659 = vpop.f32.mrb[0].mxu0
      %v660 = vadd.f32 0.0, %v659
      %v661 = vpop.f32.mrb[0].mxu0
      %v662 = vpop.f32.mrb[0].mxu0
      %v663 = vadd.f32 0.0, %v662
      %v664 = vpop.f32.mrb[0].mxu0
      %665 = vdwg.mxu0
      %v666 = vadd.f32 %v583, %v660
      %v667 = vadd.f32 %v586, %v663
      %v668 = vcombine.high %v426, %v426
      %v669 = vcombine.high %v427, %v427
      %v670 = vcombine.high %v428, %v428
      %v671 = vcombine.high %v429, %v429
      %v672 = vrot.slane %v426, 5
      %v673 = vrot.slane %v672, 4
      %v674 = vrot.slane %v668, 5
      %v675 = vsel %vm595, %v673, %v674
      %v676 = vrot.slane %v427, 5
      %v677 = vrot.slane %v676, 4
      %v678 = vrot.slane %v669, 5
      %v679 = vsel %vm595, %v677, %v678
      %v680 = vrot.slane %v428, 5
      %v681 = vrot.slane %v680, 4
      %v682 = vrot.slane %v670, 5
      %v683 = vsel %vm595, %v681, %v682
      %v684 = vrot.slane %v429, 5
      %v685 = vrot.slane %v684, 4
      %v686 = vrot.slane %v671, 5
      %v687 = vsel %vm595, %v685, %v686
      %v688 = vcombine.low %v675, %v679
      %v689 = vcombine.low %v683, %v687
      %v692 = vpack.c.bf16 %v689, %v688
      %s693 = scalar_lea.vmem %s4, 12
      %v694 = vld [vmem:[%s693] sm:$0xf]
      %v696 = vsel %vm493, %v692, 0
      %v699 = vsel %vm497, %v694, 0
      %701 = vmatprep.subr.bf16.mxu0 0
      %702 = vmatpush1.bf16.msra.mxu0 %v699
      %703 = vmatprep.subr.bf16.mxu0 0
      %704 = vmatpush1.bf16.msra.mxu0 0
      %705 = vmatprep.subr.bf16.mxu0 0
      %706 = vmatpush1.bf16.msra.mxu0 0
      %707 = vmatprep.subr.bf16.mxu0 0
      %708 = vmatpush1.bf16.msra.mxu0 0
      %709 = vmatprep.subr.bf16.mxu0 0
      %710 = vmatpush1.bf16.msra.mxu0 0
      %711 = vmatprep.subr.bf16.mxu0 0
      %712 = vmatpush1.bf16.msra.mxu0 0
      %713 = vmatprep.subr.bf16.mxu0 0
      %714 = vmatpush1.bf16.msra.mxu0 0
      %715 = vmatprep.subr.bf16.mxu0 0
      %716 = vmatpush1.bf16.msra.mxu0 0
      %717 = vmatprep.subr.bf16.mxu0 0
      %718 = vmatpush1.bf16.msra.mxu0 0
      %719 = vmatprep.subr.bf16.mxu0 0
      %720 = vmatpush1.bf16.msra.mxu0 0
      %721 = vmatprep.subr.bf16.mxu0 0
      %722 = vmatpush1.bf16.msra.mxu0 0
      %723 = vmatprep.subr.bf16.mxu0 0
      %724 = vmatpush1.bf16.msra.mxu0 0
      %725 = vmatprep.subr.bf16.mxu0 0
      %726 = vmatpush1.bf16.msra.mxu0 0
      %727 = vmatprep.subr.bf16.mxu0 0
      %728 = vmatpush1.bf16.msra.mxu0 0
      %729 = vmatprep.subr.bf16.mxu0 0
      %730 = vmatpush1.bf16.msra.mxu0 0
      %731 = vmatprep.subr.bf16.mxu0 0
      %732 = vmatpush1.bf16.msra.mxu0 0
      %733 = vmatprep.mubr.bf16.mxu0 0
      %734 = vmatmul.mubr.bf16.gmra.mrb[0].mxu0 %v696
      %v735 = vpop.f32.mrb[0].mxu0
      %v736 = vadd.f32 0.0, %v735
      %v737 = vpop.f32.mrb[0].mxu0
      %v738 = vpop.f32.mrb[0].mxu0
      %v739 = vadd.f32 0.0, %v738
      %v740 = vpop.f32.mrb[0].mxu0
      %741 = vdwg.mxu0
      %v742 = vadd.f32 %v666, %v736
      %v743 = vadd.f32 %v667, %v739
      %vm744 = vcmask 1041408
      %vm745 = vcmask 1045508
      %vm746 = vmor %vm744, %vm745
      %v747 = vrot.slane %v402, 6
      %v748 = vrot.slane %v747, 4
      %v749 = vrot.slane %v589, 6
      %v750 = vsel %vm746, %v748, %v749
      %v751 = vrot.slane %v403, 6
      %v752 = vrot.slane %v751, 4
      %v753 = vrot.slane %v590, 6
      %v754 = vsel %vm746, %v752, %v753
      %v755 = vrot.slane %v404, 6
      %v756 = vrot.slane %v755, 4
      %v757 = vrot.slane %v591, 6
      %v758 = vsel %vm746, %v756, %v757
      %v759 = vrot.slane %v405, 6
      %v760 = vrot.slane %v759, 4
      %v761 = vrot.slane %v592, 6
      %v762 = vsel %vm746, %v760, %v761
      %v763 = vcombine.low %v750, %v754
      %v764 = vcombine.low %v758, %v762
      %v767 = vpack.c.bf16 %v764, %v763
      %s768 = scalar_lea.vmem %s4, 16
      %v769 = vld [vmem:[%s768] sm:$0xf]
      %v771 = vsel %vm493, %v767, 0
      %v774 = vsel %vm497, %v769, 0
      %776 = vmatprep.subr.bf16.mxu0 0
      %777 = vmatpush1.bf16.msra.mxu0 %v774
      %778 = vmatprep.subr.bf16.mxu0 0
      %779 = vmatpush1.bf16.msra.mxu0 0
      %780 = vmatprep.subr.bf16.mxu0 0
      %781 = vmatpush1.bf16.msra.mxu0 0
      %782 = vmatprep.subr.bf16.mxu0 0
      %783 = vmatpush1.bf16.msra.mxu0 0
      %784 = vmatprep.subr.bf16.mxu0 0
      %785 = vmatpush1.bf16.msra.mxu0 0
      %786 = vmatprep.subr.bf16.mxu0 0
      %787 = vmatpush1.bf16.msra.mxu0 0
      %788 = vmatprep.subr.bf16.mxu0 0
      %789 = vmatpush1.bf16.msra.mxu0 0
      %790 = vmatprep.subr.bf16.mxu0 0
      %791 = vmatpush1.bf16.msra.mxu0 0
      %792 = vmatprep.subr.bf16.mxu0 0
      %793 = vmatpush1.bf16.msra.mxu0 0
      %794 = vmatprep.subr.bf16.mxu0 0
      %795 = vmatpush1.bf16.msra.mxu0 0
      %796 = vmatprep.subr.bf16.mxu0 0
      %797 = vmatpush1.bf16.msra.mxu0 0
      %798 = vmatprep.subr.bf16.mxu0 0
      %799 = vmatpush1.bf16.msra.mxu0 0
      %800 = vmatprep.subr.bf16.mxu0 0
      %801 = vmatpush1.bf16.msra.mxu0 0
      %802 = vmatprep.subr.bf16.mxu0 0
      %803 = vmatpush1.bf16.msra.mxu0 0
      %804 = vmatprep.subr.bf16.mxu0 0
      %805 = vmatpush1.bf16.msra.mxu0 0
      %806 = vmatprep.subr.bf16.mxu0 0
      %807 = vmatpush1.bf16.msra.mxu0 0
      %808 = vmatprep.mubr.bf16.mxu0 0
      %809 = vmatmul.mubr.bf16.gmra.mrb[0].mxu0 %v771
      %v810 = vpop.f32.mrb[0].mxu0
      %v811 = vadd.f32 0.0, %v810
      %v812 = vpop.f32.mrb[0].mxu0
      %v813 = vpop.f32.mrb[0].mxu0
      %v814 = vadd.f32 0.0, %v813
      %v815 = vpop.f32.mrb[0].mxu0
      %816 = vdwg.mxu0
      %v817 = vadd.f32 %v742, %v811
      %v818 = vadd.f32 %v743, %v814
      %v823 = vcombine.low %v447, %v448
      %v824 = vcombine.low %v449, %v450
      %v827 = vpack.c.bf16 %v824, %v823
      %s828 = scalar_lea.vmem %s4, 20
      %v829 = vld [vmem:[%s828] sm:$0xf]
      %v831 = vsel %vm493, %v827, 0
      %v834 = vsel %vm497, %v829, 0
      %836 = vmatprep.subr.bf16.mxu0 0
      %837 = vmatpush1.bf16.msra.mxu0 %v834
      %838 = vmatprep.subr.bf16.mxu0 0
      %839 = vmatpush1.bf16.msra.mxu0 0
      %840 = vmatprep.subr.bf16.mxu0 0
      %841 = vmatpush1.bf16.msra.mxu0 0
      %842 = vmatprep.subr.bf16.mxu0 0
      %843 = vmatpush1.bf16.msra.mxu0 0
      %844 = vmatprep.subr.bf16.mxu0 0
      %845 = vmatpush1.bf16.msra.mxu0 0
      %846 = vmatprep.subr.bf16.mxu0 0
      %847 = vmatpush1.bf16.msra.mxu0 0
      %848 = vmatprep.subr.bf16.mxu0 0
      %849 = vmatpush1.bf16.msra.mxu0 0
      %850 = vmatprep.subr.bf16.mxu0 0
      %851 = vmatpush1.bf16.msra.mxu0 0
      %852 = vmatprep.subr.bf16.mxu0 0
      %853 = vmatpush1.bf16.msra.mxu0 0
      %854 = vmatprep.subr.bf16.mxu0 0
      %855 = vmatpush1.bf16.msra.mxu0 0
      %856 = vmatprep.subr.bf16.mxu0 0
      %857 = vmatpush1.bf16.msra.mxu0 0
      %858 = vmatprep.subr.bf16.mxu0 0
      %859 = vmatpush1.bf16.msra.mxu0 0
      %860 = vmatprep.subr.bf16.mxu0 0
      %861 = vmatpush1.bf16.msra.mxu0 0
      %862 = vmatprep.subr.bf16.mxu0 0
      %863 = vmatpush1.bf16.msra.mxu0 0
      %864 = vmatprep.subr.bf16.mxu0 0
      %865 = vmatpush1.bf16.msra.mxu0 0
      %866 = vmatprep.subr.bf16.mxu0 0
      %867 = vmatpush1.bf16.msra.mxu0 0
      %868 = vmatprep.mubr.bf16.mxu0 0
      %869 = vmatmul.mubr.bf16.gmra.mrb[0].mxu0 %v831
      %v870 = vpop.f32.mrb[0].mxu0
      %v871 = vadd.f32 0.0, %v870
      %v872 = vpop.f32.mrb[0].mxu0
      %v873 = vpop.f32.mrb[0].mxu0
      %v874 = vadd.f32 0.0, %v873
      %v875 = vpop.f32.mrb[0].mxu0
      %876 = vdwg.mxu0
      %v877 = vadd.f32 %v817, %v871
      %v878 = vadd.f32 %v818, %v874
      %v883 = vcombine.low %v467, %v468
      %v884 = vcombine.low %v469, %v470
      %v887 = vpack.c.bf16 %v884, %v883
      %s888 = scalar_lea.vmem %s4, 24
      %v889 = vld [vmem:[%s888] sm:$0xf]
      %v891 = vsel %vm493, %v887, 0
      %v894 = vsel %vm497, %v889, 0
      %896 = vmatprep.subr.bf16.mxu0 0
      %897 = vmatpush1.bf16.msra.mxu0 %v894
      %898 = vmatprep.subr.bf16.mxu0 0
      %899 = vmatpush1.bf16.msra.mxu0 0
      %900 = vmatprep.subr.bf16.mxu0 0
      %901 = vmatpush1.bf16.msra.mxu0 0
      %902 = vmatprep.subr.bf16.mxu0 0
      %903 = vmatpush1.bf16.msra.mxu0 0
      %904 = vmatprep.subr.bf16.mxu0 0
      %905 = vmatpush1.bf16.msra.mxu0 0
      %906 = vmatprep.subr.bf16.mxu0 0
      %907 = vmatpush1.bf16.msra.mxu0 0
      %908 = vmatprep.subr.bf16.mxu0 0
      %909 = vmatpush1.bf16.msra.mxu0 0
      %910 = vmatprep.subr.bf16.mxu0 0
      %911 = vmatpush1.bf16.msra.mxu0 0
      %912 = vmatprep.subr.bf16.mxu0 0
      %913 = vmatpush1.bf16.msra.mxu0 0
      %914 = vmatprep.subr.bf16.mxu0 0
      %915 = vmatpush1.bf16.msra.mxu0 0
      %916 = vmatprep.subr.bf16.mxu0 0
      %917 = vmatpush1.bf16.msra.mxu0 0
      %918 = vmatprep.subr.bf16.mxu0 0
      %919 = vmatpush1.bf16.msra.mxu0 0
      %920 = vmatprep.subr.bf16.mxu0 0
      %921 = vmatpush1.bf16.msra.mxu0 0
      %922 = vmatprep.subr.bf16.mxu0 0
      %923 = vmatpush1.bf16.msra.mxu0 0
      %924 = vmatprep.subr.bf16.mxu0 0
      %925 = vmatpush1.bf16.msra.mxu0 0
      %926 = vmatprep.subr.bf16.mxu0 0
      %927 = vmatpush1.bf16.msra.mxu0 0
      %928 = vmatprep.mubr.bf16.mxu0 0
      %929 = vmatmul.mubr.bf16.gmra.mrb[0].mxu0 %v891
      %v930 = vpop.f32.mrb[0].mxu0
      %v931 = vadd.f32 0.0, %v930
      %v932 = vpop.f32.mrb[0].mxu0
      %v933 = vpop.f32.mrb[0].mxu0
      %v934 = vadd.f32 0.0, %v933
      %v935 = vpop.f32.mrb[0].mxu0
      %936 = vdwg.mxu0
      %v937 = vadd.f32 %v877, %v931
      %v938 = vadd.f32 %v878, %v934
      %v939 = vcombine.high %v447, %v447
      %v940 = vcombine.high %v448, %v448
      %v941 = vcombine.high %v449, %v449
      %v942 = vcombine.high %v450, %v450
      %v943 = vrot.slane %v447, 5
      %v944 = vrot.slane %v943, 4
      %v945 = vrot.slane %v939, 5
      %v946 = vsel %vm595, %v944, %v945
      %v947 = vrot.slane %v448, 5
      %v948 = vrot.slane %v947, 4
      %v949 = vrot.slane %v940, 5
      %v950 = vsel %vm595, %v948, %v949
      %v951 = vrot.slane %v449, 5
      %v952 = vrot.slane %v951, 4
      %v953 = vrot.slane %v941, 5
      %v954 = vsel %vm595, %v952, %v953
      %v955 = vrot.slane %v450, 5
      %v956 = vrot.slane %v955, 4
      %v957 = vrot.slane %v942, 5
      %v958 = vsel %vm595, %v956, %v957
      %v959 = vcombine.low %v946, %v950
      %v960 = vcombine.low %v954, %v958
      %v963 = vpack.c.bf16 %v960, %v959
      %s964 = scalar_lea.vmem %s4, 28
      %v965 = vld [vmem:[%s964] sm:$0xf]
      %v967 = vsel %vm493, %v963, 0
      %v970 = vsel %vm497, %v965, 0
      %972 = vmatprep.subr.bf16.mxu0 0
      %973 = vmatpush1.bf16.msra.mxu0 %v970
      %974 = vmatprep.subr.bf16.mxu0 0
      %975 = vmatpush1.bf16.msra.mxu0 0
      %976 = vmatprep.subr.bf16.mxu0 0
      %977 = vmatpush1.bf16.msra.mxu0 0
      %978 = vmatprep.subr.bf16.mxu0 0
      %979 = vmatpush1.bf16.msra.mxu0 0
      %980 = vmatprep.subr.bf16.mxu0 0
      %981 = vmatpush1.bf16.msra.mxu0 0
      %982 = vmatprep.subr.bf16.mxu0 0
      %983 = vmatpush1.bf16.msra.mxu0 0
      %984 = vmatprep.subr.bf16.mxu0 0
      %985 = vmatpush1.bf16.msra.mxu0 0
      %986 = vmatprep.subr.bf16.mxu0 0
      %987 = vmatpush1.bf16.msra.mxu0 0
      %988 = vmatprep.subr.bf16.mxu0 0
      %989 = vmatpush1.bf16.msra.mxu0 0
      %990 = vmatprep.subr.bf16.mxu0 0
      %991 = vmatpush1.bf16.msra.mxu0 0
      %992 = vmatprep.subr.bf16.mxu0 0
      %993 = vmatpush1.bf16.msra.mxu0 0
      %994 = vmatprep.subr.bf16.mxu0 0
      %995 = vmatpush1.bf16.msra.mxu0 0
      %996 = vmatprep.subr.bf16.mxu0 0
      %997 = vmatpush1.bf16.msra.mxu0 0
      %998 = vmatprep.subr.bf16.mxu0 0
      %999 = vmatpush1.bf16.msra.mxu0 0
      %1000 = vmatprep.subr.bf16.mxu0 0
      %1001 = vmatpush1.bf16.msra.mxu0 0
      %1002 = vmatprep.subr.bf16.mxu0 0
      %1003 = vmatpush1.bf16.msra.mxu0 0
      %1004 = vmatprep.mubr.bf16.mxu0 0
      %1005 = vmatmul.mubr.bf16.gmra.mrb[0].mxu0 %v967
      %v1006 = vpop.f32.mrb[0].mxu0
      %v1007 = vadd.f32 0.0, %v1006
      %v1008 = vpop.f32.mrb[0].mxu0
      %v1009 = vpop.f32.mrb[0].mxu0
      %v1010 = vadd.f32 0.0, %v1009
      %v1011 = vpop.f32.mrb[0].mxu0
      %1012 = vdwg.mxu0
      %v1013 = vadd.f32 %v937, %v1007
      %v1014 = vadd.f32 %v938, %v1010
      %v1015 = vcombine.high %v467, %v467
      %v1016 = vcombine.high %v468, %v468
      %v1017 = vcombine.high %v469, %v469
      %v1018 = vcombine.high %v470, %v470
      %v1019 = vrot.slane %v467, 5
      %v1020 = vrot.slane %v1019, 4
      %v1021 = vrot.slane %v1015, 5
      %v1022 = vsel %vm595, %v1020, %v1021
      %v1023 = vrot.slane %v468, 5
      %v1024 = vrot.slane %v1023, 4
      %v1025 = vrot.slane %v1016, 5
      %v1026 = vsel %vm595, %v1024, %v1025
      %v1027 = vrot.slane %v469, 5
      %v1028 = vrot.slane %v1027, 4
      %v1029 = vrot.slane %v1017, 5
      %v1030 = vsel %vm595, %v1028, %v1029
      %v1031 = vrot.slane %v470, 5
      %v1032 = vrot.slane %v1031, 4
      %v1033 = vrot.slane %v1018, 5
      %v1034 = vsel %vm595, %v1032, %v1033
      %v1035 = vcombine.low %v1022, %v1026
      %v1036 = vcombine.low %v1030, %v1034
      %v1039 = vpack.c.bf16 %v1036, %v1035
      %s1040 = scalar_lea.vmem %s4, 32
      %v1041 = vld [vmem:[%s1040] sm:$0xf]
      %v1043 = vsel %vm493, %v1039, 0
      %v1046 = vsel %vm497, %v1041, 0
      %1048 = vmatprep.subr.bf16.mxu0 0
      %1049 = vmatpush1.bf16.msra.mxu0 %v1046
      %1050 = vmatprep.subr.bf16.mxu0 0
      %1051 = vmatpush1.bf16.msra.mxu0 0
      %1052 = vmatprep.subr.bf16.mxu0 0
      %1053 = vmatpush1.bf16.msra.mxu0 0
      %1054 = vmatprep.subr.bf16.mxu0 0
      %1055 = vmatpush1.bf16.msra.mxu0 0
      %1056 = vmatprep.subr.bf16.mxu0 0
      %1057 = vmatpush1.bf16.msra.mxu0 0
      %1058 = vmatprep.subr.bf16.mxu0 0
      %1059 = vmatpush1.bf16.msra.mxu0 0
      %1060 = vmatprep.subr.bf16.mxu0 0
      %1061 = vmatpush1.bf16.msra.mxu0 0
      %1062 = vmatprep.subr.bf16.mxu0 0
      %1063 = vmatpush1.bf16.msra.mxu0 0
      %1064 = vmatprep.subr.bf16.mxu0 0
      %1065 = vmatpush1.bf16.msra.mxu0 0
      %1066 = vmatprep.subr.bf16.mxu0 0
      %1067 = vmatpush1.bf16.msra.mxu0 0
      %1068 = vmatprep.subr.bf16.mxu0 0
      %1069 = vmatpush1.bf16.msra.mxu0 0
      %1070 = vmatprep.subr.bf16.mxu0 0
      %1071 = vmatpush1.bf16.msra.mxu0 0
      %1072 = vmatprep.subr.bf16.mxu0 0
      %1073 = vmatpush1.bf16.msra.mxu0 0
      %1074 = vmatprep.subr.bf16.mxu0 0
      %1075 = vmatpush1.bf16.msra.mxu0 0
      %1076 = vmatprep.subr.bf16.mxu0 0
      %1077 = vmatpush1.bf16.msra.mxu0 0
      %1078 = vmatprep.subr.bf16.mxu0 0
      %1079 = vmatpush1.bf16.msra.mxu0 0
      %1080 = vmatprep.mubr.bf16.mxu0 0
      %1081 = vmatmul.mubr.bf16.gmra.mrb[0].mxu0 %v1043
      %v1082 = vpop.f32.mrb[0].mxu0
      %v1083 = vadd.f32 0.0, %v1082
      %v1084 = vpop.f32.mrb[0].mxu0
      %v1085 = vpop.f32.mrb[0].mxu0
      %v1086 = vadd.f32 0.0, %v1085
      %v1087 = vpop.f32.mrb[0].mxu0
      %1088 = vdwg.mxu0
      %v1089 = vadd.f32 %v1013, %v1083
      %v1090 = vadd.f32 %v1014, %v1086
      %v1091 = vrot.slane %v447, 6
      %v1092 = vrot.slane %v1091, 4
      %v1093 = vrot.slane %v939, 6
      %v1094 = vsel %vm746, %v1092, %v1093
      %v1095 = vrot.slane %v448, 6
      %v1096 = vrot.slane %v1095, 4
      %v1097 = vrot.slane %v940, 6
      %v1098 = vsel %vm746, %v1096, %v1097
      %v1099 = vrot.slane %v449, 6
      %v1100 = vrot.slane %v1099, 4
      %v1101 = vrot.slane %v941, 6
      %v1102 = vsel %vm746, %v1100, %v1101
      %v1103 = vrot.slane %v450, 6
      %v1104 = vrot.slane %v1103, 4
      %v1105 = vrot.slane %v942, 6
      %v1106 = vsel %vm746, %v1104, %v1105
      %v1107 = vcombine.low %v1094, %v1098
      %v1108 = vcombine.low %v1102, %v1106
      %v1111 = vpack.c.bf16 %v1108, %v1107
      %s1112 = scalar_lea.vmem %s4, 36
      %v1113 = vld [vmem:[%s1112] sm:$0xf]
      %v1115 = vsel %vm493, %v1111, 0
      %v1118 = vsel %vm497, %v1113, 0
      %1120 = vmatprep.subr.bf16.mxu0 0
      %1121 = vmatpush1.bf16.msra.mxu0 %v1118
      %1122 = vmatprep.subr.bf16.mxu0 0
      %1123 = vmatpush1.bf16.msra.mxu0 0
      %1124 = vmatprep.subr.bf16.mxu0 0
      %1125 = vmatpush1.bf16.msra.mxu0 0
      %1126 = vmatprep.subr.bf16.mxu0 0
      %1127 = vmatpush1.bf16.msra.mxu0 0
      %1128 = vmatprep.subr.bf16.mxu0 0
      %1129 = vmatpush1.bf16.msra.mxu0 0
      %1130 = vmatprep.subr.bf16.mxu0 0
      %1131 = vmatpush1.bf16.msra.mxu0 0
      %1132 = vmatprep.subr.bf16.mxu0 0
      %1133 = vmatpush1.bf16.msra.mxu0 0
      %1134 = vmatprep.subr.bf16.mxu0 0
      %1135 = vmatpush1.bf16.msra.mxu0 0
      %1136 = vmatprep.subr.bf16.mxu0 0
      %1137 = vmatpush1.bf16.msra.mxu0 0
      %1138 = vmatprep.subr.bf16.mxu0 0
      %1139 = vmatpush1.bf16.msra.mxu0 0
      %1140 = vmatprep.subr.bf16.mxu0 0
      %1141 = vmatpush1.bf16.msra.mxu0 0
      %1142 = vmatprep.subr.bf16.mxu0 0
      %1143 = vmatpush1.bf16.msra.mxu0 0
      %1144 = vmatprep.subr.bf16.mxu0 0
      %1145 = vmatpush1.bf16.msra.mxu0 0
      %1146 = vmatprep.subr.bf16.mxu0 0
      %1147 = vmatpush1.bf16.msra.mxu0 0
      %1148 = vmatprep.subr.bf16.mxu0 0
      %1149 = vmatpush1.bf16.msra.mxu0 0
      %1150 = vmatprep.subr.bf16.mxu0 0
      %1151 = vmatpush1.bf16.msra.mxu0 0
      %1152 = vmatprep.mubr.bf16.mxu0 0
      %1153 = vmatmul.mubr.bf16.gmra.mrb[0].mxu0 %v1115
      %v1154 = vpop.f32.mrb[0].mxu0
      %v1155 = vadd.f32 0.0, %v1154
      %v1156 = vpop.f32.mrb[0].mxu0
      %v1157 = vpop.f32.mrb[0].mxu0
      %v1158 = vadd.f32 0.0, %v1157
      %v1159 = vpop.f32.mrb[0].mxu0
      %1160 = vdwg.mxu0
      %v1161 = vadd.f32 %v1089, %v1155
      %v1162 = vadd.f32 %v1090, %v1158
      %v1164 = vcombine.low %v403, %v404
      %v1165 = vcombine.low %v405, %v406
      %v1168 = vpack.c.bf16 %v1165, %v1164
      %s1169 = scalar_lea.vmem %s4, 40
      %v1170 = vld [vmem:[%s1169] sm:$0xf]
      %v1172 = vsel %vm493, %v1168, 0
      %v1175 = vsel %vm497, %v1170, 0
      %1177 = vmatprep.subr.bf16.mxu0 0
      %1178 = vmatpush1.bf16.msra.mxu0 %v1175
      %1179 = vmatprep.subr.bf16.mxu0 0
      %1180 = vmatpush1.bf16.msra.mxu0 0
      %1181 = vmatprep.subr.bf16.mxu0 0
      %1182 = vmatpush1.bf16.msra.mxu0 0
      %1183 = vmatprep.subr.bf16.mxu0 0
      %1184 = vmatpush1.bf16.msra.mxu0 0
      %1185 = vmatprep.subr.bf16.mxu0 0
      %1186 = vmatpush1.bf16.msra.mxu0 0
      %1187 = vmatprep.subr.bf16.mxu0 0
      %1188 = vmatpush1.bf16.msra.mxu0 0
      %1189 = vmatprep.subr.bf16.mxu0 0
      %1190 = vmatpush1.bf16.msra.mxu0 0
      %1191 = vmatprep.subr.bf16.mxu0 0
      %1192 = vmatpush1.bf16.msra.mxu0 0
      %1193 = vmatprep.subr.bf16.mxu0 0
      %1194 = vmatpush1.bf16.msra.mxu0 0
      %1195 = vmatprep.subr.bf16.mxu0 0
      %1196 = vmatpush1.bf16.msra.mxu0 0
      %1197 = vmatprep.subr.bf16.mxu0 0
      %1198 = vmatpush1.bf16.msra.mxu0 0
      %1199 = vmatprep.subr.bf16.mxu0 0
      %1200 = vmatpush1.bf16.msra.mxu0 0
      %1201 = vmatprep.subr.bf16.mxu0 0
      %1202 = vmatpush1.bf16.msra.mxu0 0
      %1203 = vmatprep.subr.bf16.mxu0 0
      %1204 = vmatpush1.bf16.msra.mxu0 0
      %1205 = vmatprep.subr.bf16.mxu0 0
      %1206 = vmatpush1.bf16.msra.mxu0 0
      %1207 = vmatprep.subr.bf16.mxu0 0
      %1208 = vmatpush1.bf16.msra.mxu0 0
      %1209 = vmatprep.mubr.bf16.mxu0 0
      %1210 = vmatmul.mubr.bf16.gmra.mrb[0].mxu0 %v1172
      %v1211 = vpop.f32.mrb[0].mxu0
      %v1212 = vadd.f32 0.0, %v1211
      %v1213 = vpop.f32.mrb[0].mxu0
      %v1214 = vpop.f32.mrb[0].mxu0
      %v1215 = vadd.f32 0.0, %v1214
      %v1216 = vpop.f32.mrb[0].mxu0
      %1217 = vdwg.mxu0
      %v1218 = vadd.f32 %v1161, %v1212
      %v1219 = vadd.f32 %v1162, %v1215
      %v1221 = vcombine.low %v427, %v428
      %v1222 = vcombine.low %v429, %v430
      %v1225 = vpack.c.bf16 %v1222, %v1221
      %s1226 = scalar_lea.vmem %s4, 44
      %v1227 = vld [vmem:[%s1226] sm:$0xf]
      %v1229 = vsel %vm493, %v1225, 0
      %v1232 = vsel %vm497, %v1227, 0
      %1234 = vmatprep.subr.bf16.mxu0 0
      %1235 = vmatpush1.bf16.msra.mxu0 %v1232
      %1236 = vmatprep.subr.bf16.mxu0 0
      %1237 = vmatpush1.bf16.msra.mxu0 0
      %1238 = vmatprep.subr.bf16.mxu0 0
      %1239 = vmatpush1.bf16.msra.mxu0 0
      %1240 = vmatprep.subr.bf16.mxu0 0
      %1241 = vmatpush1.bf16.msra.mxu0 0
      %1242 = vmatprep.subr.bf16.mxu0 0
      %1243 = vmatpush1.bf16.msra.mxu0 0
      %1244 = vmatprep.subr.bf16.mxu0 0
      %1245 = vmatpush1.bf16.msra.mxu0 0
      %1246 = vmatprep.subr.bf16.mxu0 0
      %1247 = vmatpush1.bf16.msra.mxu0 0
      %1248 = vmatprep.subr.bf16.mxu0 0
      %1249 = vmatpush1.bf16.msra.mxu0 0
      %1250 = vmatprep.subr.bf16.mxu0 0
      %1251 = vmatpush1.bf16.msra.mxu0 0
      %1252 = vmatprep.subr.bf16.mxu0 0
      %1253 = vmatpush1.bf16.msra.mxu0 0
      %1254 = vmatprep.subr.bf16.mxu0 0
      %1255 = vmatpush1.bf16.msra.mxu0 0
      %1256 = vmatprep.subr.bf16.mxu0 0
      %1257 = vmatpush1.bf16.msra.mxu0 0
      %1258 = vmatprep.subr.bf16.mxu0 0
      %1259 = vmatpush1.bf16.msra.mxu0 0
      %1260 = vmatprep.subr.bf16.mxu0 0
      %1261 = vmatpush1.bf16.msra.mxu0 0
      %1262 = vmatprep.subr.bf16.mxu0 0
      %1263 = vmatpush1.bf16.msra.mxu0 0
      %1264 = vmatprep.subr.bf16.mxu0 0
      %1265 = vmatpush1.bf16.msra.mxu0 0
      %1266 = vmatprep.mubr.bf16.mxu0 0
      %1267 = vmatmul.mubr.bf16.gmra.mrb[0].mxu0 %v1229
      %v1268 = vpop.f32.mrb[0].mxu0
      %v1269 = vadd.f32 0.0, %v1268
      %v1270 = vpop.f32.mrb[0].mxu0
      %v1271 = vpop.f32.mrb[0].mxu0
      %v1272 = vadd.f32 0.0, %v1271
      %v1273 = vpop.f32.mrb[0].mxu0
      %1274 = vdwg.mxu0
      %v1275 = vadd.f32 %v1218, %v1269
      %v1276 = vadd.f32 %v1219, %v1272
      %v1277 = vcombine.high %v406, %v406
      %v1278 = vrot.slane %v406, 5
      %v1279 = vrot.slane %v1278, 4
      %v1280 = vrot.slane %v1277, 5
      %v1281 = vsel %vm595, %v1279, %v1280
      %v1282 = vcombine.low %v603, %v607
      %v1283 = vcombine.low %v611, %v1281
      %v1286 = vpack.c.bf16 %v1283, %v1282
      %s1287 = scalar_lea.vmem %s4, 48
      %v1288 = vld [vmem:[%s1287] sm:$0xf]
      %v1290 = vsel %vm493, %v1286, 0
      %v1293 = vsel %vm497, %v1288, 0
      %1295 = vmatprep.subr.bf16.mxu0 0
      %1296 = vmatpush1.bf16.msra.mxu0 %v1293
      %1297 = vmatprep.subr.bf16.mxu0 0
      %1298 = vmatpush1.bf16.msra.mxu0 0
      %1299 = vmatprep.subr.bf16.mxu0 0
      %1300 = vmatpush1.bf16.msra.mxu0 0
      %1301 = vmatprep.subr.bf16.mxu0 0
      %1302 = vmatpush1.bf16.msra.mxu0 0
      %1303 = vmatprep.subr.bf16.mxu0 0
      %1304 = vmatpush1.bf16.msra.mxu0 0
      %1305 = vmatprep.subr.bf16.mxu0 0
      %1306 = vmatpush1.bf16.msra.mxu0 0
      %1307 = vmatprep.subr.bf16.mxu0 0
      %1308 = vmatpush1.bf16.msra.mxu0 0
      %1309 = vmatprep.subr.bf16.mxu0 0
      %1310 = vmatpush1.bf16.msra.mxu0 0
      %1311 = vmatprep.subr.bf16.mxu0 0
      %1312 = vmatpush1.bf16.msra.mxu0 0
      %1313 = vmatprep.subr.bf16.mxu0 0
      %1314 = vmatpush1.bf16.msra.mxu0 0
      %1315 = vmatprep.subr.bf16.mxu0 0
      %1316 = vmatpush1.bf16.msra.mxu0 0
      %1317 = vmatprep.subr.bf16.mxu0 0
      %1318 = vmatpush1.bf16.msra.mxu0 0
      %1319 = vmatprep.subr.bf16.mxu0 0
      %1320 = vmatpush1.bf16.msra.mxu0 0
      %1321 = vmatprep.subr.bf16.mxu0 0
      %1322 = vmatpush1.bf16.msra.mxu0 0
      %1323 = vmatprep.subr.bf16.mxu0 0
      %1324 = vmatpush1.bf16.msra.mxu0 0
      %1325 = vmatprep.subr.bf16.mxu0 0
      %1326 = vmatpush1.bf16.msra.mxu0 0
      %1327 = vmatprep.mubr.bf16.mxu0 0
      %1328 = vmatmul.mubr.bf16.gmra.mrb[0].mxu0 %v1290
      %v1329 = vpop.f32.mrb[0].mxu0
      %v1330 = vadd.f32 0.0, %v1329
      %v1331 = vpop.f32.mrb[0].mxu0
      %v1332 = vpop.f32.mrb[0].mxu0
      %v1333 = vadd.f32 0.0, %v1332
      %v1334 = vpop.f32.mrb[0].mxu0
      %1335 = vdwg.mxu0
      %v1336 = vadd.f32 %v1275, %v1330
      %v1337 = vadd.f32 %v1276, %v1333
      %v1338 = vcombine.high %v430, %v430
      %v1339 = vrot.slane %v430, 5
      %v1340 = vrot.slane %v1339, 4
      %v1341 = vrot.slane %v1338, 5
      %v1342 = vsel %vm595, %v1340, %v1341
      %v1343 = vcombine.low %v679, %v683
      %v1344 = vcombine.low %v687, %v1342
      %v1347 = vpack.c.bf16 %v1344, %v1343
      %s1348 = scalar_lea.vmem %s4, 52
      %v1349 = vld [vmem:[%s1348] sm:$0xf]
      %v1351 = vsel %vm493, %v1347, 0
      %v1354 = vsel %vm497, %v1349, 0
      %1356 = vmatprep.subr.bf16.mxu0 0
      %1357 = vmatpush1.bf16.msra.mxu0 %v1354
      %1358 = vmatprep.subr.bf16.mxu0 0
      %1359 = vmatpush1.bf16.msra.mxu0 0
      %1360 = vmatprep.subr.bf16.mxu0 0
      %1361 = vmatpush1.bf16.msra.mxu0 0
      %1362 = vmatprep.subr.bf16.mxu0 0
      %1363 = vmatpush1.bf16.msra.mxu0 0
      %1364 = vmatprep.subr.bf16.mxu0 0
      %1365 = vmatpush1.bf16.msra.mxu0 0
      %1366 = vmatprep.subr.bf16.mxu0 0
      %1367 = vmatpush1.bf16.msra.mxu0 0
      %1368 = vmatprep.subr.bf16.mxu0 0
      %1369 = vmatpush1.bf16.msra.mxu0 0
      %1370 = vmatprep.subr.bf16.mxu0 0
      %1371 = vmatpush1.bf16.msra.mxu0 0
      %1372 = vmatprep.subr.bf16.mxu0 0
      %1373 = vmatpush1.bf16.msra.mxu0 0
      %1374 = vmatprep.subr.bf16.mxu0 0
      %1375 = vmatpush1.bf16.msra.mxu0 0
      %1376 = vmatprep.subr.bf16.mxu0 0
      %1377 = vmatpush1.bf16.msra.mxu0 0
      %1378 = vmatprep.subr.bf16.mxu0 0
      %1379 = vmatpush1.bf16.msra.mxu0 0
      %1380 = vmatprep.subr.bf16.mxu0 0
      %1381 = vmatpush1.bf16.msra.mxu0 0
      %1382 = vmatprep.subr.bf16.mxu0 0
      %1383 = vmatpush1.bf16.msra.mxu0 0
      %1384 = vmatprep.subr.bf16.mxu0 0
      %1385 = vmatpush1.bf16.msra.mxu0 0
      %1386 = vmatprep.subr.bf16.mxu0 0
      %1387 = vmatpush1.bf16.msra.mxu0 0
      %1388 = vmatprep.mubr.bf16.mxu0 0
      %1389 = vmatmul.mubr.bf16.gmra.mrb[0].mxu0 %v1351
      %v1390 = vpop.f32.mrb[0].mxu0
      %v1391 = vadd.f32 0.0, %v1390
      %v1392 = vpop.f32.mrb[0].mxu0
      %v1393 = vpop.f32.mrb[0].mxu0
      %v1394 = vadd.f32 0.0, %v1393
      %v1395 = vpop.f32.mrb[0].mxu0
      %1396 = vdwg.mxu0
      %v1397 = vadd.f32 %v1336, %v1391
      %v1398 = vadd.f32 %v1337, %v1394
      %v1399 = vrot.slane %v406, 6
      %v1400 = vrot.slane %v1399, 4
      %v1401 = vrot.slane %v1277, 6
      %v1402 = vsel %vm746, %v1400, %v1401
      %v1403 = vcombine.low %v754, %v758
      %v1404 = vcombine.low %v762, %v1402
      %v1407 = vpack.c.bf16 %v1404, %v1403
      %s1408 = scalar_lea.vmem %s4, 56
      %v1409 = vld [vmem:[%s1408] sm:$0xf]
      %v1411 = vsel %vm493, %v1407, 0
      %v1414 = vsel %vm497, %v1409, 0
      %1416 = vmatprep.subr.bf16.mxu0 0
      %1417 = vmatpush1.bf16.msra.mxu0 %v1414
      %1418 = vmatprep.subr.bf16.mxu0 0
      %1419 = vmatpush1.bf16.msra.mxu0 0
      %1420 = vmatprep.subr.bf16.mxu0 0
      %1421 = vmatpush1.bf16.msra.mxu0 0
      %1422 = vmatprep.subr.bf16.mxu0 0
      %1423 = vmatpush1.bf16.msra.mxu0 0
      %1424 = vmatprep.subr.bf16.mxu0 0
      %1425 = vmatpush1.bf16.msra.mxu0 0
      %1426 = vmatprep.subr.bf16.mxu0 0
      %1427 = vmatpush1.bf16.msra.mxu0 0
      %1428 = vmatprep.subr.bf16.mxu0 0
      %1429 = vmatpush1.bf16.msra.mxu0 0
      %1430 = vmatprep.subr.bf16.mxu0 0
      %1431 = vmatpush1.bf16.msra.mxu0 0
      %1432 = vmatprep.subr.bf16.mxu0 0
      %1433 = vmatpush1.bf16.msra.mxu0 0
      %1434 = vmatprep.subr.bf16.mxu0 0
      %1435 = vmatpush1.bf16.msra.mxu0 0
      %1436 = vmatprep.subr.bf16.mxu0 0
      %1437 = vmatpush1.bf16.msra.mxu0 0
      %1438 = vmatprep.subr.bf16.mxu0 0
      %1439 = vmatpush1.bf16.msra.mxu0 0
      %1440 = vmatprep.subr.bf16.mxu0 0
      %1441 = vmatpush1.bf16.msra.mxu0 0
      %1442 = vmatprep.subr.bf16.mxu0 0
      %1443 = vmatpush1.bf16.msra.mxu0 0
      %1444 = vmatprep.subr.bf16.mxu0 0
      %1445 = vmatpush1.bf16.msra.mxu0 0
      %1446 = vmatprep.subr.bf16.mxu0 0
      %1447 = vmatpush1.bf16.msra.mxu0 0
      %1448 = vmatprep.mubr.bf16.mxu0 0
      %1449 = vmatmul.mubr.bf16.gmra.mrb[0].mxu0 %v1411
      %v1450 = vpop.f32.mrb[0].mxu0
      %v1451 = vadd.f32 0.0, %v1450
      %v1452 = vpop.f32.mrb[0].mxu0
      %v1453 = vpop.f32.mrb[0].mxu0
      %v1454 = vadd.f32 0.0, %v1453
      %v1455 = vpop.f32.mrb[0].mxu0
      %1456 = vdwg.mxu0
      %v1457 = vadd.f32 %v1397, %v1451
      %v1458 = vadd.f32 %v1398, %v1454
      %v1460 = vcombine.low %v448, %v449
      %v1461 = vcombine.low %v450, %v451
      %v1464 = vpack.c.bf16 %v1461, %v1460
      %s1465 = scalar_lea.vmem %s4, 60
      %v1466 = vld [vmem:[%s1465] sm:$0xf]
      %v1468 = vsel %vm493, %v1464, 0
      %v1471 = vsel %vm497, %v1466, 0
      %1473 = vmatprep.subr.bf16.mxu0 0
      %1474 = vmatpush1.bf16.msra.mxu0 %v1471
      %1475 = vmatprep.subr.bf16.mxu0 0
      %1476 = vmatpush1.bf16.msra.mxu0 0
      %1477 = vmatprep.subr.bf16.mxu0 0
      %1478 = vmatpush1.bf16.msra.mxu0 0
      %1479 = vmatprep.subr.bf16.mxu0 0
      %1480 = vmatpush1.bf16.msra.mxu0 0
      %1481 = vmatprep.subr.bf16.mxu0 0
      %1482 = vmatpush1.bf16.msra.mxu0 0
      %1483 = vmatprep.subr.bf16.mxu0 0
      %1484 = vmatpush1.bf16.msra.mxu0 0
      %1485 = vmatprep.subr.bf16.mxu0 0
      %1486 = vmatpush1.bf16.msra.mxu0 0
      %1487 = vmatprep.subr.bf16.mxu0 0
      %1488 = vmatpush1.bf16.msra.mxu0 0
      %1489 = vmatprep.subr.bf16.mxu0 0
      %1490 = vmatpush1.bf16.msra.mxu0 0
      %1491 = vmatprep.subr.bf16.mxu0 0
      %1492 = vmatpush1.bf16.msra.mxu0 0
      %1493 = vmatprep.subr.bf16.mxu0 0
      %1494 = vmatpush1.bf16.msra.mxu0 0
      %1495 = vmatprep.subr.bf16.mxu0 0
      %1496 = vmatpush1.bf16.msra.mxu0 0
      %1497 = vmatprep.subr.bf16.mxu0 0
      %1498 = vmatpush1.bf16.msra.mxu0 0
      %1499 = vmatprep.subr.bf16.mxu0 0
      %1500 = vmatpush1.bf16.msra.mxu0 0
      %1501 = vmatprep.subr.bf16.mxu0 0
      %1502 = vmatpush1.bf16.msra.mxu0 0
      %1503 = vmatprep.subr.bf16.mxu0 0
      %1504 = vmatpush1.bf16.msra.mxu0 0
      %1505 = vmatprep.mubr.bf16.mxu0 0
      %1506 = vmatmul.mubr.bf16.gmra.mrb[0].mxu0 %v1468
      %v1507 = vpop.f32.mrb[0].mxu0
      %v1508 = vadd.f32 0.0, %v1507
      %v1509 = vpop.f32.mrb[0].mxu0
      %v1510 = vpop.f32.mrb[0].mxu0
      %v1511 = vadd.f32 0.0, %v1510
      %v1512 = vpop.f32.mrb[0].mxu0
      %1513 = vdwg.mxu0
      %v1514 = vadd.f32 %v1457, %v1508
      %v1515 = vadd.f32 %v1458, %v1511
      %v1517 = vcombine.low %v468, %v469
      %v1518 = vcombine.low %v470, %v471
      %v1521 = vpack.c.bf16 %v1518, %v1517
      %s1522 = scalar_lea.vmem %s4, 64
      %v1523 = vld [vmem:[%s1522] sm:$0xf]
      %v1525 = vsel %vm493, %v1521, 0
      %v1528 = vsel %vm497, %v1523, 0
      %1530 = vmatprep.subr.bf16.mxu0 0
      %1531 = vmatpush1.bf16.msra.mxu0 %v1528
      %1532 = vmatprep.subr.bf16.mxu0 0
      %1533 = vmatpush1.bf16.msra.mxu0 0
      %1534 = vmatprep.subr.bf16.mxu0 0
      %1535 = vmatpush1.bf16.msra.mxu0 0
      %1536 = vmatprep.subr.bf16.mxu0 0
      %1537 = vmatpush1.bf16.msra.mxu0 0
      %1538 = vmatprep.subr.bf16.mxu0 0
      %1539 = vmatpush1.bf16.msra.mxu0 0
      %1540 = vmatprep.subr.bf16.mxu0 0
      %1541 = vmatpush1.bf16.msra.mxu0 0
      %1542 = vmatprep.subr.bf16.mxu0 0
      %1543 = vmatpush1.bf16.msra.mxu0 0
      %1544 = vmatprep.subr.bf16.mxu0 0
      %1545 = vmatpush1.bf16.msra.mxu0 0
      %1546 = vmatprep.subr.bf16.mxu0 0
      %1547 = vmatpush1.bf16.msra.mxu0 0
      %1548 = vmatprep.subr.bf16.mxu0 0
      %1549 = vmatpush1.bf16.msra.mxu0 0
      %1550 = vmatprep.subr.bf16.mxu0 0
      %1551 = vmatpush1.bf16.msra.mxu0 0
      %1552 = vmatprep.subr.bf16.mxu0 0
      %1553 = vmatpush1.bf16.msra.mxu0 0
      %1554 = vmatprep.subr.bf16.mxu0 0
      %1555 = vmatpush1.bf16.msra.mxu0 0
      %1556 = vmatprep.subr.bf16.mxu0 0
      %1557 = vmatpush1.bf16.msra.mxu0 0
      %1558 = vmatprep.subr.bf16.mxu0 0
      %1559 = vmatpush1.bf16.msra.mxu0 0
      %1560 = vmatprep.subr.bf16.mxu0 0
      %1561 = vmatpush1.bf16.msra.mxu0 0
      %1562 = vmatprep.mubr.bf16.mxu0 0
      %1563 = vmatmul.mubr.bf16.gmra.mrb[0].mxu0 %v1525
      %v1564 = vpop.f32.mrb[0].mxu0
      %v1565 = vadd.f32 0.0, %v1564
      %v1566 = vpop.f32.mrb[0].mxu0
      %v1567 = vpop.f32.mrb[0].mxu0
      %v1568 = vadd.f32 0.0, %v1567
      %v1569 = vpop.f32.mrb[0].mxu0
      %1570 = vdwg.mxu0
      %v1571 = vadd.f32 %v1514, %v1565
      %v1572 = vadd.f32 %v1515, %v1568
      %v1573 = vcombine.high %v451, %v451
      %v1574 = vrot.slane %v451, 5
      %v1575 = vrot.slane %v1574, 4
      %v1576 = vrot.slane %v1573, 5
      %v1577 = vsel %vm595, %v1575, %v1576
      %v1578 = vcombine.low %v950, %v954
      %v1579 = vcombine.low %v958, %v1577
      %v1582 = vpack.c.bf16 %v1579, %v1578
      %s1583 = scalar_lea.vmem %s4, 68
      %v1584 = vld [vmem:[%s1583] sm:$0xf]
      %v1586 = vsel %vm493, %v1582, 0
      %v1589 = vsel %vm497, %v1584, 0
      %1591 = vmatprep.subr.bf16.mxu0 0
      %1592 = vmatpush1.bf16.msra.mxu0 %v1589
      %1593 = vmatprep.subr.bf16.mxu0 0
      %1594 = vmatpush1.bf16.msra.mxu0 0
      %1595 = vmatprep.subr.bf16.mxu0 0
      %1596 = vmatpush1.bf16.msra.mxu0 0
      %1597 = vmatprep.subr.bf16.mxu0 0
      %1598 = vmatpush1.bf16.msra.mxu0 0
      %1599 = vmatprep.subr.bf16.mxu0 0
      %1600 = vmatpush1.bf16.msra.mxu0 0
      %1601 = vmatprep.subr.bf16.mxu0 0
      %1602 = vmatpush1.bf16.msra.mxu0 0
      %1603 = vmatprep.subr.bf16.mxu0 0
      %1604 = vmatpush1.bf16.msra.mxu0 0
      %1605 = vmatprep.subr.bf16.mxu0 0
      %1606 = vmatpush1.bf16.msra.mxu0 0
      %1607 = vmatprep.subr.bf16.mxu0 0
      %1608 = vmatpush1.bf16.msra.mxu0 0
      %1609 = vmatprep.subr.bf16.mxu0 0
      %1610 = vmatpush1.bf16.msra.mxu0 0
      %1611 = vmatprep.subr.bf16.mxu0 0
      %1612 = vmatpush1.bf16.msra.mxu0 0
      %1613 = vmatprep.subr.bf16.mxu0 0
      %1614 = vmatpush1.bf16.msra.mxu0 0
      %1615 = vmatprep.subr.bf16.mxu0 0
      %1616 = vmatpush1.bf16.msra.mxu0 0
      %1617 = vmatprep.subr.bf16.mxu0 0
      %1618 = vmatpush1.bf16.msra.mxu0 0
      %1619 = vmatprep.subr.bf16.mxu0 0
      %1620 = vmatpush1.bf16.msra.mxu0 0
      %1621 = vmatprep.subr.bf16.mxu0 0
      %1622 = vmatpush1.bf16.msra.mxu0 0
      %1623 = vmatprep.mubr.bf16.mxu0 0
      %1624 = vmatmul.mubr.bf16.gmra.mrb[0].mxu0 %v1586
      %v1625 = vpop.f32.mrb[0].mxu0
      %v1626 = vadd.f32 0.0, %v1625
      %v1627 = vpop.f32.mrb[0].mxu0
      %v1628 = vpop.f32.mrb[0].mxu0
      %v1629 = vadd.f32 0.0, %v1628
      %v1630 = vpop.f32.mrb[0].mxu0
      %1631 = vdwg.mxu0
      %v1632 = vadd.f32 %v1571, %v1626
      %v1633 = vadd.f32 %v1572, %v1629
      %v1634 = vcombine.high %v471, %v471
      %v1635 = vrot.slane %v471, 5
      %v1636 = vrot.slane %v1635, 4
      %v1637 = vrot.slane %v1634, 5
      %v1638 = vsel %vm595, %v1636, %v1637
      %v1639 = vcombine.low %v1026, %v1030
      %v1640 = vcombine.low %v1034, %v1638
      %v1643 = vpack.c.bf16 %v1640, %v1639
      %s1644 = scalar_lea.vmem %s4, 72
      %v1645 = vld [vmem:[%s1644] sm:$0xf]
      %v1647 = vsel %vm493, %v1643, 0
      %v1650 = vsel %vm497, %v1645, 0
      %1652 = vmatprep.subr.bf16.mxu0 0
      %1653 = vmatpush1.bf16.msra.mxu0 %v1650
      %1654 = vmatprep.subr.bf16.mxu0 0
      %1655 = vmatpush1.bf16.msra.mxu0 0
      %1656 = vmatprep.subr.bf16.mxu0 0
      %1657 = vmatpush1.bf16.msra.mxu0 0
      %1658 = vmatprep.subr.bf16.mxu0 0
      %1659 = vmatpush1.bf16.msra.mxu0 0
      %1660 = vmatprep.subr.bf16.mxu0 0
      %1661 = vmatpush1.bf16.msra.mxu0 0
      %1662 = vmatprep.subr.bf16.mxu0 0
      %1663 = vmatpush1.bf16.msra.mxu0 0
      %1664 = vmatprep.subr.bf16.mxu0 0
      %1665 = vmatpush1.bf16.msra.mxu0 0
      %1666 = vmatprep.subr.bf16.mxu0 0
      %1667 = vmatpush1.bf16.msra.mxu0 0
      %1668 = vmatprep.subr.bf16.mxu0 0
      %1669 = vmatpush1.bf16.msra.mxu0 0
      %1670 = vmatprep.subr.bf16.mxu0 0
      %1671 = vmatpush1.bf16.msra.mxu0 0
      %1672 = vmatprep.subr.bf16.mxu0 0
      %1673 = vmatpush1.bf16.msra.mxu0 0
      %1674 = vmatprep.subr.bf16.mxu0 0
      %1675 = vmatpush1.bf16.msra.mxu0 0
      %1676 = vmatprep.subr.bf16.mxu0 0
      %1677 = vmatpush1.bf16.msra.mxu0 0
      %1678 = vmatprep.subr.bf16.mxu0 0
      %1679 = vmatpush1.bf16.msra.mxu0 0
      %1680 = vmatprep.subr.bf16.mxu0 0
      %1681 = vmatpush1.bf16.msra.mxu0 0
      %1682 = vmatprep.subr.bf16.mxu0 0
      %1683 = vmatpush1.bf16.msra.mxu0 0
      %1684 = vmatprep.mubr.bf16.mxu0 0
      %1685 = vmatmul.mubr.bf16.gmra.mrb[0].mxu0 %v1647
      %v1686 = vpop.f32.mrb[0].mxu0
      %v1687 = vadd.f32 0.0, %v1686
      %v1688 = vpop.f32.mrb[0].mxu0
      %v1689 = vpop.f32.mrb[0].mxu0
      %v1690 = vadd.f32 0.0, %v1689
      %v1691 = vpop.f32.mrb[0].mxu0
      %1692 = vdwg.mxu0
      %v1693 = vadd.f32 %v1632, %v1687
      %v1694 = vadd.f32 %v1633, %v1690
      %v1695 = vrot.slane %v451, 6
      %v1696 = vrot.slane %v1695, 4
      %v1697 = vrot.slane %v1573, 6
      %v1698 = vsel %vm746, %v1696, %v1697
      %v1699 = vcombine.low %v1098, %v1102
      %v1700 = vcombine.low %v1106, %v1698
      %v1703 = vpack.c.bf16 %v1700, %v1699
      %s1704 = scalar_lea.vmem %s4, 76
      %v1705 = vld [vmem:[%s1704] sm:$0xf]
      %v1707 = vsel %vm493, %v1703, 0
      %v1710 = vsel %vm497, %v1705, 0
      %1712 = vmatprep.subr.bf16.mxu0 0
      %1713 = vmatpush1.bf16.msra.mxu0 %v1710
      %1714 = vmatprep.subr.bf16.mxu0 0
      %1715 = vmatpush1.bf16.msra.mxu0 0
      %1716 = vmatprep.subr.bf16.mxu0 0
      %1717 = vmatpush1.bf16.msra.mxu0 0
      %1718 = vmatprep.subr.bf16.mxu0 0
      %1719 = vmatpush1.bf16.msra.mxu0 0
      %1720 = vmatprep.subr.bf16.mxu0 0
      %1721 = vmatpush1.bf16.msra.mxu0 0
      %1722 = vmatprep.subr.bf16.mxu0 0
      %1723 = vmatpush1.bf16.msra.mxu0 0
      %1724 = vmatprep.subr.bf16.mxu0 0
      %1725 = vmatpush1.bf16.msra.mxu0 0
      %1726 = vmatprep.subr.bf16.mxu0 0
      %1727 = vmatpush1.bf16.msra.mxu0 0
      %1728 = vmatprep.subr.bf16.mxu0 0
      %1729 = vmatpush1.bf16.msra.mxu0 0
      %1730 = vmatprep.subr.bf16.mxu0 0
      %1731 = vmatpush1.bf16.msra.mxu0 0
      %1732 = vmatprep.subr.bf16.mxu0 0
      %1733 = vmatpush1.bf16.msra.mxu0 0
      %1734 = vmatprep.subr.bf16.mxu0 0
      %1735 = vmatpush1.bf16.msra.mxu0 0
      %1736 = vmatprep.subr.bf16.mxu0 0
      %1737 = vmatpush1.bf16.msra.mxu0 0
      %1738 = vmatprep.subr.bf16.mxu0 0
      %1739 = vmatpush1.bf16.msra.mxu0 0
      %1740 = vmatprep.subr.bf16.mxu0 0
      %1741 = vmatpush1.bf16.msra.mxu0 0
      %1742 = vmatprep.subr.bf16.mxu0 0
      %1743 = vmatpush1.bf16.msra.mxu0 0
      %1744 = vmatprep.mubr.bf16.mxu0 0
      %1745 = vmatmul.mubr.bf16.gmra.mrb[0].mxu0 %v1707
      %v1746 = vpop.f32.mrb[0].mxu0
      %v1747 = vadd.f32 0.0, %v1746
      %v1748 = vpop.f32.mrb[0].mxu0
      %v1749 = vpop.f32.mrb[0].mxu0
      %v1750 = vadd.f32 0.0, %v1749
      %v1751 = vpop.f32.mrb[0].mxu0
      %1752 = vdwg.mxu0
      %v1753 = vadd.f32 %v1693, %v1747
      %v1754 = vadd.f32 %v1694, %v1750
      %v1756 = vcombine.low %v406, %v407
      %v1758 = vpack.c.bf16 %v1756, %v477
      %s1759 = scalar_lea.vmem %s4, 80
      %v1760 = vld [vmem:[%s1759] sm:$0xf]
      %v1762 = vsel %vm493, %v1758, 0
      %v1765 = vsel %vm497, %v1760, 0
      %1767 = vmatprep.subr.bf16.mxu0 0
      %1768 = vmatpush1.bf16.msra.mxu0 %v1765
      %1769 = vmatprep.subr.bf16.mxu0 0
      %1770 = vmatpush1.bf16.msra.mxu0 0
      %1771 = vmatprep.subr.bf16.mxu0 0
      %1772 = vmatpush1.bf16.msra.mxu0 0
      %1773 = vmatprep.subr.bf16.mxu0 0
      %1774 = vmatpush1.bf16.msra.mxu0 0
      %1775 = vmatprep.subr.bf16.mxu0 0
      %1776 = vmatpush1.bf16.msra.mxu0 0
      %1777 = vmatprep.subr.bf16.mxu0 0
      %1778 = vmatpush1.bf16.msra.mxu0 0
      %1779 = vmatprep.subr.bf16.mxu0 0
      %1780 = vmatpush1.bf16.msra.mxu0 0
      %1781 = vmatprep.subr.bf16.mxu0 0
      %1782 = vmatpush1.bf16.msra.mxu0 0
      %1783 = vmatprep.subr.bf16.mxu0 0
      %1784 = vmatpush1.bf16.msra.mxu0 0
      %1785 = vmatprep.subr.bf16.mxu0 0
      %1786 = vmatpush1.bf16.msra.mxu0 0
      %1787 = vmatprep.subr.bf16.mxu0 0
      %1788 = vmatpush1.bf16.msra.mxu0 0
      %1789 = vmatprep.subr.bf16.mxu0 0
      %1790 = vmatpush1.bf16.msra.mxu0 0
      %1791 = vmatprep.subr.bf16.mxu0 0
      %1792 = vmatpush1.bf16.msra.mxu0 0
      %1793 = vmatprep.subr.bf16.mxu0 0
      %1794 = vmatpush1.bf16.msra.mxu0 0
      %1795 = vmatprep.subr.bf16.mxu0 0
      %1796 = vmatpush1.bf16.msra.mxu0 0
      %1797 = vmatprep.subr.bf16.mxu0 0
      %1798 = vmatpush1.bf16.msra.mxu0 0
      %1799 = vmatprep.mubr.bf16.mxu0 0
      %1800 = vmatmul.mubr.bf16.gmra.mrb[0].mxu0 %v1762
      %v1801 = vpop.f32.mrb[0].mxu0
      %v1802 = vadd.f32 0.0, %v1801
      %v1803 = vpop.f32.mrb[0].mxu0
      %v1804 = vpop.f32.mrb[0].mxu0
      %v1805 = vadd.f32 0.0, %v1804
      %v1806 = vpop.f32.mrb[0].mxu0
      %1807 = vdwg.mxu0
      %v1808 = vadd.f32 %v1753, %v1802
      %v1809 = vadd.f32 %v1754, %v1805
      %v1811 = vcombine.low %v430, %v431
      %v1813 = vpack.c.bf16 %v1811, %v487
      %s1814 = scalar_lea.vmem %s4, 84
      %v1815 = vld [vmem:[%s1814] sm:$0xf]
      %v1817 = vsel %vm493, %v1813, 0
      %v1820 = vsel %vm497, %v1815, 0
      %1822 = vmatprep.subr.bf16.mxu0 0
      %1823 = vmatpush1.bf16.msra.mxu0 %v1820
      %1824 = vmatprep.subr.bf16.mxu0 0
      %1825 = vmatpush1.bf16.msra.mxu0 0
      %1826 = vmatprep.subr.bf16.mxu0 0
      %1827 = vmatpush1.bf16.msra.mxu0 0
      %1828 = vmatprep.subr.bf16.mxu0 0
      %1829 = vmatpush1.bf16.msra.mxu0 0
      %1830 = vmatprep.subr.bf16.mxu0 0
      %1831 = vmatpush1.bf16.msra.mxu0 0
      %1832 = vmatprep.subr.bf16.mxu0 0
      %1833 = vmatpush1.bf16.msra.mxu0 0
      %1834 = vmatprep.subr.bf16.mxu0 0
      %1835 = vmatpush1.bf16.msra.mxu0 0
      %1836 = vmatprep.subr.bf16.mxu0 0
      %1837 = vmatpush1.bf16.msra.mxu0 0
      %1838 = vmatprep.subr.bf16.mxu0 0
      %1839 = vmatpush1.bf16.msra.mxu0 0
      %1840 = vmatprep.subr.bf16.mxu0 0
      %1841 = vmatpush1.bf16.msra.mxu0 0
      %1842 = vmatprep.subr.bf16.mxu0 0
      %1843 = vmatpush1.bf16.msra.mxu0 0
      %1844 = vmatprep.subr.bf16.mxu0 0
      %1845 = vmatpush1.bf16.msra.mxu0 0
      %1846 = vmatprep.subr.bf16.mxu0 0
      %1847 = vmatpush1.bf16.msra.mxu0 0
      %1848 = vmatprep.subr.bf16.mxu0 0
      %1849 = vmatpush1.bf16.msra.mxu0 0
      %1850 = vmatprep.subr.bf16.mxu0 0
      %1851 = vmatpush1.bf16.msra.mxu0 0
      %1852 = vmatprep.subr.bf16.mxu0 0
      %1853 = vmatpush1.bf16.msra.mxu0 0
      %1854 = vmatprep.mubr.bf16.mxu0 0
      %1855 = vmatmul.mubr.bf16.gmra.mrb[0].mxu0 %v1817
      %v1856 = vpop.f32.mrb[0].mxu0
      %v1857 = vadd.f32 0.0, %v1856
      %v1858 = vpop.f32.mrb[0].mxu0
      %v1859 = vpop.f32.mrb[0].mxu0
      %v1860 = vadd.f32 0.0, %v1859
      %v1861 = vpop.f32.mrb[0].mxu0
      %1862 = vdwg.mxu0
      %v1863 = vadd.f32 %v1808, %v1857
      %v1864 = vadd.f32 %v1809, %v1860
      %v1865 = vcombine.high %v407, %v407
      %v1866 = vrot.slane %v407, 5
      %v1867 = vrot.slane %v1866, 4
      %v1868 = vrot.slane %v1865, 5
      %v1869 = vsel %vm595, %v1867, %v1868
      %v1870 = vcombine.low %v1281, %v1869
      %v1872 = vpack.c.bf16 %v1870, %v613
      %s1873 = scalar_lea.vmem %s4, 88
      %v1874 = vld [vmem:[%s1873] sm:$0xf]
      %v1876 = vsel %vm493, %v1872, 0
      %v1879 = vsel %vm497, %v1874, 0
      %1881 = vmatprep.subr.bf16.mxu0 0
      %1882 = vmatpush1.bf16.msra.mxu0 %v1879
      %1883 = vmatprep.subr.bf16.mxu0 0
      %1884 = vmatpush1.bf16.msra.mxu0 0
      %1885 = vmatprep.subr.bf16.mxu0 0
      %1886 = vmatpush1.bf16.msra.mxu0 0
      %1887 = vmatprep.subr.bf16.mxu0 0
      %1888 = vmatpush1.bf16.msra.mxu0 0
      %1889 = vmatprep.subr.bf16.mxu0 0
      %1890 = vmatpush1.bf16.msra.mxu0 0
      %1891 = vmatprep.subr.bf16.mxu0 0
      %1892 = vmatpush1.bf16.msra.mxu0 0
      %1893 = vmatprep.subr.bf16.mxu0 0
      %1894 = vmatpush1.bf16.msra.mxu0 0
      %1895 = vmatprep.subr.bf16.mxu0 0
      %1896 = vmatpush1.bf16.msra.mxu0 0
      %1897 = vmatprep.subr.bf16.mxu0 0
      %1898 = vmatpush1.bf16.msra.mxu0 0
      %1899 = vmatprep.subr.bf16.mxu0 0
      %1900 = vmatpush1.bf16.msra.mxu0 0
      %1901 = vmatprep.subr.bf16.mxu0 0
      %1902 = vmatpush1.bf16.msra.mxu0 0
      %1903 = vmatprep.subr.bf16.mxu0 0
      %1904 = vmatpush1.bf16.msra.mxu0 0
      %1905 = vmatprep.subr.bf16.mxu0 0
      %1906 = vmatpush1.bf16.msra.mxu0 0
      %1907 = vmatprep.subr.bf16.mxu0 0
      %1908 = vmatpush1.bf16.msra.mxu0 0
      %1909 = vmatprep.subr.bf16.mxu0 0
      %1910 = vmatpush1.bf16.msra.mxu0 0
      %1911 = vmatprep.subr.bf16.mxu0 0
      %1912 = vmatpush1.bf16.msra.mxu0 0
      %1913 = vmatprep.mubr.bf16.mxu0 0
      %1914 = vmatmul.mubr.bf16.gmra.mrb[0].mxu0 %v1876
      %v1915 = vpop.f32.mrb[0].mxu0
      %v1916 = vadd.f32 0.0, %v1915
      %v1917 = vpop.f32.mrb[0].mxu0
      %v1918 = vpop.f32.mrb[0].mxu0
      %v1919 = vadd.f32 0.0, %v1918
      %v1920 = vpop.f32.mrb[0].mxu0
      %1921 = vdwg.mxu0
      %v1922 = vadd.f32 %v1863, %v1916
      %v1923 = vadd.f32 %v1864, %v1919
      %v1924 = vcombine.high %v431, %v431
      %v1925 = vrot.slane %v431, 5
      %v1926 = vrot.slane %v1925, 4
      %v1927 = vrot.slane %v1924, 5
      %v1928 = vsel %vm595, %v1926, %v1927
      %v1929 = vcombine.low %v1342, %v1928
      %v1931 = vpack.c.bf16 %v1929, %v689
      %s1932 = scalar_lea.vmem %s4, 92
      %v1933 = vld [vmem:[%s1932] sm:$0xf]
      %v1935 = vsel %vm493, %v1931, 0
      %v1938 = vsel %vm497, %v1933, 0
      %1940 = vmatprep.subr.bf16.mxu0 0
      %1941 = vmatpush1.bf16.msra.mxu0 %v1938
      %1942 = vmatprep.subr.bf16.mxu0 0
      %1943 = vmatpush1.bf16.msra.mxu0 0
      %1944 = vmatprep.subr.bf16.mxu0 0
      %1945 = vmatpush1.bf16.msra.mxu0 0
      %1946 = vmatprep.subr.bf16.mxu0 0
      %1947 = vmatpush1.bf16.msra.mxu0 0
      %1948 = vmatprep.subr.bf16.mxu0 0
      %1949 = vmatpush1.bf16.msra.mxu0 0
      %1950 = vmatprep.subr.bf16.mxu0 0
      %1951 = vmatpush1.bf16.msra.mxu0 0
      %1952 = vmatprep.subr.bf16.mxu0 0
      %1953 = vmatpush1.bf16.msra.mxu0 0
      %1954 = vmatprep.subr.bf16.mxu0 0
      %1955 = vmatpush1.bf16.msra.mxu0 0
      %1956 = vmatprep.subr.bf16.mxu0 0
      %1957 = vmatpush1.bf16.msra.mxu0 0
      %1958 = vmatprep.subr.bf16.mxu0 0
      %1959 = vmatpush1.bf16.msra.mxu0 0
      %1960 = vmatprep.subr.bf16.mxu0 0
      %1961 = vmatpush1.bf16.msra.mxu0 0
      %1962 = vmatprep.subr.bf16.mxu0 0
      %1963 = vmatpush1.bf16.msra.mxu0 0
      %1964 = vmatprep.subr.bf16.mxu0 0
      %1965 = vmatpush1.bf16.msra.mxu0 0
      %1966 = vmatprep.subr.bf16.mxu0 0
      %1967 = vmatpush1.bf16.msra.mxu0 0
      %1968 = vmatprep.subr.bf16.mxu0 0
      %1969 = vmatpush1.bf16.msra.mxu0 0
      %1970 = vmatprep.subr.bf16.mxu0 0
      %1971 = vmatpush1.bf16.msra.mxu0 0
      %1972 = vmatprep.mubr.bf16.mxu0 0
      %1973 = vmatmul.mubr.bf16.gmra.mrb[0].mxu0 %v1935
      %v1974 = vpop.f32.mrb[0].mxu0
      %v1975 = vadd.f32 0.0, %v1974
      %v1976 = vpop.f32.mrb[0].mxu0
      %v1977 = vpop.f32.mrb[0].mxu0
      %v1978 = vadd.f32 0.0, %v1977
      %v1979 = vpop.f32.mrb[0].mxu0
      %1980 = vdwg.mxu0
      %v1981 = vadd.f32 %v1922, %v1975
      %v1982 = vadd.f32 %v1923, %v1978
      %v1983 = vrot.slane %v407, 6
      %v1984 = vrot.slane %v1983, 4
      %v1985 = vrot.slane %v1865, 6
      %v1986 = vsel %vm746, %v1984, %v1985
      %v1987 = vcombine.low %v1402, %v1986
      %v1989 = vpack.c.bf16 %v1987, %v764
      %s1990 = scalar_lea.vmem %s4, 96
      %v1991 = vld [vmem:[%s1990] sm:$0xf]
      %v1993 = vsel %vm493, %v1989, 0
      %v1996 = vsel %vm497, %v1991, 0
      %1998 = vmatprep.subr.bf16.mxu0 0
      %1999 = vmatpush1.bf16.msra.mxu0 %v1996
      %2000 = vmatprep.subr.bf16.mxu0 0
      %2001 = vmatpush1.bf16.msra.mxu0 0
      %2002 = vmatprep.subr.bf16.mxu0 0
      %2003 = vmatpush1.bf16.msra.mxu0 0
      %2004 = vmatprep.subr.bf16.mxu0 0
      %2005 = vmatpush1.bf16.msra.mxu0 0
      %2006 = vmatprep.subr.bf16.mxu0 0
      %2007 = vmatpush1.bf16.msra.mxu0 0
      %2008 = vmatprep.subr.bf16.mxu0 0
      %2009 = vmatpush1.bf16.msra.mxu0 0
      %2010 = vmatprep.subr.bf16.mxu0 0
      %2011 = vmatpush1.bf16.msra.mxu0 0
      %2012 = vmatprep.subr.bf16.mxu0 0
      %2013 = vmatpush1.bf16.msra.mxu0 0
      %2014 = vmatprep.subr.bf16.mxu0 0
      %2015 = vmatpush1.bf16.msra.mxu0 0
      %2016 = vmatprep.subr.bf16.mxu0 0
      %2017 = vmatpush1.bf16.msra.mxu0 0
      %2018 = vmatprep.subr.bf16.mxu0 0
      %2019 = vmatpush1.bf16.msra.mxu0 0
      %2020 = vmatprep.subr.bf16.mxu0 0
      %2021 = vmatpush1.bf16.msra.mxu0 0
      %2022 = vmatprep.subr.bf16.mxu0 0
      %2023 = vmatpush1.bf16.msra.mxu0 0
      %2024 = vmatprep.subr.bf16.mxu0 0
      %2025 = vmatpush1.bf16.msra.mxu0 0
      %2026 = vmatprep.subr.bf16.mxu0 0
      %2027 = vmatpush1.bf16.msra.mxu0 0
      %2028 = vmatprep.subr.bf16.mxu0 0
      %2029 = vmatpush1.bf16.msra.mxu0 0
      %2030 = vmatprep.mubr.bf16.mxu0 0
      %2031 = vmatmul.mubr.bf16.gmra.mrb[0].mxu0 %v1993
      %v2032 = vpop.f32.mrb[0].mxu0
      %v2033 = vadd.f32 0.0, %v2032
      %v2034 = vpop.f32.mrb[0].mxu0
      %v2035 = vpop.f32.mrb[0].mxu0
      %v2036 = vadd.f32 0.0, %v2035
      %v2037 = vpop.f32.mrb[0].mxu0
      %2038 = vdwg.mxu0
      %v2039 = vadd.f32 %v1981, %v2033
      %v2040 = vadd.f32 %v1982, %v2036
      %v2041 = vld [vmem:[%s5] sm:$0x1]
      %v2043 = vlaneseq
      %v2044 = vshrl.u32 %v2043, 7
      %v2045 = vsub.s32 0, %v2044
      %v2046 = vrot.slane %v2041, %v2045
      %v2048 = vadd.f32 %v2039, %v2046
      %v2049 = vadd.f32 %v2040, %v2046
      %v2052 = vcombine.high %v2048, %v2048
      %v2053 = vcombine.high %v2049, %v2049
      %vm2056 = vcmask 125952
      %2057 = vst.msk [vmem:[%s376] sm:$0xf] %vm2056, %v2048
      %2058 = vst.msk [vmem:[%s376 + $0x4] sm:$0xf] %vm2056, %v2052
      %2059 = vst.msk [vmem:[%s376 + $0x8] sm:$0xf] %vm2056, %v2049
      %2060 = vst.msk [vmem:[%s376 + $0xc] sm:$0xf] %vm2056, %v2053
      %vm2061 = vcmask 130048
      %v2062 = vsel %vm2061, %v2048, 0.0
      %v2063 = vsel %vm2061, %v2049, 0.0
      %v2064 = vadd.f32 %v2062, %v2063
      %v2065 = vrot.slane %v2064, 4
      %v2066 = vadd.f32 %v2064, %v2065
      %v2067 = vrot.slane %v2066, 2
      %v2068 = vadd.f32 %v2066, %v2067
      %v2069 = vrot.slane %v2068, 1
      %v2070 = vadd.f32 %v2068, %v2069
      %vm2071 = vcmask 122880
      %2072 = vst.msk [vmem:[%s379] sm:$0x1] %vm2071, %v2070
      %v2073 = vmul.f32 %v2048, %v2048
      %v2074 = vmul.f32 %v2049, %v2049
      %v2075 = vsel %vm2061, %v2073, 0.0
      %v2076 = vsel %vm2061, %v2074, 0.0
      %v2077 = vadd.f32 %v2075, %v2076
      %v2078 = vrot.slane %v2077, 4
      %v2079 = vadd.f32 %v2077, %v2078
      %v2080 = vrot.slane %v2079, 2
      %v2081 = vadd.f32 %v2079, %v2080
      %v2082 = vrot.slane %v2081, 1
      %v2083 = vadd.f32 %v2081, %v2082
      %2084 = vst.msk [vmem:[%s382] sm:$0x1] %vm2071, %v2083
      %p2085 = scmp.lt.s32.totalorder %s20, 1
      %s2086 = scalar_select %p2085, %s20, 1
      %s2087 = smul.addr %s2086, 4
      %s2088 = smul.addr %s2087, 4
      %s2089 = scalar_lea.vmem %s6, %s2088
      %p2090 = scmp.lt.s32.totalorder %s20, 1
      %s2091 = scalar_select %p2090, %s20, 1
      %s2092 = scalar_lea.vmem %s7, %s2091
      %p2093 = scmp.lt.s32.totalorder %s20, 1
      %s2094 = scalar_select %p2093, %s20, 1
      %s2095 = scalar_lea.vmem %s8, %s2094
      // Predicated region
      $region45: #{encoder_forward.4} parent=43 // pred_check
        %p2096 = pneg %p184
      $region46: #{encoder_forward.4} parent=43 // pred_check_branch
        %2098 = sbr.rel (%p2096) target = $region48
      $region47: #{encoder_forward.4} parent=43 // pred_region
        _
      $region48: #{encoder_forward.4} parent=43 // pred_fallthru
        _
      // Predicated region
      $region49: #{encoder_forward.4} parent=43 // pred_check
        %p2099 = pneg %p210
      $region50: #{encoder_forward.4} parent=43 // pred_check_branch
        %2101 = sbr.rel (%p2099) target = $region52
      $region51: #{encoder_forward.4} parent=43 // pred_region
        _
      $region52: #{encoder_forward.4} parent=43 // pred_fallthru
        _
      // Predicated region
      $region53: #{encoder_forward.4} parent=43 // pred_check
        %p2102 = pneg %p236
      $region54: #{encoder_forward.4} parent=43 // pred_check_branch
        %2104 = sbr.rel (%p2102) target = $region56
      $region55: #{encoder_forward.4} parent=43 // pred_region
        _
      $region56: #{encoder_forward.4} parent=43 // pred_fallthru
        _
    $region44: #{encoder_forward.4} parent=5 // pred_fallthru
      _
    %p2105 = scmp.le.s32.totalorder 2, %s15
    // Predicated region
    $region57: #{encoder_forward.4} parent=5 // pred_check
      %p2106 = pneg %p2105
    $region58: #{encoder_forward.4} parent=5 // pred_check_branch
      %2108 = sbr.rel (%p2106) target = $region60
    $region59: #{encoder_forward.4} parent=5 // pred_region
      %s2109 = ssub.s32 %s15, 2
      // Predicated region
      $region61: #{encoder_forward.4} parent=59 // pred_check
        %p2110 = pneg %p190
      $region62: #{encoder_forward.4} parent=59 // pred_check_branch
        %2112 = sbr.rel (%p2110) target = $region64
      $region63: #{encoder_forward.4} parent=59 // pred_region
        %p2113 = scmp.lt.s32.totalorder %s21, 1
        %s2114 = scalar_select %p2113, %s21, 1
        %s2115 = smul.addr %s2114, 4
        %s2116 = smul.addr %s2115, 4
        %s2117 = scalar_lea.vmem %s6, %s2116
      $region64: #{encoder_forward.4} parent=59 // pred_fallthru
        _
      // Predicated region
      $region65: #{encoder_forward.4} parent=59 // pred_check
        %p2118 = pneg %p216
      $region66: #{encoder_forward.4} parent=59 // pred_check_branch
        %2120 = sbr.rel (%p2118) target = $region68
      $region67: #{encoder_forward.4} parent=59 // pred_region
        %p2121 = scmp.lt.s32.totalorder %s21, 1
        %s2122 = scalar_select %p2121, %s21, 1
        %s2123 = scalar_lea.vmem %s7, %s2122
      $region68: #{encoder_forward.4} parent=59 // pred_fallthru
        _
      // Predicated region
      $region69: #{encoder_forward.4} parent=59 // pred_check
        %p2124 = pneg %p242
      $region70: #{encoder_forward.4} parent=59 // pred_check_branch
        %2126 = sbr.rel (%p2124) target = $region72
      $region71: #{encoder_forward.4} parent=59 // pred_region
        %p2127 = scmp.lt.s32.totalorder %s21, 1
        %s2128 = scalar_select %p2127, %s21, 1
        %s2129 = scalar_lea.vmem %s8, %s2128
      $region72: #{encoder_forward.4} parent=59 // pred_fallthru
        _
    $region60: #{encoder_forward.4} parent=5 // pred_fallthru
      _
  $region6: #{encoder_forward.4} parent=0 // loop_footer
    %s19 = sadd.s32 1, %s15
  $region7: #{encoder_forward.4} parent=0 // loop_footer_branch
    %14 = sbr.rel target = $region3
  $region8: #{encoder_forward.4} parent=0 // loop_exit
    _

// kernel: encoder_forward.3
$region0: #{encoder_forward.3}
  #allocation0 [shape = 'u32[]', space=smem, size = 0x4, offset = 0x4, fixed_abs, tag = 'smem constant byte address 0x4 - core index']
  #allocation1 [shape = 'u32[144,128]{1,0:T(1,128)}', space=vmem, size = 0x12000, scoped, tag = 'internal scratch']
  %s0 = inlined_call_operand.vmem [shape: f32[2,10,10,4], index: 0, kind: input, shape index: {}]
  %s1 = inlined_call_operand.vmem [shape: f32[2,10,10,4], index: 1, kind: input, shape index: {}]
  %s2 = inlined_call_operand.vmem [shape: f32[2,10,10,4], index: 2, kind: input, shape index: {}]
  %s3 = inlined_call_operand.vmem [shape: f32[2,10,10,4], index: 3, kind: input, shape index: {}]
  %s4 = inlined_call_operand.vmem [shape: bf16[25,4,8], index: 4, kind: input, shape index: {}]
  %s5 = inlined_call_operand.vmem [shape: f32[1,8], index: 5, kind: input, shape index: {}]
  %s6 = inlined_call_operand.vmem [shape: f32[2,8,8,8], index: 6, kind: output, shape index: {}]
  %s7 = sld [smem:[#allocation0]]
  $region57: #{encoder_forward.3} parent=0
    _
  %s9 = ssub.s32 1, %s7
  %s10 = scalar_select 0, %s9, %s7
  loop: start=0, step=1, limit=4
  $region2: #{encoder_forward.3} parent=0 // loop_pre_header
    _
  $region3: #{encoder_forward.3} parent=0 // loop_header
    %s12 = sphi 0, %s16
    %p13 = scmp.ge.s32.totalorder %s12, 4
    %s22 = sphi 0, %s24
    %s25 = sphi 0, %s22
    %s26 = sphi 0, %s25
    %s42 = sphi 0, %s26
    %s48 = sphi 0, %s50
    %s51 = sphi 0, %s48
    %s52 = sphi 0, %s51
    %s68 = sphi 0, %s52
    %s74 = sphi 0, %s76
    %s77 = sphi 0, %s74
    %s78 = sphi 0, %s77
    %s94 = sphi 0, %s78
    %s100 = sphi 0, %s102
    %s103 = sphi 0, %s100
    %s104 = sphi 0, %s103
    %s120 = sphi 0, %s104
    %s124 = sphi 0, %s124
    %s126 = sphi 0, %s124
    %s127 = sphi 0, %s126
    %s141 = sphi 0, %s127
    %s145 = sphi 0, %s145
    %s147 = sphi 0, %s145
    %s148 = sphi 0, %s147
    %s162 = sphi 0, %s148
    %s168 = sphi 0, %s170
    %s171 = sphi 0, %s168
    %s172 = sphi 0, %s171
    %s188 = sphi 0, %s172
  $region4: #{encoder_forward.3} parent=0 // loop_header_branch
    %15 = sbr.rel (%p13) target = $region8
  $region5: #{encoder_forward.3} parent=0 // loop_body
    %s17 = ssub.s32 %s12, 1
    %s18 = ssub.s32 %s12, 2
    %s19 = sadd.s32 %s12, 1
    %s20 = ssub.s32 %s12, %s19
    %p21 = scmp.eq.s32.totalorder %s20, 0
    %s23 = sadd.s32 %s22, 1
    %s24 = scalar_select %p21, %s22, %s23
    %p27 = pneg %p21
    %p28 = scmp.eq.s32.totalorder %s12, 1
    %p29 = por %p27, %p28
    %p30 = scmp.ne.s32.totalorder %s22, %s25
    %p31 = scmp.eq.s32.totalorder %s12, 0
    %p32 = por %p30, %p31
    %p33 = scmp.ne.s32.totalorder %s22, %s25
    %p34 = scmp.eq.s32.totalorder %s17, 1
    %p35 = por %p33, %p34
    %p36 = scmp.ne.s32.totalorder %s25, %s26
    %p37 = scmp.eq.s32.totalorder %s17, 0
    %p38 = por %p36, %p37
    %p39 = scmp.ne.s32.totalorder %s25, %s26
    %p40 = scmp.eq.s32.totalorder %s18, 1
    %p41 = por %p39, %p40
    %p43 = scmp.ne.s32.totalorder %s26, %s42
    %p44 = scmp.eq.s32.totalorder %s18, 0
    %p45 = por %p43, %p44
    %s46 = ssub.s32 %s12, %s19
    %p47 = scmp.eq.s32.totalorder %s46, 0
    %s49 = sadd.s32 %s48, 1
    %s50 = scalar_select %p47, %s48, %s49
    %p53 = pneg %p47
    %p54 = scmp.eq.s32.totalorder %s12, 1
    %p55 = por %p53, %p54
    %p56 = scmp.ne.s32.totalorder %s48, %s51
    %p57 = scmp.eq.s32.totalorder %s12, 0
    %p58 = por %p56, %p57
    %p59 = scmp.ne.s32.totalorder %s48, %s51
    %p60 = scmp.eq.s32.totalorder %s17, 1
    %p61 = por %p59, %p60
    %p62 = scmp.ne.s32.totalorder %s51, %s52
    %p63 = scmp.eq.s32.totalorder %s17, 0
    %p64 = por %p62, %p63
    %p65 = scmp.ne.s32.totalorder %s51, %s52
    %p66 = scmp.eq.s32.totalorder %s18, 1
    %p67 = por %p65, %p66
    %p69 = scmp.ne.s32.totalorder %s52, %s68
    %p70 = scmp.eq.s32.totalorder %s18, 0
    %p71 = por %p69, %p70
    %s72 = ssub.s32 %s12, %s19
    %p73 = scmp.eq.s32.totalorder %s72, 0
    %s75 = sadd.s32 %s74, 1
    %s76 = scalar_select %p73, %s74, %s75
    %p79 = pneg %p73
    %p80 = scmp.eq.s32.totalorder %s12, 1
    %p81 = por %p79, %p80
    %p82 = scmp.ne.s32.totalorder %s74, %s77
    %p83 = scmp.eq.s32.totalorder %s12, 0
    %p84 = por %p82, %p83
    %p85 = scmp.ne.s32.totalorder %s74, %s77
    %p86 = scmp.eq.s32.totalorder %s17, 1
    %p87 = por %p85, %p86
    %p88 = scmp.ne.s32.totalorder %s77, %s78
    %p89 = scmp.eq.s32.totalorder %s17, 0
    %p90 = por %p88, %p89
    %p91 = scmp.ne.s32.totalorder %s77, %s78
    %p92 = scmp.eq.s32.totalorder %s18, 1
    %p93 = por %p91, %p92
    %p95 = scmp.ne.s32.totalorder %s78, %s94
    %p96 = scmp.eq.s32.totalorder %s18, 0
    %p97 = por %p95, %p96
    %s98 = ssub.s32 %s12, %s19
    %p99 = scmp.eq.s32.totalorder %s98, 0
    %s101 = sadd.s32 %s100, 1
    %s102 = scalar_select %p99, %s100, %s101
    %p105 = pneg %p99
    %p106 = scmp.eq.s32.totalorder %s12, 1
    %p107 = por %p105, %p106
    %p108 = scmp.ne.s32.totalorder %s100, %s103
    %p109 = scmp.eq.s32.totalorder %s12, 0
    %p110 = por %p108, %p109
    %p111 = scmp.ne.s32.totalorder %s100, %s103
    %p112 = scmp.eq.s32.totalorder %s17, 1
    %p113 = por %p111, %p112
    %p114 = scmp.ne.s32.totalorder %s103, %s104
    %p115 = scmp.eq.s32.totalorder %s17, 0
    %p116 = por %p114, %p115
    %p117 = scmp.ne.s32.totalorder %s103, %s104
    %p118 = scmp.eq.s32.totalorder %s18, 1
    %p119 = por %p117, %p118
    %p121 = scmp.ne.s32.totalorder %s104, %s120
    %p122 = scmp.eq.s32.totalorder %s18, 0
    %p123 = por %p121, %p122
    %s125 = sadd.s32 %s124, 1
    %p128 = scmp.eq.s32.totalorder %s12, 1
    %p129 = scmp.ne.s32.totalorder %s124, %s126
    %p130 = scmp.eq.s32.totalorder %s12, 0
    %p131 = por %p129, %p130
    %p132 = scmp.ne.s32.totalorder %s124, %s126
    %p133 = scmp.eq.s32.totalorder %s17, 1
    %p134 = por %p132, %p133
    %p135 = scmp.ne.s32.totalorder %s126, %s127
    %p136 = scmp.eq.s32.totalorder %s17, 0
    %p137 = por %p135, %p136
    %p138 = scmp.ne.s32.totalorder %s126, %s127
    %p139 = scmp.eq.s32.totalorder %s18, 1
    %p140 = por %p138, %p139
    %p142 = scmp.ne.s32.totalorder %s127, %s141
    %p143 = scmp.eq.s32.totalorder %s18, 0
    %p144 = por %p142, %p143
    %s146 = sadd.s32 %s145, 1
    %p149 = scmp.eq.s32.totalorder %s12, 1
    %p150 = scmp.ne.s32.totalorder %s145, %s147
    %p151 = scmp.eq.s32.totalorder %s12, 0
    %p152 = por %p150, %p151
    %p153 = scmp.ne.s32.totalorder %s145, %s147
    %p154 = scmp.eq.s32.totalorder %s17, 1
    %p155 = por %p153, %p154
    %p156 = scmp.ne.s32.totalorder %s147, %s148
    %p157 = scmp.eq.s32.totalorder %s17, 0
    %p158 = por %p156, %p157
    %p159 = scmp.ne.s32.totalorder %s147, %s148
    %p160 = scmp.eq.s32.totalorder %s18, 1
    %p161 = por %p159, %p160
    %p163 = scmp.ne.s32.totalorder %s148, %s162
    %p164 = scmp.eq.s32.totalorder %s18, 0
    %p165 = por %p163, %p164
    %s166 = ssub.s32 %s12, %s19
    %p167 = scmp.eq.s32.totalorder %s166, 0
    %s169 = sadd.s32 %s168, 1
    %s170 = scalar_select %p167, %s168, %s169
    %p173 = pneg %p167
    %p174 = scmp.eq.s32.totalorder %s12, 1
    %p175 = por %p173, %p174
    %p176 = scmp.ne.s32.totalorder %s168, %s171
    %p177 = scmp.eq.s32.totalorder %s12, 0
    %p178 = por %p176, %p177
    %p179 = scmp.ne.s32.totalorder %s168, %s171
    %p180 = scmp.eq.s32.totalorder %s17, 1
    %p181 = por %p179, %p180
    %p182 = scmp.ne.s32.totalorder %s171, %s172
    %p183 = scmp.eq.s32.totalorder %s17, 0
    %p184 = por %p182, %p183
    %p185 = scmp.ne.s32.totalorder %s171, %s172
    %p186 = scmp.eq.s32.totalorder %s18, 1
    %p187 = por %p185, %p186
    %p189 = scmp.ne.s32.totalorder %s172, %s188
    %p190 = scmp.eq.s32.totalorder %s18, 0
    %p191 = por %p189, %p190
    %p192 = scmp.le.s32.totalorder 1, %s12
    %p193 = scmp.lt.s32.totalorder %s12, 3
    %p194 = pnand %p192, %p193
    %p195 = pneg %p194
    // Predicated region
    $region9: #{encoder_forward.3} parent=5 // pred_check
      _
    $region10: #{encoder_forward.3} parent=5 // pred_check_branch
      %197 = sbr.rel (%p194) target = $region12
    $region11: #{encoder_forward.3} parent=5 // pred_region
      %s198 = ssub.s32 %s12, 1
      // Predicated region
      $region13: #{encoder_forward.3} parent=11 // pred_check
        %p199 = pneg %p137
      $region14: #{encoder_forward.3} parent=11 // pred_check_branch
        %201 = sbr.rel (%p199) target = $region16
      $region15: #{encoder_forward.3} parent=11 // pred_region
        _
      $region16: #{encoder_forward.3} parent=11 // pred_fallthru
        _
      // Predicated region
      $region17: #{encoder_forward.3} parent=11 // pred_check
        %p202 = pneg %p158
      $region18: #{encoder_forward.3} parent=11 // pred_check_branch
        %204 = sbr.rel (%p202) target = $region20
      $region19: #{encoder_forward.3} parent=11 // pred_region
        _
      $region20: #{encoder_forward.3} parent=11 // pred_fallthru
        _
    $region12: #{encoder_forward.3} parent=5 // pred_fallthru
      _
    %p205 = scmp.lt.s32.totalorder %s12, 2
    // Predicated region
    $region21: #{encoder_forward.3} parent=5 // pred_check
      %p206 = pneg %p205
    $region22: #{encoder_forward.3} parent=5 // pred_check_branch
      %208 = sbr.rel (%p206) target = $region24
    $region23: #{encoder_forward.3} parent=5 // pred_region
      // Predicated region
      $region25: #{encoder_forward.3} parent=23 // pred_check
        %p209 = pneg %p32
      $region26: #{encoder_forward.3} parent=23 // pred_check_branch
        %211 = sbr.rel (%p209) target = $region28
      $region27: #{encoder_forward.3} parent=23 // pred_region
        %p212 = scmp.lt.s32.totalorder %s12, 1
        %s213 = scalar_select %p212, %s12, 1
        %s214 = smul.addr %s213, 20
        %s215 = smul.addr %s214, 8
        %s216 = scalar_lea.vmem %s0, %s215
      $region28: #{encoder_forward.3} parent=23 // pred_fallthru
        _
      // Predicated region
      $region29: #{encoder_forward.3} parent=23 // pred_check
        %p217 = pneg %p58
      $region30: #{encoder_forward.3} parent=23 // pred_check_branch
        %219 = sbr.rel (%p217) target = $region32
      $region31: #{encoder_forward.3} parent=23 // pred_region
        %p220 = scmp.lt.s32.totalorder %s12, 1
        %s221 = scalar_select %p220, %s12, 1
        %s222 = smul.addr %s221, 20
        %s223 = smul.addr %s222, 8
        %s224 = scalar_lea.vmem %s1, %s223
      $region32: #{encoder_forward.3} parent=23 // pred_fallthru
        _
      // Predicated region
      $region33: #{encoder_forward.3} parent=23 // pred_check
        %p225 = pneg %p84
      $region34: #{encoder_forward.3} parent=23 // pred_check_branch
        %227 = sbr.rel (%p225) target = $region36
      $region35: #{encoder_forward.3} parent=23 // pred_region
        %p228 = scmp.lt.s32.totalorder %s12, 1
        %s229 = scalar_select %p228, %s12, 1
        %s230 = smul.addr %s229, 20
        %s231 = smul.addr %s230, 8
        %s232 = scalar_lea.vmem %s2, %s231
      $region36: #{encoder_forward.3} parent=23 // pred_fallthru
        _
      // Predicated region
      $region37: #{encoder_forward.3} parent=23 // pred_check
        %p233 = pneg %p110
      $region38: #{encoder_forward.3} parent=23 // pred_check_branch
        %235 = sbr.rel (%p233) target = $region40
      $region39: #{encoder_forward.3} parent=23 // pred_region
        %p236 = scmp.lt.s32.totalorder %s12, 1
        %s237 = scalar_select %p236, %s12, 1
        %s238 = smul.addr %s237, 20
        %s239 = smul.addr %s238, 8
        %s240 = scalar_lea.vmem %s3, %s239
      $region40: #{encoder_forward.3} parent=23 // pred_fallthru
        _
    $region24: #{encoder_forward.3} parent=5 // pred_fallthru
      _
    %p241 = scmp.le.s32.totalorder 1, %s12
    %p242 = scmp.lt.s32.totalorder %s12, 3
    %p243 = pnand %p241, %p242
    %p244 = pneg %p243
    // Predicated region
    $region41: #{encoder_forward.3} parent=5 // pred_check
      _
    $region42: #{encoder_forward.3} parent=5 // pred_check_branch
      %246 = sbr.rel (%p243) target = $region44
    $region43: #{encoder_forward.3} parent=5 // pred_region
      %s247 = ssub.s32 %s12, 1
      %p248 = scmp.lt.s32.totalorder %s17, 1
      %s249 = scalar_select %p248, %s17, 1
      %s250 = smul.addr %s249, 20
      %s251 = smul.addr %s250, 8
      %s252 = scalar_lea.vmem %s0, %s251
      %p253 = pneg %p38
      %p254 = pneg %p35
      %p255 = scmp.lt.s32.totalorder %s17, 1
      %s256 = scalar_select %p255, %s17, 1
      %s257 = smul.addr %s256, 20
      %s258 = smul.addr %s257, 8
      %s259 = scalar_lea.vmem %s1, %s258
      %p260 = pneg %p64
      %p261 = pneg %p61
      %p262 = scmp.lt.s32.totalorder %s17, 1
      %s263 = scalar_select %p262, %s17, 1
      %s264 = smul.addr %s263, 20
      %s265 = smul.addr %s264, 8
      %s266 = scalar_lea.vmem %s2, %s265
      %p267 = pneg %p90
      %p268 = pneg %p87
      %p269 = scmp.lt.s32.totalorder %s17, 1
      %s270 = scalar_select %p269, %s17, 1
      %s271 = smul.addr %s270, 20
      %s272 = smul.addr %s271, 8
      %s273 = scalar_lea.vmem %s3, %s272
      %p274 = pneg %p116
      %p275 = pneg %p113
      %p276 = pneg %p137
      %p277 = pneg %p134
      %p278 = pneg %p158
      %p279 = pneg %p155
      %p280 = pneg %p184
      %p281 = pneg %p181
      %p282 = scmp.lt.s32.totalorder %s17, 1
      %s283 = scalar_select %p282, %s17, 1
      %s284 = smul.addr %s283, 8
      %s285 = smul.addr %s284, 8
      %s286 = scalar_lea.vmem %s6, %s285
      %p287 = scmp.lt.s32.totalorder %s17, 1
      %s288 = scalar_select %p287, %s17, 1
      %s289 = smul.addr %s288, 20
      %s290 = smul.addr %s289, 8
      %s291 = scalar_lea.vmem %s0, %s290
      %p292 = scmp.lt.s32.totalorder %s17, 1
      %s293 = scalar_select %p292, %s17, 1
      %s294 = smul.addr %s293, 20
      %s295 = smul.addr %s294, 8
      %s296 = scalar_lea.vmem %s1, %s295
      %p297 = scmp.lt.s32.totalorder %s17, 1
      %s298 = scalar_select %p297, %s17, 1
      %s299 = smul.addr %s298, 20
      %s300 = smul.addr %s299, 8
      %s301 = scalar_lea.vmem %s2, %s300
      %p302 = scmp.lt.s32.totalorder %s17, 1
      %s303 = scalar_select %p302, %s17, 1
      %s304 = smul.addr %s303, 20
      %s305 = smul.addr %s304, 8
      %s306 = scalar_lea.vmem %s3, %s305
      %p307 = scmp.lt.s32.totalorder %s17, 1
      %s308 = scalar_select %p307, %s17, 1
      %s309 = smul.addr %s308, 8
      %s310 = smul.addr %s309, 8
      %s311 = scalar_lea.vmem %s6, %s310
      %v313 = vld [vmem:[%s291] sm:$0xff]
      %v314 = vld [vmem:[%s291 + $0x8] sm:$0x3]
      %v315 = vld [vmem:[%s291 + $0x10] sm:$0xff]
      %v316 = vld [vmem:[%s291 + $0x18] sm:$0x3]
      %v317 = vld [vmem:[%s291 + $0x20] sm:$0xff]
      %v318 = vld [vmem:[%s291 + $0x28] sm:$0x3]
      %v319 = vld [vmem:[%s291 + $0x30] sm:$0xff]
      %v320 = vld [vmem:[%s291 + $0x38] sm:$0x3]
      %v321 = vld [vmem:[%s291 + $0x40] sm:$0xff]
      %v322 = vld [vmem:[%s291 + $0x48] sm:$0x3]
      %v323 = vld [vmem:[%s291 + $0x50] sm:$0xff]
      %v324 = vld [vmem:[%s291 + $0x58] sm:$0x3]
      %v325 = vld [vmem:[%s291 + $0x60] sm:$0xff]
      %v326 = vld [vmem:[%s291 + $0x68] sm:$0x3]
      %v327 = vld [vmem:[%s291 + $0x70] sm:$0xff]
      %v328 = vld [vmem:[%s291 + $0x78] sm:$0x3]
      %v329 = vld [vmem:[%s291 + $0x80] sm:$0xff]
      %v330 = vld [vmem:[%s291 + $0x88] sm:$0x3]
      %v331 = vld [vmem:[%s291 + $0x90] sm:$0xff]
      %v332 = vld [vmem:[%s291 + $0x98] sm:$0x3]
      %v333 = vld [vmem:[%s296] sm:$0xff]
      %v334 = vld [vmem:[%s296 + $0x8] sm:$0x3]
      %v335 = vld [vmem:[%s296 + $0x10] sm:$0xff]
      %v336 = vld [vmem:[%s296 + $0x18] sm:$0x3]
      %v337 = vld [vmem:[%s296 + $0x20] sm:$0xff]
      %v338 = vld [vmem:[%s296 + $0x28] sm:$0x3]
      %v339 = vld [vmem:[%s296 + $0x30] sm:$0xff]
      %v340 = vld [vmem:[%s296 + $0x38] sm:$0x3]
      %v341 = vld [vmem:[%s296 + $0x40] sm:$0xff]
      %v342 = vld [vmem:[%s296 + $0x48] sm:$0x3]
      %v343 = vld [vmem:[%s296 + $0x50] sm:$0xff]
      %v344 = vld [vmem:[%s296 + $0x58] sm:$0x3]
      %v345 = vld [vmem:[%s296 + $0x60] sm:$0xff]
      %v346 = vld [vmem:[%s296 + $0x68] sm:$0x3]
      %v347 = vld [vmem:[%s296 + $0x70] sm:$0xff]
      %v348 = vld [vmem:[%s296 + $0x78] sm:$0x3]
      %v349 = vld [vmem:[%s296 + $0x80] sm:$0xff]
      %v350 = vld [vmem:[%s296 + $0x88] sm:$0x3]
      %v351 = vld [vmem:[%s296 + $0x90] sm:$0xff]
      %v352 = vld [vmem:[%s296 + $0x98] sm:$0x3]
      %v353 = vld [vmem:[%s301] sm:$0xff]
      %v354 = vld [vmem:[%s301 + $0x8] sm:$0x3]
      %v355 = vld [vmem:[%s301 + $0x10] sm:$0xff]
      %v356 = vld [vmem:[%s301 + $0x18] sm:$0x3]
      %v357 = vld [vmem:[%s301 + $0x20] sm:$0xff]
      %v358 = vld [vmem:[%s301 + $0x28] sm:$0x3]
      %v359 = vld [vmem:[%s301 + $0x30] sm:$0xff]
      %v360 = vld [vmem:[%s301 + $0x38] sm:$0x3]
      %v361 = vld [vmem:[%s301 + $0x40] sm:$0xff]
      %v362 = vld [vmem:[%s301 + $0x48] sm:$0x3]
      %v363 = vld [vmem:[%s301 + $0x50] sm:$0xff]
      %v364 = vld [vmem:[%s301 + $0x58] sm:$0x3]
      %v365 = vld [vmem:[%s301 + $0x60] sm:$0xff]
      %v366 = vld [vmem:[%s301 + $0x68] sm:$0x3]
      %v367 = vld [vmem:[%s301 + $0x70] sm:$0xff]
      %v368 = vld [vmem:[%s301 + $0x78] sm:$0x3]
      %v369 = vld [vmem:[%s301 + $0x80] sm:$0xff]
      %v370 = vld [vmem:[%s301 + $0x88] sm:$0x3]
      %v371 = vld [vmem:[%s306] sm:$0xff]
      %v372 = vld [vmem:[%s306 + $0x8] sm:$0x3]
      %v373 = vld [vmem:[%s306 + $0x10] sm:$0xff]
      %v374 = vld [vmem:[%s306 + $0x18] sm:$0x3]
      %v375 = vld [vmem:[%s306 + $0x20] sm:$0xff]
      %v376 = vld [vmem:[%s306 + $0x28] sm:$0x3]
      %v377 = vld [vmem:[%s306 + $0x30] sm:$0xff]
      %v378 = vld [vmem:[%s306 + $0x38] sm:$0x3]
      %v379 = vld [vmem:[%s306 + $0x40] sm:$0xff]
      %v380 = vld [vmem:[%s306 + $0x48] sm:$0x3]
      %v381 = vld [vmem:[%s306 + $0x50] sm:$0xff]
      %v382 = vld [vmem:[%s306 + $0x58] sm:$0x3]
      %v383 = vld [vmem:[%s306 + $0x60] sm:$0xff]
      %v384 = vld [vmem:[%s306 + $0x68] sm:$0x3]
      %v385 = vld [vmem:[%s306 + $0x70] sm:$0xff]
      %v386 = vld [vmem:[%s306 + $0x78] sm:$0x3]
      %v387 = vld [vmem:[%s306 + $0x80] sm:$0xff]
      %v388 = vld [vmem:[%s306 + $0x88] sm:$0x3]
      %v389 = vpack.c.bf16 %v315, %v313
      %v390 = vpack.c.bf16 %v319, %v317
      %v391 = vpack.c.bf16 %v323, %v321
      %v392 = vpack.c.bf16 %v327, %v325
      %v393 = vld [vmem:[%s4] sm:$0x3]
      %v394 = vpack.c.bf16 %v335, %v333
      %v395 = vpack.c.bf16 %v339, %v337
      %v396 = vpack.c.bf16 %v343, %v341
      %v397 = vpack.c.bf16 %v347, %v345
      %s398 = scalar_lea.vmem %s4, 2
      %v399 = vld [vmem:[%s398] sm:$0x3]
      %vm400 = vcmask 31744
      %v402 = vsel %vm400, %v394, 0
      %v405 = vsel %vm400, %v395, 0
      %v408 = vsel %vm400, %v396, 0
      %v411 = vsel %vm400, %v397, 0
      %vm413 = vcmask 1041408
      %v415 = vsel %vm413, %v399, 0
      %417 = vmatprep.subr.bf16.mxu0 0
      %418 = vmatpush1.bf16.msra.mxu0 %v415
      %419 = vmatprep.subr.bf16.mxu0 0
      %420 = vmatpush1.bf16.msra.mxu0 0
      %421 = vmatprep.subr.bf16.mxu0 0
      %422 = vmatpush1.bf16.msra.mxu0 0
      %423 = vmatprep.subr.bf16.mxu0 0
      %424 = vmatpush1.bf16.msra.mxu0 0
      %425 = vmatprep.subr.bf16.mxu0 0
      %426 = vmatpush1.bf16.msra.mxu0 0
      %427 = vmatprep.subr.bf16.mxu0 0
      %428 = vmatpush1.bf16.msra.mxu0 0
      %429 = vmatprep.subr.bf16.mxu0 0
      %430 = vmatpush1.bf16.msra.mxu0 0
      %431 = vmatprep.subr.bf16.mxu0 0
      %432 = vmatpush1.bf16.msra.mxu0 0
      %433 = vmatprep.subr.bf16.mxu0 0
      %434 = vmatpush1.bf16.msra.mxu0 0
      %435 = vmatprep.subr.bf16.mxu0 0
      %436 = vmatpush1.bf16.msra.mxu0 0
      %437 = vmatprep.subr.bf16.mxu0 0
      %438 = vmatpush1.bf16.msra.mxu0 0
      %439 = vmatprep.subr.bf16.mxu0 0
      %440 = vmatpush1.bf16.msra.mxu0 0
      %441 = vmatprep.subr.bf16.mxu0 0
      %442 = vmatpush1.bf16.msra.mxu0 0
      %443 = vmatprep.subr.bf16.mxu0 0
      %444 = vmatpush1.bf16.msra.mxu0 0
      %445 = vmatprep.subr.bf16.mxu0 0
      %446 = vmatpush1.bf16.msra.mxu0 0
      %447 = vmatprep.subr.bf16.mxu0 0
      %448 = vmatpush1.bf16.msra.mxu0 0
      %449 = vmatprep.mubr.bf16.mxu0 0
      %450 = vmatmul.mubr.bf16.gmra.mrb[0].mxu0 %v402
      %v451 = vpop.f32.mrb[0].mxu0
      %v452 = vadd.f32 0.0, %v451
      %v453 = vpop.f32.mrb[0].mxu0
      %v454 = vpop.f32.mrb[0].mxu0
      %v455 = vadd.f32 0.0, %v454
      %v456 = vpop.f32.mrb[0].mxu0
      %457 = vmatprep.mubr.bf16.mxu0 0
      %458 = vmatmul.mubr.bf16.gmra.mrb[0].mxu0 %v405
      %v459 = vpop.f32.mrb[0].mxu0
      %v460 = vadd.f32 0.0, %v459
      %v461 = vpop.f32.mrb[0].mxu0
      %v462 = vpop.f32.mrb[0].mxu0
      %v463 = vadd.f32 0.0, %v462
      %v464 = vpop.f32.mrb[0].mxu0
      %465 = vmatprep.mubr.bf16.mxu0 0
      %466 = vmatmul.mubr.bf16.gmra.mrb[0].mxu0 %v408
      %v467 = vpop.f32.mrb[0].mxu0
      %v468 = vadd.f32 0.0, %v467
      %v469 = vpop.f32.mrb[0].mxu0
      %v470 = vpop.f32.mrb[0].mxu0
      %v471 = vadd.f32 0.0, %v470
      %v472 = vpop.f32.mrb[0].mxu0
      %473 = vmatprep.mubr.bf16.mxu0 0
      %474 = vmatmul.mubr.bf16.gmra.mrb[0].mxu0 %v411
      %v475 = vpop.f32.mrb[0].mxu0
      %v476 = vadd.f32 0.0, %v475
      %v477 = vpop.f32.mrb[0].mxu0
      %v478 = vpop.f32.mrb[0].mxu0
      %v479 = vadd.f32 0.0, %v478
      %v480 = vpop.f32.mrb[0].mxu0
      %481 = vdwg.mxu0
      %v483 = vsel %vm400, %v389, 0
      %v486 = vsel %vm400, %v390, 0
      %v489 = vsel %vm400, %v391, 0
      %v492 = vsel %vm400, %v392, 0
      %v495 = vsel %vm413, %v393, 0
      %497 = vmatprep.subr.bf16.mxu0 0
      %498 = vmatpush1.bf16.msra.mxu0 %v495
      %499 = vmatprep.subr.bf16.mxu0 0
      %500 = vmatpush1.bf16.msra.mxu0 0
      %501 = vmatprep.subr.bf16.mxu0 0
      %502 = vmatpush1.bf16.msra.mxu0 0
      %503 = vmatprep.subr.bf16.mxu0 0
      %504 = vmatpush1.bf16.msra.mxu0 0
      %505 = vmatprep.subr.bf16.mxu0 0
      %506 = vmatpush1.bf16.msra.mxu0 0
      %507 = vmatprep.subr.bf16.mxu0 0
      %508 = vmatpush1.bf16.msra.mxu0 0
      %509 = vmatprep.subr.bf16.mxu0 0
      %510 = vmatpush1.bf16.msra.mxu0 0
      %511 = vmatprep.subr.bf16.mxu0 0
      %512 = vmatpush1.bf16.msra.mxu0 0
      %513 = vmatprep.subr.bf16.mxu0 0
      %514 = vmatpush1.bf16.msra.mxu0 0
      %515 = vmatprep.subr.bf16.mxu0 0
      %516 = vmatpush1.bf16.msra.mxu0 0
      %517 = vmatprep.subr.bf16.mxu0 0
      %518 = vmatpush1.bf16.msra.mxu0 0
      %519 = vmatprep.subr.bf16.mxu0 0
      %520 = vmatpush1.bf16.msra.mxu0 0
      %521 = vmatprep.subr.bf16.mxu0 0
      %522 = vmatpush1.bf16.msra.mxu0 0
      %523 = vmatprep.subr.bf16.mxu0 0
      %524 = vmatpush1.bf16.msra.mxu0 0
      %525 = vmatprep.subr.bf16.mxu0 0
      %526 = vmatpush1.bf16.msra.mxu0 0
      %527 = vmatprep.subr.bf16.mxu0 0
      %528 = vmatpush1.bf16.msra.mxu0 0
      %529 = vmatprep.mubr.bf16.mxu0 0
      %530 = vmatmul.mubr.bf16.gmra.mrb[0].mxu0 %v483
      %v531 = vpop.f32.mrb[0].mxu0
      %v532 = vadd.f32 %v452, %v531
      %v533 = vpop.f32.mrb[0].mxu0
      %v534 = vpop.f32.mrb[0].mxu0
      %v535 = vadd.f32 %v455, %v534
      %v536 = vpop.f32.mrb[0].mxu0
      %537 = vmatprep.mubr.bf16.mxu0 0
      %538 = vmatmul.mubr.bf16.gmra.mrb[0].mxu0 %v486
      %v539 = vpop.f32.mrb[0].mxu0
      %v540 = vadd.f32 %v460, %v539
      %v541 = vpop.f32.mrb[0].mxu0
      %v542 = vpop.f32.mrb[0].mxu0
      %v543 = vadd.f32 %v463, %v542
      %v544 = vpop.f32.mrb[0].mxu0
      %545 = vmatprep.mubr.bf16.mxu0 0
      %546 = vmatmul.mubr.bf16.gmra.mrb[0].mxu0 %v489
      %v547 = vpop.f32.mrb[0].mxu0
      %v548 = vadd.f32 %v468, %v547
      %v549 = vpop.f32.mrb[0].mxu0
      %v550 = vpop.f32.mrb[0].mxu0
      %v551 = vadd.f32 %v471, %v550
      %v552 = vpop.f32.mrb[0].mxu0
      %553 = vmatprep.mubr.bf16.mxu0 0
      %554 = vmatmul.mubr.bf16.gmra.mrb[0].mxu0 %v492
      %v555 = vpop.f32.mrb[0].mxu0
      %v556 = vadd.f32 %v476, %v555
      %v557 = vpop.f32.mrb[0].mxu0
      %v558 = vpop.f32.mrb[0].mxu0
      %v559 = vadd.f32 %v479, %v558
      %v560 = vpop.f32.mrb[0].mxu0
      %561 = vdwg.mxu0
      %vm578 = vcmask 1046528
      %v579 = vrot.slane %v313, 1
      %v580 = vrot.slane %v314, 1
      %v581 = vsel %vm578, %v579, %v580
      %v582 = vrot.slane %v315, 1
      %v583 = vrot.slane %v316, 1
      %v584 = vsel %vm578, %v582, %v583
      %v585 = vrot.slane %v317, 1
      %v586 = vrot.slane %v318, 1
      %v587 = vsel %vm578, %v585, %v586
      %v588 = vrot.slane %v319, 1
      %v589 = vrot.slane %v320, 1
      %v590 = vsel %vm578, %v588, %v589
      %v591 = vrot.slane %v321, 1
      %v592 = vrot.slane %v322, 1
      %v593 = vsel %vm578, %v591, %v592
      %v594 = vrot.slane %v323, 1
      %v595 = vrot.slane %v324, 1
      %v596 = vsel %vm578, %v594, %v595
      %v597 = vrot.slane %v325, 1
      %v598 = vrot.slane %v326, 1
      %v599 = vsel %vm578, %v597, %v598
      %v600 = vrot.slane %v327, 1
      %v601 = vrot.slane %v328, 1
      %v602 = vsel %vm578, %v600, %v601
      %v611 = vpack.c.bf16 %v584, %v581
      %v612 = vpack.c.bf16 %v590, %v587
      %v613 = vpack.c.bf16 %v596, %v593
      %v614 = vpack.c.bf16 %v602, %v599
      %s615 = scalar_lea.vmem %s4, 4
      %v616 = vld [vmem:[%s615] sm:$0x3]
      %v618 = vsel %vm400, %v611, 0
      %v621 = vsel %vm400, %v612, 0
      %v624 = vsel %vm400, %v613, 0
      %v627 = vsel %vm400, %v614, 0
      %v630 = vsel %vm413, %v616, 0
      %632 = vmatprep.subr.bf16.mxu0 0
      %633 = vmatpush1.bf16.msra.mxu0 %v630
      %634 = vmatprep.subr.bf16.mxu0 0
      %635 = vmatpush1.bf16.msra.mxu0 0
      %636 = vmatprep.subr.bf16.mxu0 0
      %637 = vmatpush1.bf16.msra.mxu0 0
      %638 = vmatprep.subr.bf16.mxu0 0
      %639 = vmatpush1.bf16.msra.mxu0 0
      %640 = vmatprep.subr.bf16.mxu0 0
      %641 = vmatpush1.bf16.msra.mxu0 0
      %642 = vmatprep.subr.bf16.mxu0 0
      %643 = vmatpush1.bf16.msra.mxu0 0
      %644 = vmatprep.subr.bf16.mxu0 0
      %645 = vmatpush1.bf16.msra.mxu0 0
      %646 = vmatprep.subr.bf16.mxu0 0
      %647 = vmatpush1.bf16.msra.mxu0 0
      %648 = vmatprep.subr.bf16.mxu0 0
      %649 = vmatpush1.bf16.msra.mxu0 0
      %650 = vmatprep.subr.bf16.mxu0 0
      %651 = vmatpush1.bf16.msra.mxu0 0
      %652 = vmatprep.subr.bf16.mxu0 0
      %653 = vmatpush1.bf16.msra.mxu0 0
      %654 = vmatprep.subr.bf16.mxu0 0
      %655 = vmatpush1.bf16.msra.mxu0 0
      %656 = vmatprep.subr.bf16.mxu0 0
      %657 = vmatpush1.bf16.msra.mxu0 0
      %658 = vmatprep.subr.bf16.mxu0 0
      %659 = vmatpush1.bf16.msra.mxu0 0
      %660 = vmatprep.subr.bf16.mxu0 0
      %661 = vmatpush1.bf16.msra.mxu0 0
      %662 = vmatprep.subr.bf16.mxu0 0
      %663 = vmatpush1.bf16.msra.mxu0 0
      %664 = vmatprep.mubr.bf16.mxu0 0
      %665 = vmatmul.mubr.bf16.gmra.mrb[0].mxu0 %v618
      %v666 = vpop.f32.mrb[0].mxu0
      %v667 = vadd.f32 0.0, %v666
      %v668 = vpop.f32.mrb[0].mxu0
      %v669 = vpop.f32.mrb[0].mxu0
      %v670 = vadd.f32 0.0, %v669
      %v671 = vpop.f32.mrb[0].mxu0
      %672 = vmatprep.mubr.bf16.mxu0 0
      %673 = vmatmul.mubr.bf16.gmra.mrb[0].mxu0 %v621
      %v674 = vpop.f32.mrb[0].mxu0
      %v675 = vadd.f32 0.0, %v674
      %v676 = vpop.f32.mrb[0].mxu0
      %v677 = vpop.f32.mrb[0].mxu0
      %v678 = vadd.f32 0.0, %v677
      %v679 = vpop.f32.mrb[0].mxu0
      %680 = vmatprep.mubr.bf16.mxu0 0
      %681 = vmatmul.mubr.bf16.gmra.mrb[0].mxu0 %v624
      %v682 = vpop.f32.mrb[0].mxu0
      %v683 = vadd.f32 0.0, %v682
      %v684 = vpop.f32.mrb[0].mxu0
      %v685 = vpop.f32.mrb[0].mxu0
      %v686 = vadd.f32 0.0, %v685
      %v687 = vpop.f32.mrb[0].mxu0
      %688 = vmatprep.mubr.bf16.mxu0 0
      %689 = vmatmul.mubr.bf16.gmra.mrb[0].mxu0 %v627
      %v690 = vpop.f32.mrb[0].mxu0
      %v691 = vadd.f32 0.0, %v690
      %v692 = vpop.f32.mrb[0].mxu0
      %v693 = vpop.f32.mrb[0].mxu0
      %v694 = vadd.f32 0.0, %v693
      %v695 = vpop.f32.mrb[0].mxu0
      %696 = vdwg.mxu0
      %v697 = vadd.f32 %v532, %v667
      %v698 = vadd.f32 %v535, %v670
      %v699 = vadd.f32 %v540, %v675
      %v700 = vadd.f32 %v543, %v678
      %v701 = vadd.f32 %v548, %v683
      %v702 = vadd.f32 %v551, %v686
      %v703 = vadd.f32 %v556, %v691
      %v704 = vadd.f32 %v559, %v694
      %v721 = vrot.slane %v333, 1
      %v722 = vrot.slane %v334, 1
      %v723 = vsel %vm578, %v721, %v722
      %v724 = vrot.slane %v335, 1
      %v725 = vrot.slane %v336, 1
      %v726 = vsel %vm578, %v724, %v725
      %v727 = vrot.slane %v337, 1
      %v728 = vrot.slane %v338, 1
      %v729 = vsel %vm578, %v727, %v728
      %v730 = vrot.slane %v339, 1
      %v731 = vrot.slane %v340, 1
      %v732 = vsel %vm578, %v730, %v731
      %v733 = vrot.slane %v341, 1
      %v734 = vrot.slane %v342, 1
      %v735 = vsel %vm578, %v733, %v734
      %v736 = vrot.slane %v343, 1
      %v737 = vrot.slane %v344, 1
      %v738 = vsel %vm578, %v736, %v737
      %v739 = vrot.slane %v345, 1
      %v740 = vrot.slane %v346, 1
      %v741 = vsel %vm578, %v739, %v740
      %v742 = vrot.slane %v347, 1
      %v743 = vrot.slane %v348, 1
      %v744 = vsel %vm578, %v742, %v743
      %v753 = vpack.c.bf16 %v726, %v723
      %v754 = vpack.c.bf16 %v732, %v729
      %v755 = vpack.c.bf16 %v738, %v735
      %v756 = vpack.c.bf16 %v744, %v741
      %s757 = scalar_lea.vmem %s4, 6
      %v758 = vld [vmem:[%s757] sm:$0x3]
      %v760 = vsel %vm400, %v753, 0
      %v763 = vsel %vm400, %v754, 0
      %v766 = vsel %vm400, %v755, 0
      %v769 = vsel %vm400, %v756, 0
      %v772 = vsel %vm413, %v758, 0
      %774 = vmatprep.subr.bf16.mxu0 0
      %775 = vmatpush1.bf16.msra.mxu0 %v772
      %776 = vmatprep.subr.bf16.mxu0 0
      %777 = vmatpush1.bf16.msra.mxu0 0
      %778 = vmatprep.subr.bf16.mxu0 0
      %779 = vmatpush1.bf16.msra.mxu0 0
      %780 = vmatprep.subr.bf16.mxu0 0
      %781 = vmatpush1.bf16.msra.mxu0 0
      %782 = vmatprep.subr.bf16.mxu0 0
      %783 = vmatpush1.bf16.msra.mxu0 0
      %784 = vmatprep.subr.bf16.mxu0 0
      %785 = vmatpush1.bf16.msra.mxu0 0
      %786 = vmatprep.subr.bf16.mxu0 0
      %787 = vmatpush1.bf16.msra.mxu0 0
      %788 = vmatprep.subr.bf16.mxu0 0
      %789 = vmatpush1.bf16.msra.mxu0 0
      %790 = vmatprep.subr.bf16.mxu0 0
      %791 = vmatpush1.bf16.msra.mxu0 0
      %792 = vmatprep.subr.bf16.mxu0 0
      %793 = vmatpush1.bf16.msra.mxu0 0
      %794 = vmatprep.subr.bf16.mxu0 0
      %795 = vmatpush1.bf16.msra.mxu0 0
      %796 = vmatprep.subr.bf16.mxu0 0
      %797 = vmatpush1.bf16.msra.mxu0 0
      %798 = vmatprep.subr.bf16.mxu0 0
      %799 = vmatpush1.bf16.msra.mxu0 0
      %800 = vmatprep.subr.bf16.mxu0 0
      %801 = vmatpush1.bf16.msra.mxu0 0
      %802 = vmatprep.subr.bf16.mxu0 0
      %803 = vmatpush1.bf16.msra.mxu0 0
      %804 = vmatprep.subr.bf16.mxu0 0
      %805 = vmatpush1.bf16.msra.mxu0 0
      %806 = vmatprep.mubr.bf16.mxu0 0
      %807 = vmatmul.mubr.bf16.gmra.mrb[0].mxu0 %v760
      %v808 = vpop.f32.mrb[0].mxu0
      %v809 = vadd.f32 0.0, %v808
      %v810 = vpop.f32.mrb[0].mxu0
      %v811 = vpop.f32.mrb[0].mxu0
      %v812 = vadd.f32 0.0, %v811
      %v813 = vpop.f32.mrb[0].mxu0
      %814 = vmatprep.mubr.bf16.mxu0 0
      %815 = vmatmul.mubr.bf16.gmra.mrb[0].mxu0 %v763
      %v816 = vpop.f32.mrb[0].mxu0
      %v817 = vadd.f32 0.0, %v816
      %v818 = vpop.f32.mrb[0].mxu0
      %v819 = vpop.f32.mrb[0].mxu0
      %v820 = vadd.f32 0.0, %v819
      %v821 = vpop.f32.mrb[0].mxu0
      %822 = vmatprep.mubr.bf16.mxu0 0
      %823 = vmatmul.mubr.bf16.gmra.mrb[0].mxu0 %v766
      %v824 = vpop.f32.mrb[0].mxu0
      %v825 = vadd.f32 0.0, %v824
      %v826 = vpop.f32.mrb[0].mxu0
      %v827 = vpop.f32.mrb[0].mxu0
      %v828 = vadd.f32 0.0, %v827
      %v829 = vpop.f32.mrb[0].mxu0
      %830 = vmatprep.mubr.bf16.mxu0 0
      %831 = vmatmul.mubr.bf16.gmra.mrb[0].mxu0 %v769
      %v832 = vpop.f32.mrb[0].mxu0
      %v833 = vadd.f32 0.0, %v832
      %v834 = vpop.f32.mrb[0].mxu0
      %v835 = vpop.f32.mrb[0].mxu0
      %v836 = vadd.f32 0.0, %v835
      %v837 = vpop.f32.mrb[0].mxu0
      %838 = vdwg.mxu0
      %v839 = vadd.f32 %v697, %v809
      %v840 = vadd.f32 %v698, %v812
      %v841 = vadd.f32 %v699, %v817
      %v842 = vadd.f32 %v700, %v820
      %v843 = vadd.f32 %v701, %v825
      %v844 = vadd.f32 %v702, %v828
      %v845 = vadd.f32 %v703, %v833
      %v846 = vadd.f32 %v704, %v836
      %vm847 = vcmask 1045504
      %v848 = vrot.slane %v313, 2
      %v849 = vrot.slane %v314, 2
      %v850 = vsel %vm847, %v848, %v849
      %v851 = vrot.slane %v315, 2
      %v852 = vrot.slane %v316, 2
      %v853 = vsel %vm847, %v851, %v852
      %v854 = vrot.slane %v317, 2
      %v855 = vrot.slane %v318, 2
      %v856 = vsel %vm847, %v854, %v855
      %v857 = vrot.slane %v319, 2
      %v858 = vrot.slane %v320, 2
      %v859 = vsel %vm847, %v857, %v858
      %v860 = vrot.slane %v321, 2
      %v861 = vrot.slane %v322, 2
      %v862 = vsel %vm847, %v860, %v861
      %v863 = vrot.slane %v323, 2
      %v864 = vrot.slane %v324, 2
      %v865 = vsel %vm847, %v863, %v864
      %v866 = vrot.slane %v325, 2
      %v867 = vrot.slane %v326, 2
      %v868 = vsel %vm847, %v866, %v867
      %v869 = vrot.slane %v327, 2
      %v870 = vrot.slane %v328, 2
      %v871 = vsel %vm847, %v869, %v870
      %v880 = vpack.c.bf16 %v853, %v850
      %v881 = vpack.c.bf16 %v859, %v856
      %v882 = vpack.c.bf16 %v865, %v862
      %v883 = vpack.c.bf16 %v871, %v868
      %s884 = scalar_lea.vmem %s4, 8
      %v885 = vld [vmem:[%s884] sm:$0x3]
      %v887 = vsel %vm400, %v880, 0
      %v890 = vsel %vm400, %v881, 0
      %v893 = vsel %vm400, %v882, 0
      %v896 = vsel %vm400, %v883, 0
      %v899 = vsel %vm413, %v885, 0
      %901 = vmatprep.subr.bf16.mxu0 0
      %902 = vmatpush1.bf16.msra.mxu0 %v899
      %903 = vmatprep.subr.bf16.mxu0 0
      %904 = vmatpush1.bf16.msra.mxu0 0
      %905 = vmatprep.subr.bf16.mxu0 0
      %906 = vmatpush1.bf16.msra.mxu0 0
      %907 = vmatprep.subr.bf16.mxu0 0
      %908 = vmatpush1.bf16.msra.mxu0 0
      %909 = vmatprep.subr.bf16.mxu0 0
      %910 = vmatpush1.bf16.msra.mxu0 0
      %911 = vmatprep.subr.bf16.mxu0 0
      %912 = vmatpush1.bf16.msra.mxu0 0
      %913 = vmatprep.subr.bf16.mxu0 0
      %914 = vmatpush1.bf16.msra.mxu0 0
      %915 = vmatprep.subr.bf16.mxu0 0
      %916 = vmatpush1.bf16.msra.mxu0 0
      %917 = vmatprep.subr.bf16.mxu0 0
      %918 = vmatpush1.bf16.msra.mxu0 0
      %919 = vmatprep.subr.bf16.mxu0 0
      %920 = vmatpush1.bf16.msra.mxu0 0
      %921 = vmatprep.subr.bf16.mxu0 0
      %922 = vmatpush1.bf16.msra.mxu0 0
      %923 = vmatprep.subr.bf16.mxu0 0
      %924 = vmatpush1.bf16.msra.mxu0 0
      %925 = vmatprep.subr.bf16.mxu0 0
      %926 = vmatpush1.bf16.msra.mxu0 0
      %927 = vmatprep.subr.bf16.mxu0 0
      %928 = vmatpush1.bf16.msra.mxu0 0
      %929 = vmatprep.subr.bf16.mxu0 0
      %930 = vmatpush1.bf16.msra.mxu0 0
      %931 = vmatprep.subr.bf16.mxu0 0
      %932 = vmatpush1.bf16.msra.mxu0 0
      %933 = vmatprep.mubr.bf16.mxu0 0
      %934 = vmatmul.mubr.bf16.gmra.mrb[0].mxu0 %v887
      %v935 = vpop.f32.mrb[0].mxu0
      %v936 = vadd.f32 0.0, %v935
      %v937 = vpop.f32.mrb[0].mxu0
      %v938 = vpop.f32.mrb[0].mxu0
      %v939 = vadd.f32 0.0, %v938
      %v940 = vpop.f32.mrb[0].mxu0
      %941 = vmatprep.mubr.bf16.mxu0 0
      %942 = vmatmul.mubr.bf16.gmra.mrb[0].mxu0 %v890
      %v943 = vpop.f32.mrb[0].mxu0
      %v944 = vadd.f32 0.0, %v943
      %v945 = vpop.f32.mrb[0].mxu0
      %v946 = vpop.f32.mrb[0].mxu0
      %v947 = vadd.f32 0.0, %v946
      %v948 = vpop.f32.mrb[0].mxu0
      %949 = vmatprep.mubr.bf16.mxu0 0
      %950 = vmatmul.mubr.bf16.gmra.mrb[0].mxu0 %v893
      %v951 = vpop.f32.mrb[0].mxu0
      %v952 = vadd.f32 0.0, %v951
      %v953 = vpop.f32.mrb[0].mxu0
      %v954 = vpop.f32.mrb[0].mxu0
      %v955 = vadd.f32 0.0, %v954
      %v956 = vpop.f32.mrb[0].mxu0
      %957 = vmatprep.mubr.bf16.mxu0 0
      %958 = vmatmul.mubr.bf16.gmra.mrb[0].mxu0 %v896
      %v959 = vpop.f32.mrb[0].mxu0
      %v960 = vadd.f32 0.0, %v959
      %v961 = vpop.f32.mrb[0].mxu0
      %v962 = vpop.f32.mrb[0].mxu0
      %v963 = vadd.f32 0.0, %v962
      %v964 = vpop.f32.mrb[0].mxu0
      %965 = vdwg.mxu0
      %v966 = vadd.f32 %v839, %v936
      %v967 = vadd.f32 %v840, %v939
      %v968 = vadd.f32 %v841, %v944
      %v969 = vadd.f32 %v842, %v947
      %v970 = vadd.f32 %v843, %v952
      %v971 = vadd.f32 %v844, %v955
      %v972 = vadd.f32 %v845, %v960
      %v973 = vadd.f32 %v846, %v963
      %v974 = vpack.c.bf16 %v355, %v353
      %v975 = vpack.c.bf16 %v359, %v357
      %v976 = vpack.c.bf16 %v363, %v361
      %v977 = vpack.c.bf16 %v367, %v365
      %s978 = scalar_lea.vmem %s4, 10
      %v979 = vld [vmem:[%s978] sm:$0x3]
      %v981 = vsel %vm400, %v974, 0
      %v984 = vsel %vm400, %v975, 0
      %v987 = vsel %vm400, %v976, 0
      %v990 = vsel %vm400, %v977, 0
      %v993 = vsel %vm413, %v979, 0
      %995 = vmatprep.subr.bf16.mxu0 0
      %996 = vmatpush1.bf16.msra.mxu0 %v993
      %997 = vmatprep.subr.bf16.mxu0 0
      %998 = vmatpush1.bf16.msra.mxu0 0
      %999 = vmatprep.subr.bf16.mxu0 0
      %1000 = vmatpush1.bf16.msra.mxu0 0
      %1001 = vmatprep.subr.bf16.mxu0 0
      %1002 = vmatpush1.bf16.msra.mxu0 0
      %1003 = vmatprep.subr.bf16.mxu0 0
      %1004 = vmatpush1.bf16.msra.mxu0 0
      %1005 = vmatprep.subr.bf16.mxu0 0
      %1006 = vmatpush1.bf16.msra.mxu0 0
      %1007 = vmatprep.subr.bf16.mxu0 0
      %1008 = vmatpush1.bf16.msra.mxu0 0
      %1009 = vmatprep.subr.bf16.mxu0 0
      %1010 = vmatpush1.bf16.msra.mxu0 0
      %1011 = vmatprep.subr.bf16.mxu0 0
      %1012 = vmatpush1.bf16.msra.mxu0 0
      %1013 = vmatprep.subr.bf16.mxu0 0
      %1014 = vmatpush1.bf16.msra.mxu0 0
      %1015 = vmatprep.subr.bf16.mxu0 0
      %1016 = vmatpush1.bf16.msra.mxu0 0
      %1017 = vmatprep.subr.bf16.mxu0 0
      %1018 = vmatpush1.bf16.msra.mxu0 0
      %1019 = vmatprep.subr.bf16.mxu0 0
      %1020 = vmatpush1.bf16.msra.mxu0 0
      %1021 = vmatprep.subr.bf16.mxu0 0
      %1022 = vmatpush1.bf16.msra.mxu0 0
      %1023 = vmatprep.subr.bf16.mxu0 0
      %1024 = vmatpush1.bf16.msra.mxu0 0
      %1025 = vmatprep.subr.bf16.mxu0 0
      %1026 = vmatpush1.bf16.msra.mxu0 0
      %1027 = vmatprep.mubr.bf16.mxu0 0
      %1028 = vmatmul.mubr.bf16.gmra.mrb[0].mxu0 %v981
      %v1029 = vpop.f32.mrb[0].mxu0
      %v1030 = vadd.f32 0.0, %v1029
      %v1031 = vpop.f32.mrb[0].mxu0
      %v1032 = vpop.f32.mrb[0].mxu0
      %v1033 = vadd.f32 0.0, %v1032
      %v1034 = vpop.f32.mrb[0].mxu0
      %1035 = vmatprep.mubr.bf16.mxu0 0
      %1036 = vmatmul.mubr.bf16.gmra.mrb[0].mxu0 %v984
      %v1037 = vpop.f32.mrb[0].mxu0
      %v1038 = vadd.f32 0.0, %v1037
      %v1039 = vpop.f32.mrb[0].mxu0
      %v1040 = vpop.f32.mrb[0].mxu0
      %v1041 = vadd.f32 0.0, %v1040
      %v1042 = vpop.f32.mrb[0].mxu0
      %1043 = vmatprep.mubr.bf16.mxu0 0
      %1044 = vmatmul.mubr.bf16.gmra.mrb[0].mxu0 %v987
      %v1045 = vpop.f32.mrb[0].mxu0
      %v1046 = vadd.f32 0.0, %v1045
      %v1047 = vpop.f32.mrb[0].mxu0
      %v1048 = vpop.f32.mrb[0].mxu0
      %v1049 = vadd.f32 0.0, %v1048
      %v1050 = vpop.f32.mrb[0].mxu0
      %1051 = vmatprep.mubr.bf16.mxu0 0
      %1052 = vmatmul.mubr.bf16.gmra.mrb[0].mxu0 %v990
      %v1053 = vpop.f32.mrb[0].mxu0
      %v1054 = vadd.f32 0.0, %v1053
      %v1055 = vpop.f32.mrb[0].mxu0
      %v1056 = vpop.f32.mrb[0].mxu0
      %v1057 = vadd.f32 0.0, %v1056
      %v1058 = vpop.f32.mrb[0].mxu0
      %1059 = vdwg.mxu0
      %v1060 = vadd.f32 %v966, %v1030
      %v1061 = vadd.f32 %v967, %v1033
      %v1062 = vadd.f32 %v968, %v1038
      %v1063 = vadd.f32 %v969, %v1041
      %v1064 = vadd.f32 %v970, %v1046
      %v1065 = vadd.f32 %v971, %v1049
      %v1066 = vadd.f32 %v972, %v1054
      %v1067 = vadd.f32 %v973, %v1057
      %v1068 = vpack.c.bf16 %v373, %v371
      %v1069 = vpack.c.bf16 %v377, %v375
      %v1070 = vpack.c.bf16 %v381, %v379
      %v1071 = vpack.c.bf16 %v385, %v383
      %s1072 = scalar_lea.vmem %s4, 12
      %v1073 = vld [vmem:[%s1072] sm:$0x3]
      %v1075 = vsel %vm400, %v1068, 0
      %v1078 = vsel %vm400, %v1069, 0
      %v1081 = vsel %vm400, %v1070, 0
      %v1084 = vsel %vm400, %v1071, 0
      %v1087 = vsel %vm413, %v1073, 0
      %1089 = vmatprep.subr.bf16.mxu0 0
      %1090 = vmatpush1.bf16.msra.mxu0 %v1087
      %1091 = vmatprep.subr.bf16.mxu0 0
      %1092 = vmatpush1.bf16.msra.mxu0 0
      %1093 = vmatprep.subr.bf16.mxu0 0
      %1094 = vmatpush1.bf16.msra.mxu0 0
      %1095 = vmatprep.subr.bf16.mxu0 0
      %1096 = vmatpush1.bf16.msra.mxu0 0
      %1097 = vmatprep.subr.bf16.mxu0 0
      %1098 = vmatpush1.bf16.msra.mxu0 0
      %1099 = vmatprep.subr.bf16.mxu0 0
      %1100 = vmatpush1.bf16.msra.mxu0 0
      %1101 = vmatprep.subr.bf16.mxu0 0
      %1102 = vmatpush1.bf16.msra.mxu0 0
      %1103 = vmatprep.subr.bf16.mxu0 0
      %1104 = vmatpush1.bf16.msra.mxu0 0
      %1105 = vmatprep.subr.bf16.mxu0 0
      %1106 = vmatpush1.bf16.msra.mxu0 0
      %1107 = vmatprep.subr.bf16.mxu0 0
      %1108 = vmatpush1.bf16.msra.mxu0 0
      %1109 = vmatprep.subr.bf16.mxu0 0
      %1110 = vmatpush1.bf16.msra.mxu0 0
      %1111 = vmatprep.subr.bf16.mxu0 0
      %1112 = vmatpush1.bf16.msra.mxu0 0
      %1113 = vmatprep.subr.bf16.mxu0 0
      %1114 = vmatpush1.bf16.msra.mxu0 0
      %1115 = vmatprep.subr.bf16.mxu0 0
      %1116 = vmatpush1.bf16.msra.mxu0 0
      %1117 = vmatprep.subr.bf16.mxu0 0
      %1118 = vmatpush1.bf16.msra.mxu0 0
      %1119 = vmatprep.subr.bf16.mxu0 0
      %1120 = vmatpush1.bf16.msra.mxu0 0
      %1121 = vmatprep.mubr.bf16.mxu0 0
      %1122 = vmatmul.mubr.bf16.gmra.mrb[0].mxu0 %v1075
      %v1123 = vpop.f32.mrb[0].mxu0
      %v1124 = vadd.f32 0.0, %v1123
      %v1125 = vpop.f32.mrb[0].mxu0
      %v1126 = vpop.f32.mrb[0].mxu0
      %v1127 = vadd.f32 0.0, %v1126
      %v1128 = vpop.f32.mrb[0].mxu0
      %1129 = vmatprep.mubr.bf16.mxu0 0
      %1130 = vmatmul.mubr.bf16.gmra.mrb[0].mxu0 %v1078
      %v1131 = vpop.f32.mrb[0].mxu0
      %v1132 = vadd.f32 0.0, %v1131
      %v1133 = vpop.f32.mrb[0].mxu0
      %v1134 = vpop.f32.mrb[0].mxu0
      %v1135 = vadd.f32 0.0, %v1134
      %v1136 = vpop.f32.mrb[0].mxu0
      %1137 = vmatprep.mubr.bf16.mxu0 0
      %1138 = vmatmul.mubr.bf16.gmra.mrb[0].mxu0 %v1081
      %v1139 = vpop.f32.mrb[0].mxu0
      %v1140 = vadd.f32 0.0, %v1139
      %v1141 = vpop.f32.mrb[0].mxu0
      %v1142 = vpop.f32.mrb[0].mxu0
      %v1143 = vadd.f32 0.0, %v1142
      %v1144 = vpop.f32.mrb[0].mxu0
      %1145 = vmatprep.mubr.bf16.mxu0 0
      %1146 = vmatmul.mubr.bf16.gmra.mrb[0].mxu0 %v1084
      %v1147 = vpop.f32.mrb[0].mxu0
      %v1148 = vadd.f32 0.0, %v1147
      %v1149 = vpop.f32.mrb[0].mxu0
      %v1150 = vpop.f32.mrb[0].mxu0
      %v1151 = vadd.f32 0.0, %v1150
      %v1152 = vpop.f32.mrb[0].mxu0
      %1153 = vdwg.mxu0
      %v1154 = vadd.f32 %v1060, %v1124
      %v1155 = vadd.f32 %v1061, %v1127
      %v1156 = vadd.f32 %v1062, %v1132
      %v1157 = vadd.f32 %v1063, %v1135
      %v1158 = vadd.f32 %v1064, %v1140
      %v1159 = vadd.f32 %v1065, %v1143
      %v1160 = vadd.f32 %v1066, %v1148
      %v1161 = vadd.f32 %v1067, %v1151
      %v1178 = vrot.slane %v353, 1
      %v1179 = vrot.slane %v354, 1
      %v1180 = vsel %vm578, %v1178, %v1179
      %v1181 = vrot.slane %v355, 1
      %v1182 = vrot.slane %v356, 1
      %v1183 = vsel %vm578, %v1181, %v1182
      %v1184 = vrot.slane %v357, 1
      %v1185 = vrot.slane %v358, 1
      %v1186 = vsel %vm578, %v1184, %v1185
      %v1187 = vrot.slane %v359, 1
      %v1188 = vrot.slane %v360, 1
      %v1189 = vsel %vm578, %v1187, %v1188
      %v1190 = vrot.slane %v361, 1
      %v1191 = vrot.slane %v362, 1
      %v1192 = vsel %vm578, %v1190, %v1191
      %v1193 = vrot.slane %v363, 1
      %v1194 = vrot.slane %v364, 1
      %v1195 = vsel %vm578, %v1193, %v1194
      %v1196 = vrot.slane %v365, 1
      %v1197 = vrot.slane %v366, 1
      %v1198 = vsel %vm578, %v1196, %v1197
      %v1199 = vrot.slane %v367, 1
      %v1200 = vrot.slane %v368, 1
      %v1201 = vsel %vm578, %v1199, %v1200
      %v1210 = vpack.c.bf16 %v1183, %v1180
      %v1211 = vpack.c.bf16 %v1189, %v1186
      %v1212 = vpack.c.bf16 %v1195, %v1192
      %v1213 = vpack.c.bf16 %v1201, %v1198
      %s1214 = scalar_lea.vmem %s4, 14
      %v1215 = vld [vmem:[%s1214] sm:$0x3]
      %v1217 = vsel %vm400, %v1210, 0
      %v1220 = vsel %vm400, %v1211, 0
      %v1223 = vsel %vm400, %v1212, 0
      %v1226 = vsel %vm400, %v1213, 0
      %v1229 = vsel %vm413, %v1215, 0
      %1231 = vmatprep.subr.bf16.mxu0 0
      %1232 = vmatpush1.bf16.msra.mxu0 %v1229
      %1233 = vmatprep.subr.bf16.mxu0 0
      %1234 = vmatpush1.bf16.msra.mxu0 0
      %1235 = vmatprep.subr.bf16.mxu0 0
      %1236 = vmatpush1.bf16.msra.mxu0 0
      %1237 = vmatprep.subr.bf16.mxu0 0
      %1238 = vmatpush1.bf16.msra.mxu0 0
      %1239 = vmatprep.subr.bf16.mxu0 0
      %1240 = vmatpush1.bf16.msra.mxu0 0
      %1241 = vmatprep.subr.bf16.mxu0 0
      %1242 = vmatpush1.bf16.msra.mxu0 0
      %1243 = vmatprep.subr.bf16.mxu0 0
      %1244 = vmatpush1.bf16.msra.mxu0 0
      %1245 = vmatprep.subr.bf16.mxu0 0
      %1246 = vmatpush1.bf16.msra.mxu0 0
      %1247 = vmatprep.subr.bf16.mxu0 0
      %1248 = vmatpush1.bf16.msra.mxu0 0
      %1249 = vmatprep.subr.bf16.mxu0 0
      %1250 = vmatpush1.bf16.msra.mxu0 0
      %1251 = vmatprep.subr.bf16.mxu0 0
      %1252 = vmatpush1.bf16.msra.mxu0 0
      %1253 = vmatprep.subr.bf16.mxu0 0
      %1254 = vmatpush1.bf16.msra.mxu0 0
      %1255 = vmatprep.subr.bf16.mxu0 0
      %1256 = vmatpush1.bf16.msra.mxu0 0
      %1257 = vmatprep.subr.bf16.mxu0 0
      %1258 = vmatpush1.bf16.msra.mxu0 0
      %1259 = vmatprep.subr.bf16.mxu0 0
      %1260 = vmatpush1.bf16.msra.mxu0 0
      %1261 = vmatprep.subr.bf16.mxu0 0
      %1262 = vmatpush1.bf16.msra.mxu0 0
      %1263 = vmatprep.mubr.bf16.mxu0 0
      %1264 = vmatmul.mubr.bf16.gmra.mrb[0].mxu0 %v1217
      %v1265 = vpop.f32.mrb[0].mxu0
      %v1266 = vadd.f32 0.0, %v1265
      %v1267 = vpop.f32.mrb[0].mxu0
      %v1268 = vpop.f32.mrb[0].mxu0
      %v1269 = vadd.f32 0.0, %v1268
      %v1270 = vpop.f32.mrb[0].mxu0
      %1271 = vmatprep.mubr.bf16.mxu0 0
      %1272 = vmatmul.mubr.bf16.gmra.mrb[0].mxu0 %v1220
      %v1273 = vpop.f32.mrb[0].mxu0
      %v1274 = vadd.f32 0.0, %v1273
      %v1275 = vpop.f32.mrb[0].mxu0
      %v1276 = vpop.f32.mrb[0].mxu0
      %v1277 = vadd.f32 0.0, %v1276
      %v1278 = vpop.f32.mrb[0].mxu0
      %1279 = vmatprep.mubr.bf16.mxu0 0
      %1280 = vmatmul.mubr.bf16.gmra.mrb[0].mxu0 %v1223
      %v1281 = vpop.f32.mrb[0].mxu0
      %v1282 = vadd.f32 0.0, %v1281
      %v1283 = vpop.f32.mrb[0].mxu0
      %v1284 = vpop.f32.mrb[0].mxu0
      %v1285 = vadd.f32 0.0, %v1284
      %v1286 = vpop.f32.mrb[0].mxu0
      %1287 = vmatprep.mubr.bf16.mxu0 0
      %1288 = vmatmul.mubr.bf16.gmra.mrb[0].mxu0 %v1226
      %v1289 = vpop.f32.mrb[0].mxu0
      %v1290 = vadd.f32 0.0, %v1289
      %v1291 = vpop.f32.mrb[0].mxu0
      %v1292 = vpop.f32.mrb[0].mxu0
      %v1293 = vadd.f32 0.0, %v1292
      %v1294 = vpop.f32.mrb[0].mxu0
      %1295 = vdwg.mxu0
      %v1296 = vadd.f32 %v1154, %v1266
      %v1297 = vadd.f32 %v1155, %v1269
      %v1298 = vadd.f32 %v1156, %v1274
      %v1299 = vadd.f32 %v1157, %v1277
      %v1300 = vadd.f32 %v1158, %v1282
      %v1301 = vadd.f32 %v1159, %v1285
      %v1302 = vadd.f32 %v1160, %v1290
      %v1303 = vadd.f32 %v1161, %v1293
      %v1320 = vrot.slane %v371, 1
      %v1321 = vrot.slane %v372, 1
      %v1322 = vsel %vm578, %v1320, %v1321
      %v1323 = vrot.slane %v373, 1
      %v1324 = vrot.slane %v374, 1
      %v1325 = vsel %vm578, %v1323, %v1324
      %v1326 = vrot.slane %v375, 1
      %v1327 = vrot.slane %v376, 1
      %v1328 = vsel %vm578, %v1326, %v1327
      %v1329 = vrot.slane %v377, 1
      %v1330 = vrot.slane %v378, 1
      %v1331 = vsel %vm578, %v1329, %v1330
      %v1332 = vrot.slane %v379, 1
      %v1333 = vrot.slane %v380, 1
      %v1334 = vsel %vm578, %v1332, %v1333
      %v1335 = vrot.slane %v381, 1
      %v1336 = vrot.slane %v382, 1
      %v1337 = vsel %vm578, %v1335, %v1336
      %v1338 = vrot.slane %v383, 1
      %v1339 = vrot.slane %v384, 1
      %v1340 = vsel %vm578, %v1338, %v1339
      %v1341 = vrot.slane %v385, 1
      %v1342 = vrot.slane %v386, 1
      %v1343 = vsel %vm578, %v1341, %v1342
      %v1352 = vpack.c.bf16 %v1325, %v1322
      %v1353 = vpack.c.bf16 %v1331, %v1328
      %v1354 = vpack.c.bf16 %v1337, %v1334
      %v1355 = vpack.c.bf16 %v1343, %v1340
      %s1356 = scalar_lea.vmem %s4, 16
      %v1357 = vld [vmem:[%s1356] sm:$0x3]
      %v1359 = vsel %vm400, %v1352, 0
      %v1362 = vsel %vm400, %v1353, 0
      %v1365 = vsel %vm400, %v1354, 0
      %v1368 = vsel %vm400, %v1355, 0
      %v1371 = vsel %vm413, %v1357, 0
      %1373 = vmatprep.subr.bf16.mxu0 0
      %1374 = vmatpush1.bf16.msra.mxu0 %v1371
      %1375 = vmatprep.subr.bf16.mxu0 0
      %1376 = vmatpush1.bf16.msra.mxu0 0
      %1377 = vmatprep.subr.bf16.mxu0 0
      %1378 = vmatpush1.bf16.msra.mxu0 0
      %1379 = vmatprep.subr.bf16.mxu0 0
      %1380 = vmatpush1.bf16.msra.mxu0 0
      %1381 = vmatprep.subr.bf16.mxu0 0
      %1382 = vmatpush1.bf16.msra.mxu0 0
      %1383 = vmatprep.subr.bf16.mxu0 0
      %1384 = vmatpush1.bf16.msra.mxu0 0
      %1385 = vmatprep.subr.bf16.mxu0 0
      %1386 = vmatpush1.bf16.msra.mxu0 0
      %1387 = vmatprep.subr.bf16.mxu0 0
      %1388 = vmatpush1.bf16.msra.mxu0 0
      %1389 = vmatprep.subr.bf16.mxu0 0
      %1390 = vmatpush1.bf16.msra.mxu0 0
      %1391 = vmatprep.subr.bf16.mxu0 0
      %1392 = vmatpush1.bf16.msra.mxu0 0
      %1393 = vmatprep.subr.bf16.mxu0 0
      %1394 = vmatpush1.bf16.msra.mxu0 0
      %1395 = vmatprep.subr.bf16.mxu0 0
      %1396 = vmatpush1.bf16.msra.mxu0 0
      %1397 = vmatprep.subr.bf16.mxu0 0
      %1398 = vmatpush1.bf16.msra.mxu0 0
      %1399 = vmatprep.subr.bf16.mxu0 0
      %1400 = vmatpush1.bf16.msra.mxu0 0
      %1401 = vmatprep.subr.bf16.mxu0 0
      %1402 = vmatpush1.bf16.msra.mxu0 0
      %1403 = vmatprep.subr.bf16.mxu0 0
      %1404 = vmatpush1.bf16.msra.mxu0 0
      %1405 = vmatprep.mubr.bf16.mxu0 0
      %1406 = vmatmul.mubr.bf16.gmra.mrb[0].mxu0 %v1359
      %v1407 = vpop.f32.mrb[0].mxu0
      %v1408 = vadd.f32 0.0, %v1407
      %v1409 = vpop.f32.mrb[0].mxu0
      %v1410 = vpop.f32.mrb[0].mxu0
      %v1411 = vadd.f32 0.0, %v1410
      %v1412 = vpop.f32.mrb[0].mxu0
      %1413 = vmatprep.mubr.bf16.mxu0 0
      %1414 = vmatmul.mubr.bf16.gmra.mrb[0].mxu0 %v1362
      %v1415 = vpop.f32.mrb[0].mxu0
      %v1416 = vadd.f32 0.0, %v1415
      %v1417 = vpop.f32.mrb[0].mxu0
      %v1418 = vpop.f32.mrb[0].mxu0
      %v1419 = vadd.f32 0.0, %v1418
      %v1420 = vpop.f32.mrb[0].mxu0
      %1421 = vmatprep.mubr.bf16.mxu0 0
      %1422 = vmatmul.mubr.bf16.gmra.mrb[0].mxu0 %v1365
      %v1423 = vpop.f32.mrb[0].mxu0
      %v1424 = vadd.f32 0.0, %v1423
      %v1425 = vpop.f32.mrb[0].mxu0
      %v1426 = vpop.f32.mrb[0].mxu0
      %v1427 = vadd.f32 0.0, %v1426
      %v1428 = vpop.f32.mrb[0].mxu0
      %1429 = vmatprep.mubr.bf16.mxu0 0
      %1430 = vmatmul.mubr.bf16.gmra.mrb[0].mxu0 %v1368
      %v1431 = vpop.f32.mrb[0].mxu0
      %v1432 = vadd.f32 0.0, %v1431
      %v1433 = vpop.f32.mrb[0].mxu0
      %v1434 = vpop.f32.mrb[0].mxu0
      %v1435 = vadd.f32 0.0, %v1434
      %v1436 = vpop.f32.mrb[0].mxu0
      %1437 = vdwg.mxu0
      %v1438 = vadd.f32 %v1296, %v1408
      %v1439 = vadd.f32 %v1297, %v1411
      %v1440 = vadd.f32 %v1298, %v1416
      %v1441 = vadd.f32 %v1299, %v1419
      %v1442 = vadd.f32 %v1300, %v1424
      %v1443 = vadd.f32 %v1301, %v1427
      %v1444 = vadd.f32 %v1302, %v1432
      %v1445 = vadd.f32 %v1303, %v1435
      %v1446 = vrot.slane %v353, 2
      %v1447 = vrot.slane %v354, 2
      %v1448 = vsel %vm847, %v1446, %v1447
      %v1449 = vrot.slane %v355, 2
      %v1450 = vrot.slane %v356, 2
      %v1451 = vsel %vm847, %v1449, %v1450
      %v1452 = vrot.slane %v357, 2
      %v1453 = vrot.slane %v358, 2
      %v1454 = vsel %vm847, %v1452, %v1453
      %v1455 = vrot.slane %v359, 2
      %v1456 = vrot.slane %v360, 2
      %v1457 = vsel %vm847, %v1455, %v1456
      %v1458 = vrot.slane %v361, 2
      %v1459 = vrot.slane %v362, 2
      %v1460 = vsel %vm847, %v1458, %v1459
      %v1461 = vrot.slane %v363, 2
      %v1462 = vrot.slane %v364, 2
      %v1463 = vsel %vm847, %v1461, %v1462
      %v1464 = vrot.slane %v365, 2
      %v1465 = vrot.slane %v366, 2
      %v1466 = vsel %vm847, %v1464, %v1465
      %v1467 = vrot.slane %v367, 2
      %v1468 = vrot.slane %v368, 2
      %v1469 = vsel %vm847, %v1467, %v1468
      %v1478 = vpack.c.bf16 %v1451, %v1448
      %v1479 = vpack.c.bf16 %v1457, %v1454
      %v1480 = vpack.c.bf16 %v1463, %v1460
      %v1481 = vpack.c.bf16 %v1469, %v1466
      %s1482 = scalar_lea.vmem %s4, 18
      %v1483 = vld [vmem:[%s1482] sm:$0x3]
      %v1485 = vsel %vm400, %v1478, 0
      %v1488 = vsel %vm400, %v1479, 0
      %v1491 = vsel %vm400, %v1480, 0
      %v1494 = vsel %vm400, %v1481, 0
      %v1497 = vsel %vm413, %v1483, 0
      %1499 = vmatprep.subr.bf16.mxu0 0
      %1500 = vmatpush1.bf16.msra.mxu0 %v1497
      %1501 = vmatprep.subr.bf16.mxu0 0
      %1502 = vmatpush1.bf16.msra.mxu0 0
      %1503 = vmatprep.subr.bf16.mxu0 0
      %1504 = vmatpush1.bf16.msra.mxu0 0
      %1505 = vmatprep.subr.bf16.mxu0 0
      %1506 = vmatpush1.bf16.msra.mxu0 0
      %1507 = vmatprep.subr.bf16.mxu0 0
      %1508 = vmatpush1.bf16.msra.mxu0 0
      %1509 = vmatprep.subr.bf16.mxu0 0
      %1510 = vmatpush1.bf16.msra.mxu0 0
      %1511 = vmatprep.subr.bf16.mxu0 0
      %1512 = vmatpush1.bf16.msra.mxu0 0
      %1513 = vmatprep.subr.bf16.mxu0 0
      %1514 = vmatpush1.bf16.msra.mxu0 0
      %1515 = vmatprep.subr.bf16.mxu0 0
      %1516 = vmatpush1.bf16.msra.mxu0 0
      %1517 = vmatprep.subr.bf16.mxu0 0
      %1518 = vmatpush1.bf16.msra.mxu0 0
      %1519 = vmatprep.subr.bf16.mxu0 0
      %1520 = vmatpush1.bf16.msra.mxu0 0
      %1521 = vmatprep.subr.bf16.mxu0 0
      %1522 = vmatpush1.bf16.msra.mxu0 0
      %1523 = vmatprep.subr.bf16.mxu0 0
      %1524 = vmatpush1.bf16.msra.mxu0 0
      %1525 = vmatprep.subr.bf16.mxu0 0
      %1526 = vmatpush1.bf16.msra.mxu0 0
      %1527 = vmatprep.subr.bf16.mxu0 0
      %1528 = vmatpush1.bf16.msra.mxu0 0
      %1529 = vmatprep.subr.bf16.mxu0 0
      %1530 = vmatpush1.bf16.msra.mxu0 0
      %1531 = vmatprep.mubr.bf16.mxu0 0
      %1532 = vmatmul.mubr.bf16.gmra.mrb[0].mxu0 %v1485
      %v1533 = vpop.f32.mrb[0].mxu0
      %v1534 = vadd.f32 0.0, %v1533
      %v1535 = vpop.f32.mrb[0].mxu0
      %v1536 = vpop.f32.mrb[0].mxu0
      %v1537 = vadd.f32 0.0, %v1536
      %v1538 = vpop.f32.mrb[0].mxu0
      %1539 = vmatprep.mubr.bf16.mxu0 0
      %1540 = vmatmul.mubr.bf16.gmra.mrb[0].mxu0 %v1488
      %v1541 = vpop.f32.mrb[0].mxu0
      %v1542 = vadd.f32 0.0, %v1541
      %v1543 = vpop.f32.mrb[0].mxu0
      %v1544 = vpop.f32.mrb[0].mxu0
      %v1545 = vadd.f32 0.0, %v1544
      %v1546 = vpop.f32.mrb[0].mxu0
      %1547 = vmatprep.mubr.bf16.mxu0 0
      %1548 = vmatmul.mubr.bf16.gmra.mrb[0].mxu0 %v1491
      %v1549 = vpop.f32.mrb[0].mxu0
      %v1550 = vadd.f32 0.0, %v1549
      %v1551 = vpop.f32.mrb[0].mxu0
      %v1552 = vpop.f32.mrb[0].mxu0
      %v1553 = vadd.f32 0.0, %v1552
      %v1554 = vpop.f32.mrb[0].mxu0
      %1555 = vmatprep.mubr.bf16.mxu0 0
      %1556 = vmatmul.mubr.bf16.gmra.mrb[0].mxu0 %v1494
      %v1557 = vpop.f32.mrb[0].mxu0
      %v1558 = vadd.f32 0.0, %v1557
      %v1559 = vpop.f32.mrb[0].mxu0
      %v1560 = vpop.f32.mrb[0].mxu0
      %v1561 = vadd.f32 0.0, %v1560
      %v1562 = vpop.f32.mrb[0].mxu0
      %1563 = vdwg.mxu0
      %v1564 = vadd.f32 %v1438, %v1534
      %v1565 = vadd.f32 %v1439, %v1537
      %v1566 = vadd.f32 %v1440, %v1542
      %v1567 = vadd.f32 %v1441, %v1545
      %v1568 = vadd.f32 %v1442, %v1550
      %v1569 = vadd.f32 %v1443, %v1553
      %v1570 = vadd.f32 %v1444, %v1558
      %v1571 = vadd.f32 %v1445, %v1561
      %v1572 = vpack.c.bf16 %v317, %v315
      %v1573 = vpack.c.bf16 %v321, %v319
      %v1574 = vpack.c.bf16 %v325, %v323
      %v1575 = vpack.c.bf16 %v329, %v327
      %s1576 = scalar_lea.vmem %s4, 20
      %v1577 = vld [vmem:[%s1576] sm:$0x3]
      %v1579 = vsel %vm400, %v1572, 0
      %v1582 = vsel %vm400, %v1573, 0
      %v1585 = vsel %vm400, %v1574, 0
      %v1588 = vsel %vm400, %v1575, 0
      %v1591 = vsel %vm413, %v1577, 0
      %1593 = vmatprep.subr.bf16.mxu0 0
      %1594 = vmatpush1.bf16.msra.mxu0 %v1591
      %1595 = vmatprep.subr.bf16.mxu0 0
      %1596 = vmatpush1.bf16.msra.mxu0 0
      %1597 = vmatprep.subr.bf16.mxu0 0
      %1598 = vmatpush1.bf16.msra.mxu0 0
      %1599 = vmatprep.subr.bf16.mxu0 0
      %1600 = vmatpush1.bf16.msra.mxu0 0
      %1601 = vmatprep.subr.bf16.mxu0 0
      %1602 = vmatpush1.bf16.msra.mxu0 0
      %1603 = vmatprep.subr.bf16.mxu0 0
      %1604 = vmatpush1.bf16.msra.mxu0 0
      %1605 = vmatprep.subr.bf16.mxu0 0
      %1606 = vmatpush1.bf16.msra.mxu0 0
      %1607 = vmatprep.subr.bf16.mxu0 0
      %1608 = vmatpush1.bf16.msra.mxu0 0
      %1609 = vmatprep.subr.bf16.mxu0 0
      %1610 = vmatpush1.bf16.msra.mxu0 0
      %1611 = vmatprep.subr.bf16.mxu0 0
      %1612 = vmatpush1.bf16.msra.mxu0 0
      %1613 = vmatprep.subr.bf16.mxu0 0
      %1614 = vmatpush1.bf16.msra.mxu0 0
      %1615 = vmatprep.subr.bf16.mxu0 0
      %1616 = vmatpush1.bf16.msra.mxu0 0
      %1617 = vmatprep.subr.bf16.mxu0 0
      %1618 = vmatpush1.bf16.msra.mxu0 0
      %1619 = vmatprep.subr.bf16.mxu0 0
      %1620 = vmatpush1.bf16.msra.mxu0 0
      %1621 = vmatprep.subr.bf16.mxu0 0
      %1622 = vmatpush1.bf16.msra.mxu0 0
      %1623 = vmatprep.subr.bf16.mxu0 0
      %1624 = vmatpush1.bf16.msra.mxu0 0
      %1625 = vmatprep.mubr.bf16.mxu0 0
      %1626 = vmatmul.mubr.bf16.gmra.mrb[0].mxu0 %v1579
      %v1627 = vpop.f32.mrb[0].mxu0
      %v1628 = vadd.f32 0.0, %v1627
      %v1629 = vpop.f32.mrb[0].mxu0
      %v1630 = vpop.f32.mrb[0].mxu0
      %v1631 = vadd.f32 0.0, %v1630
      %v1632 = vpop.f32.mrb[0].mxu0
      %1633 = vmatprep.mubr.bf16.mxu0 0
      %1634 = vmatmul.mubr.bf16.gmra.mrb[0].mxu0 %v1582
      %v1635 = vpop.f32.mrb[0].mxu0
      %v1636 = vadd.f32 0.0, %v1635
      %v1637 = vpop.f32.mrb[0].mxu0
      %v1638 = vpop.f32.mrb[0].mxu0
      %v1639 = vadd.f32 0.0, %v1638
      %v1640 = vpop.f32.mrb[0].mxu0
      %1641 = vmatprep.mubr.bf16.mxu0 0
      %1642 = vmatmul.mubr.bf16.gmra.mrb[0].mxu0 %v1585
      %v1643 = vpop.f32.mrb[0].mxu0
      %v1644 = vadd.f32 0.0, %v1643
      %v1645 = vpop.f32.mrb[0].mxu0
      %v1646 = vpop.f32.mrb[0].mxu0
      %v1647 = vadd.f32 0.0, %v1646
      %v1648 = vpop.f32.mrb[0].mxu0
      %1649 = vmatprep.mubr.bf16.mxu0 0
      %1650 = vmatmul.mubr.bf16.gmra.mrb[0].mxu0 %v1588
      %v1651 = vpop.f32.mrb[0].mxu0
      %v1652 = vadd.f32 0.0, %v1651
      %v1653 = vpop.f32.mrb[0].mxu0
      %v1654 = vpop.f32.mrb[0].mxu0
      %v1655 = vadd.f32 0.0, %v1654
      %v1656 = vpop.f32.mrb[0].mxu0
      %1657 = vdwg.mxu0
      %v1658 = vadd.f32 %v1564, %v1628
      %v1659 = vadd.f32 %v1565, %v1631
      %v1660 = vadd.f32 %v1566, %v1636
      %v1661 = vadd.f32 %v1567, %v1639
      %v1662 = vadd.f32 %v1568, %v1644
      %v1663 = vadd.f32 %v1569, %v1647
      %v1664 = vadd.f32 %v1570, %v1652
      %v1665 = vadd.f32 %v1571, %v1655
      %v1666 = vpack.c.bf16 %v337, %v335
      %v1667 = vpack.c.bf16 %v341, %v339
      %v1668 = vpack.c.bf16 %v345, %v343
      %v1669 = vpack.c.bf16 %v349, %v347
      %s1670 = scalar_lea.vmem %s4, 22
      %v1671 = vld [vmem:[%s1670] sm:$0x3]
      %v1673 = vsel %vm400, %v1666, 0
      %v1676 = vsel %vm400, %v1667, 0
      %v1679 = vsel %vm400, %v1668, 0
      %v1682 = vsel %vm400, %v1669, 0
      %v1685 = vsel %vm413, %v1671, 0
      %1687 = vmatprep.subr.bf16.mxu0 0
      %1688 = vmatpush1.bf16.msra.mxu0 %v1685
      %1689 = vmatprep.subr.bf16.mxu0 0
      %1690 = vmatpush1.bf16.msra.mxu0 0
      %1691 = vmatprep.subr.bf16.mxu0 0
      %1692 = vmatpush1.bf16.msra.mxu0 0
      %1693 = vmatprep.subr.bf16.mxu0 0
      %1694 = vmatpush1.bf16.msra.mxu0 0
      %1695 = vmatprep.subr.bf16.mxu0 0
      %1696 = vmatpush1.bf16.msra.mxu0 0
      %1697 = vmatprep.subr.bf16.mxu0 0
      %1698 = vmatpush1.bf16.msra.mxu0 0
      %1699 = vmatprep.subr.bf16.mxu0 0
      %1700 = vmatpush1.bf16.msra.mxu0 0
      %1701 = vmatprep.subr.bf16.mxu0 0
      %1702 = vmatpush1.bf16.msra.mxu0 0
      %1703 = vmatprep.subr.bf16.mxu0 0
      %1704 = vmatpush1.bf16.msra.mxu0 0
      %1705 = vmatprep.subr.bf16.mxu0 0
      %1706 = vmatpush1.bf16.msra.mxu0 0
      %1707 = vmatprep.subr.bf16.mxu0 0
      %1708 = vmatpush1.bf16.msra.mxu0 0
      %1709 = vmatprep.subr.bf16.mxu0 0
      %1710 = vmatpush1.bf16.msra.mxu0 0
      %1711 = vmatprep.subr.bf16.mxu0 0
      %1712 = vmatpush1.bf16.msra.mxu0 0
      %1713 = vmatprep.subr.bf16.mxu0 0
      %1714 = vmatpush1.bf16.msra.mxu0 0
      %1715 = vmatprep.subr.bf16.mxu0 0
      %1716 = vmatpush1.bf16.msra.mxu0 0
      %1717 = vmatprep.subr.bf16.mxu0 0
      %1718 = vmatpush1.bf16.msra.mxu0 0
      %1719 = vmatprep.mubr.bf16.mxu0 0
      %1720 = vmatmul.mubr.bf16.gmra.mrb[0].mxu0 %v1673
      %v1721 = vpop.f32.mrb[0].mxu0
      %v1722 = vadd.f32 0.0, %v1721
      %v1723 = vpop.f32.mrb[0].mxu0
      %v1724 = vpop.f32.mrb[0].mxu0
      %v1725 = vadd.f32 0.0, %v1724
      %v1726 = vpop.f32.mrb[0].mxu0
      %1727 = vmatprep.mubr.bf16.mxu0 0
      %1728 = vmatmul.mubr.bf16.gmra.mrb[0].mxu0 %v1676
      %v1729 = vpop.f32.mrb[0].mxu0
      %v1730 = vadd.f32 0.0, %v1729
      %v1731 = vpop.f32.mrb[0].mxu0
      %v1732 = vpop.f32.mrb[0].mxu0
      %v1733 = vadd.f32 0.0, %v1732
      %v1734 = vpop.f32.mrb[0].mxu0
      %1735 = vmatprep.mubr.bf16.mxu0 0
      %1736 = vmatmul.mubr.bf16.gmra.mrb[0].mxu0 %v1679
      %v1737 = vpop.f32.mrb[0].mxu0
      %v1738 = vadd.f32 0.0, %v1737
      %v1739 = vpop.f32.mrb[0].mxu0
      %v1740 = vpop.f32.mrb[0].mxu0
      %v1741 = vadd.f32 0.0, %v1740
      %v1742 = vpop.f32.mrb[0].mxu0
      %1743 = vmatprep.mubr.bf16.mxu0 0
      %1744 = vmatmul.mubr.bf16.gmra.mrb[0].mxu0 %v1682
      %v1745 = vpop.f32.mrb[0].mxu0
      %v1746 = vadd.f32 0.0, %v1745
      %v1747 = vpop.f32.mrb[0].mxu0
      %v1748 = vpop.f32.mrb[0].mxu0
      %v1749 = vadd.f32 0.0, %v1748
      %v1750 = vpop.f32.mrb[0].mxu0
      %1751 = vdwg.mxu0
      %v1752 = vadd.f32 %v1658, %v1722
      %v1753 = vadd.f32 %v1659, %v1725
      %v1754 = vadd.f32 %v1660, %v1730
      %v1755 = vadd.f32 %v1661, %v1733
      %v1756 = vadd.f32 %v1662, %v1738
      %v1757 = vadd.f32 %v1663, %v1741
      %v1758 = vadd.f32 %v1664, %v1746
      %v1759 = vadd.f32 %v1665, %v1749
      %v1762 = vrot.slane %v329, 1
      %v1763 = vrot.slane %v330, 1
      %v1764 = vsel %vm578, %v1762, %v1763
      %v1766 = vpack.c.bf16 %v587, %v584
      %v1767 = vpack.c.bf16 %v593, %v590
      %v1768 = vpack.c.bf16 %v599, %v596
      %v1769 = vpack.c.bf16 %v1764, %v602
      %s1770 = scalar_lea.vmem %s4, 24
      %v1771 = vld [vmem:[%s1770] sm:$0x3]
      %v1773 = vsel %vm400, %v1766, 0
      %v1776 = vsel %vm400, %v1767, 0
      %v1779 = vsel %vm400, %v1768, 0
      %v1782 = vsel %vm400, %v1769, 0
      %v1785 = vsel %vm413, %v1771, 0
      %1787 = vmatprep.subr.bf16.mxu0 0
      %1788 = vmatpush1.bf16.msra.mxu0 %v1785
      %1789 = vmatprep.subr.bf16.mxu0 0
      %1790 = vmatpush1.bf16.msra.mxu0 0
      %1791 = vmatprep.subr.bf16.mxu0 0
      %1792 = vmatpush1.bf16.msra.mxu0 0
      %1793 = vmatprep.subr.bf16.mxu0 0
      %1794 = vmatpush1.bf16.msra.mxu0 0
      %1795 = vmatprep.subr.bf16.mxu0 0
      %1796 = vmatpush1.bf16.msra.mxu0 0
      %1797 = vmatprep.subr.bf16.mxu0 0
      %1798 = vmatpush1.bf16.msra.mxu0 0
      %1799 = vmatprep.subr.bf16.mxu0 0
      %1800 = vmatpush1.bf16.msra.mxu0 0
      %1801 = vmatprep.subr.bf16.mxu0 0
      %1802 = vmatpush1.bf16.msra.mxu0 0
      %1803 = vmatprep.subr.bf16.mxu0 0
      %1804 = vmatpush1.bf16.msra.mxu0 0
      %1805 = vmatprep.subr.bf16.mxu0 0
      %1806 = vmatpush1.bf16.msra.mxu0 0
      %1807 = vmatprep.subr.bf16.mxu0 0
      %1808 = vmatpush1.bf16.msra.mxu0 0
      %1809 = vmatprep.subr.bf16.mxu0 0
      %1810 = vmatpush1.bf16.msra.mxu0 0
      %1811 = vmatprep.subr.bf16.mxu0 0
      %1812 = vmatpush1.bf16.msra.mxu0 0
      %1813 = vmatprep.subr.bf16.mxu0 0
      %1814 = vmatpush1.bf16.msra.mxu0 0
      %1815 = vmatprep.subr.bf16.mxu0 0
      %1816 = vmatpush1.bf16.msra.mxu0 0
      %1817 = vmatprep.subr.bf16.mxu0 0
      %1818 = vmatpush1.bf16.msra.mxu0 0
      %1819 = vmatprep.mubr.bf16.mxu0 0
      %1820 = vmatmul.mubr.bf16.gmra.mrb[0].mxu0 %v1773
      %v1821 = vpop.f32.mrb[0].mxu0
      %v1822 = vadd.f32 0.0, %v1821
      %v1823 = vpop.f32.mrb[0].mxu0
      %v1824 = vpop.f32.mrb[0].mxu0
      %v1825 = vadd.f32 0.0, %v1824
      %v1826 = vpop.f32.mrb[0].mxu0
      %1827 = vmatprep.mubr.bf16.mxu0 0
      %1828 = vmatmul.mubr.bf16.gmra.mrb[0].mxu0 %v1776
      %v1829 = vpop.f32.mrb[0].mxu0
      %v1830 = vadd.f32 0.0, %v1829
      %v1831 = vpop.f32.mrb[0].mxu0
      %v1832 = vpop.f32.mrb[0].mxu0
      %v1833 = vadd.f32 0.0, %v1832
      %v1834 = vpop.f32.mrb[0].mxu0
      %1835 = vmatprep.mubr.bf16.mxu0 0
      %1836 = vmatmul.mubr.bf16.gmra.mrb[0].mxu0 %v1779
      %v1837 = vpop.f32.mrb[0].mxu0
      %v1838 = vadd.f32 0.0, %v1837
      %v1839 = vpop.f32.mrb[0].mxu0
      %v1840 = vpop.f32.mrb[0].mxu0
      %v1841 = vadd.f32 0.0, %v1840
      %v1842 = vpop.f32.mrb[0].mxu0
      %1843 = vmatprep.mubr.bf16.mxu0 0
      %1844 = vmatmul.mubr.bf16.gmra.mrb[0].mxu0 %v1782
      %v1845 = vpop.f32.mrb[0].mxu0
      %v1846 = vadd.f32 0.0, %v1845
      %v1847 = vpop.f32.mrb[0].mxu0
      %v1848 = vpop.f32.mrb[0].mxu0
      %v1849 = vadd.f32 0.0, %v1848
      %v1850 = vpop.f32.mrb[0].mxu0
      %1851 = vdwg.mxu0
      %v1852 = vadd.f32 %v1752, %v1822
      %v1853 = vadd.f32 %v1753, %v1825
      %v1854 = vadd.f32 %v1754, %v1830
      %v1855 = vadd.f32 %v1755, %v1833
      %v1856 = vadd.f32 %v1756, %v1838
      %v1857 = vadd.f32 %v1757, %v1841
      %v1858 = vadd.f32 %v1758, %v1846
      %v1859 = vadd.f32 %v1759, %v1849
      %v1862 = vrot.slane %v349, 1
      %v1863 = vrot.slane %v350, 1
      %v1864 = vsel %vm578, %v1862, %v1863
      %v1866 = vpack.c.bf16 %v729, %v726
      %v1867 = vpack.c.bf16 %v735, %v732
      %v1868 = vpack.c.bf16 %v741, %v738
      %v1869 = vpack.c.bf16 %v1864, %v744
      %s1870 = scalar_lea.vmem %s4, 26
      %v1871 = vld [vmem:[%s1870] sm:$0x3]
      %v1873 = vsel %vm400, %v1866, 0
      %v1876 = vsel %vm400, %v1867, 0
      %v1879 = vsel %vm400, %v1868, 0
      %v1882 = vsel %vm400, %v1869, 0
      %v1885 = vsel %vm413, %v1871, 0
      %1887 = vmatprep.subr.bf16.mxu0 0
      %1888 = vmatpush1.bf16.msra.mxu0 %v1885
      %1889 = vmatprep.subr.bf16.mxu0 0
      %1890 = vmatpush1.bf16.msra.mxu0 0
      %1891 = vmatprep.subr.bf16.mxu0 0
      %1892 = vmatpush1.bf16.msra.mxu0 0
      %1893 = vmatprep.subr.bf16.mxu0 0
      %1894 = vmatpush1.bf16.msra.mxu0 0
      %1895 = vmatprep.subr.bf16.mxu0 0
      %1896 = vmatpush1.bf16.msra.mxu0 0
      %1897 = vmatprep.subr.bf16.mxu0 0
      %1898 = vmatpush1.bf16.msra.mxu0 0
      %1899 = vmatprep.subr.bf16.mxu0 0
      %1900 = vmatpush1.bf16.msra.mxu0 0
      %1901 = vmatprep.subr.bf16.mxu0 0
      %1902 = vmatpush1.bf16.msra.mxu0 0
      %1903 = vmatprep.subr.bf16.mxu0 0
      %1904 = vmatpush1.bf16.msra.mxu0 0
      %1905 = vmatprep.subr.bf16.mxu0 0
      %1906 = vmatpush1.bf16.msra.mxu0 0
      %1907 = vmatprep.subr.bf16.mxu0 0
      %1908 = vmatpush1.bf16.msra.mxu0 0
      %1909 = vmatprep.subr.bf16.mxu0 0
      %1910 = vmatpush1.bf16.msra.mxu0 0
      %1911 = vmatprep.subr.bf16.mxu0 0
      %1912 = vmatpush1.bf16.msra.mxu0 0
      %1913 = vmatprep.subr.bf16.mxu0 0
      %1914 = vmatpush1.bf16.msra.mxu0 0
      %1915 = vmatprep.subr.bf16.mxu0 0
      %1916 = vmatpush1.bf16.msra.mxu0 0
      %1917 = vmatprep.subr.bf16.mxu0 0
      %1918 = vmatpush1.bf16.msra.mxu0 0
      %1919 = vmatprep.mubr.bf16.mxu0 0
      %1920 = vmatmul.mubr.bf16.gmra.mrb[0].mxu0 %v1873
      %v1921 = vpop.f32.mrb[0].mxu0
      %v1922 = vadd.f32 0.0, %v1921
      %v1923 = vpop.f32.mrb[0].mxu0
      %v1924 = vpop.f32.mrb[0].mxu0
      %v1925 = vadd.f32 0.0, %v1924
      %v1926 = vpop.f32.mrb[0].mxu0
      %1927 = vmatprep.mubr.bf16.mxu0 0
      %1928 = vmatmul.mubr.bf16.gmra.mrb[0].mxu0 %v1876
      %v1929 = vpop.f32.mrb[0].mxu0
      %v1930 = vadd.f32 0.0, %v1929
      %v1931 = vpop.f32.mrb[0].mxu0
      %v1932 = vpop.f32.mrb[0].mxu0
      %v1933 = vadd.f32 0.0, %v1932
      %v1934 = vpop.f32.mrb[0].mxu0
      %1935 = vmatprep.mubr.bf16.mxu0 0
      %1936 = vmatmul.mubr.bf16.gmra.mrb[0].mxu0 %v1879
      %v1937 = vpop.f32.mrb[0].mxu0
      %v1938 = vadd.f32 0.0, %v1937
      %v1939 = vpop.f32.mrb[0].mxu0
      %v1940 = vpop.f32.mrb[0].mxu0
      %v1941 = vadd.f32 0.0, %v1940
      %v1942 = vpop.f32.mrb[0].mxu0
      %1943 = vmatprep.mubr.bf16.mxu0 0
      %1944 = vmatmul.mubr.bf16.gmra.mrb[0].mxu0 %v1882
      %v1945 = vpop.f32.mrb[0].mxu0
      %v1946 = vadd.f32 0.0, %v1945
      %v1947 = vpop.f32.mrb[0].mxu0
      %v1948 = vpop.f32.mrb[0].mxu0
      %v1949 = vadd.f32 0.0, %v1948
      %v1950 = vpop.f32.mrb[0].mxu0
      %1951 = vdwg.mxu0
      %v1952 = vadd.f32 %v1852, %v1922
      %v1953 = vadd.f32 %v1853, %v1925
      %v1954 = vadd.f32 %v1854, %v1930
      %v1955 = vadd.f32 %v1855, %v1933
      %v1956 = vadd.f32 %v1856, %v1938
      %v1957 = vadd.f32 %v1857, %v1941
      %v1958 = vadd.f32 %v1858, %v1946
      %v1959 = vadd.f32 %v1859, %v1949
      %v1960 = vrot.slane %v329, 2
      %v1961 = vrot.slane %v330, 2
      %v1962 = vsel %vm847, %v1960, %v1961
      %v1964 = vpack.c.bf16 %v856, %v853
      %v1965 = vpack.c.bf16 %v862, %v859
      %v1966 = vpack.c.bf16 %v868, %v865
      %v1967 = vpack.c.bf16 %v1962, %v871
      %s1968 = scalar_lea.vmem %s4, 28
      %v1969 = vld [vmem:[%s1968] sm:$0x3]
      %v1971 = vsel %vm400, %v1964, 0
      %v1974 = vsel %vm400, %v1965, 0
      %v1977 = vsel %vm400, %v1966, 0
      %v1980 = vsel %vm400, %v1967, 0
      %v1983 = vsel %vm413, %v1969, 0
      %1985 = vmatprep.subr.bf16.mxu0 0
      %1986 = vmatpush1.bf16.msra.mxu0 %v1983
      %1987 = vmatprep.subr.bf16.mxu0 0
      %1988 = vmatpush1.bf16.msra.mxu0 0
      %1989 = vmatprep.subr.bf16.mxu0 0
      %1990 = vmatpush1.bf16.msra.mxu0 0
      %1991 = vmatprep.subr.bf16.mxu0 0
      %1992 = vmatpush1.bf16.msra.mxu0 0
      %1993 = vmatprep.subr.bf16.mxu0 0
      %1994 = vmatpush1.bf16.msra.mxu0 0
      %1995 = vmatprep.subr.bf16.mxu0 0
      %1996 = vmatpush1.bf16.msra.mxu0 0
      %1997 = vmatprep.subr.bf16.mxu0 0
      %1998 = vmatpush1.bf16.msra.mxu0 0
      %1999 = vmatprep.subr.bf16.mxu0 0
      %2000 = vmatpush1.bf16.msra.mxu0 0
      %2001 = vmatprep.subr.bf16.mxu0 0
      %2002 = vmatpush1.bf16.msra.mxu0 0
      %2003 = vmatprep.subr.bf16.mxu0 0
      %2004 = vmatpush1.bf16.msra.mxu0 0
      %2005 = vmatprep.subr.bf16.mxu0 0
      %2006 = vmatpush1.bf16.msra.mxu0 0
      %2007 = vmatprep.subr.bf16.mxu0 0
      %2008 = vmatpush1.bf16.msra.mxu0 0
      %2009 = vmatprep.subr.bf16.mxu0 0
      %2010 = vmatpush1.bf16.msra.mxu0 0
      %2011 = vmatprep.subr.bf16.mxu0 0
      %2012 = vmatpush1.bf16.msra.mxu0 0
      %2013 = vmatprep.subr.bf16.mxu0 0
      %2014 = vmatpush1.bf16.msra.mxu0 0
      %2015 = vmatprep.subr.bf16.mxu0 0
      %2016 = vmatpush1.bf16.msra.mxu0 0
      %2017 = vmatprep.mubr.bf16.mxu0 0
      %2018 = vmatmul.mubr.bf16.gmra.mrb[0].mxu0 %v1971
      %v2019 = vpop.f32.mrb[0].mxu0
      %v2020 = vadd.f32 0.0, %v2019
      %v2021 = vpop.f32.mrb[0].mxu0
      %v2022 = vpop.f32.mrb[0].mxu0
      %v2023 = vadd.f32 0.0, %v2022
      %v2024 = vpop.f32.mrb[0].mxu0
      %2025 = vmatprep.mubr.bf16.mxu0 0
      %2026 = vmatmul.mubr.bf16.gmra.mrb[0].mxu0 %v1974
      %v2027 = vpop.f32.mrb[0].mxu0
      %v2028 = vadd.f32 0.0, %v2027
      %v2029 = vpop.f32.mrb[0].mxu0
      %v2030 = vpop.f32.mrb[0].mxu0
      %v2031 = vadd.f32 0.0, %v2030
      %v2032 = vpop.f32.mrb[0].mxu0
      %2033 = vmatprep.mubr.bf16.mxu0 0
      %2034 = vmatmul.mubr.bf16.gmra.mrb[0].mxu0 %v1977
      %v2035 = vpop.f32.mrb[0].mxu0
      %v2036 = vadd.f32 0.0, %v2035
      %v2037 = vpop.f32.mrb[0].mxu0
      %v2038 = vpop.f32.mrb[0].mxu0
      %v2039 = vadd.f32 0.0, %v2038
      %v2040 = vpop.f32.mrb[0].mxu0
      %2041 = vmatprep.mubr.bf16.mxu0 0
      %2042 = vmatmul.mubr.bf16.gmra.mrb[0].mxu0 %v1980
      %v2043 = vpop.f32.mrb[0].mxu0
      %v2044 = vadd.f32 0.0, %v2043
      %v2045 = vpop.f32.mrb[0].mxu0
      %v2046 = vpop.f32.mrb[0].mxu0
      %v2047 = vadd.f32 0.0, %v2046
      %v2048 = vpop.f32.mrb[0].mxu0
      %2049 = vdwg.mxu0
      %v2050 = vadd.f32 %v1952, %v2020
      %v2051 = vadd.f32 %v1953, %v2023
      %v2052 = vadd.f32 %v1954, %v2028
      %v2053 = vadd.f32 %v1955, %v2031
      %v2054 = vadd.f32 %v1956, %v2036
      %v2055 = vadd.f32 %v1957, %v2039
      %v2056 = vadd.f32 %v1958, %v2044
      %v2057 = vadd.f32 %v1959, %v2047
      %v2058 = vpack.c.bf16 %v357, %v355
      %v2059 = vpack.c.bf16 %v361, %v359
      %v2060 = vpack.c.bf16 %v365, %v363
      %v2061 = vpack.c.bf16 %v369, %v367
      %s2062 = scalar_lea.vmem %s4, 30
      %v2063 = vld [vmem:[%s2062] sm:$0x3]
      %v2065 = vsel %vm400, %v2058, 0
      %v2068 = vsel %vm400, %v2059, 0
      %v2071 = vsel %vm400, %v2060, 0
      %v2074 = vsel %vm400, %v2061, 0
      %v2077 = vsel %vm413, %v2063, 0
      %2079 = vmatprep.subr.bf16.mxu0 0
      %2080 = vmatpush1.bf16.msra.mxu0 %v2077
      %2081 = vmatprep.subr.bf16.mxu0 0
      %2082 = vmatpush1.bf16.msra.mxu0 0
      %2083 = vmatprep.subr.bf16.mxu0 0
      %2084 = vmatpush1.bf16.msra.mxu0 0
      %2085 = vmatprep.subr.bf16.mxu0 0
      %2086 = vmatpush1.bf16.msra.mxu0 0
      %2087 = vmatprep.subr.bf16.mxu0 0
      %2088 = vmatpush1.bf16.msra.mxu0 0
      %2089 = vmatprep.subr.bf16.mxu0 0
      %2090 = vmatpush1.bf16.msra.mxu0 0
      %2091 = vmatprep.subr.bf16.mxu0 0
      %2092 = vmatpush1.bf16.msra.mxu0 0
      %2093 = vmatprep.subr.bf16.mxu0 0
      %2094 = vmatpush1.bf16.msra.mxu0 0
      %2095 = vmatprep.subr.bf16.mxu0 0
      %2096 = vmatpush1.bf16.msra.mxu0 0
      %2097 = vmatprep.subr.bf16.mxu0 0
      %2098 = vmatpush1.bf16.msra.mxu0 0
      %2099 = vmatprep.subr.bf16.mxu0 0
      %2100 = vmatpush1.bf16.msra.mxu0 0
      %2101 = vmatprep.subr.bf16.mxu0 0
      %2102 = vmatpush1.bf16.msra.mxu0 0
      %2103 = vmatprep.subr.bf16.mxu0 0
      %2104 = vmatpush1.bf16.msra.mxu0 0
      %2105 = vmatprep.subr.bf16.mxu0 0
      %2106 = vmatpush1.bf16.msra.mxu0 0
      %2107 = vmatprep.subr.bf16.mxu0 0
      %2108 = vmatpush1.bf16.msra.mxu0 0
      %2109 = vmatprep.subr.bf16.mxu0 0
      %2110 = vmatpush1.bf16.msra.mxu0 0
      %2111 = vmatprep.mubr.bf16.mxu0 0
      %2112 = vmatmul.mubr.bf16.gmra.mrb[0].mxu0 %v2065
      %v2113 = vpop.f32.mrb[0].mxu0
      %v2114 = vadd.f32 0.0, %v2113
      %v2115 = vpop.f32.mrb[0].mxu0
      %v2116 = vpop.f32.mrb[0].mxu0
      %v2117 = vadd.f32 0.0, %v2116
      %v2118 = vpop.f32.mrb[0].mxu0
      %2119 = vmatprep.mubr.bf16.mxu0 0
      %2120 = vmatmul.mubr.bf16.gmra.mrb[0].mxu0 %v2068
      %v2121 = vpop.f32.mrb[0].mxu0
      %v2122 = vadd.f32 0.0, %v2121
      %v2123 = vpop.f32.mrb[0].mxu0
      %v2124 = vpop.f32.mrb[0].mxu0
      %v2125 = vadd.f32 0.0, %v2124
      %v2126 = vpop.f32.mrb[0].mxu0
      %2127 = vmatprep.mubr.bf16.mxu0 0
      %2128 = vmatmul.mubr.bf16.gmra.mrb[0].mxu0 %v2071
      %v2129 = vpop.f32.mrb[0].mxu0
      %v2130 = vadd.f32 0.0, %v2129
      %v2131 = vpop.f32.mrb[0].mxu0
      %v2132 = vpop.f32.mrb[0].mxu0
      %v2133 = vadd.f32 0.0, %v2132
      %v2134 = vpop.f32.mrb[0].mxu0
      %2135 = vmatprep.mubr.bf16.mxu0 0
      %2136 = vmatmul.mubr.bf16.gmra.mrb[0].mxu0 %v2074
      %v2137 = vpop.f32.mrb[0].mxu0
      %v2138 = vadd.f32 0.0, %v2137
      %v2139 = vpop.f32.mrb[0].mxu0
      %v2140 = vpop.f32.mrb[0].mxu0
      %v2141 = vadd.f32 0.0, %v2140
      %v2142 = vpop.f32.mrb[0].mxu0
      %2143 = vdwg.mxu0
      %v2144 = vadd.f32 %v2050, %v2114
      %v2145 = vadd.f32 %v2051, %v2117
      %v2146 = vadd.f32 %v2052, %v2122
      %v2147 = vadd.f32 %v2053, %v2125
      %v2148 = vadd.f32 %v2054, %v2130
      %v2149 = vadd.f32 %v2055, %v2133
      %v2150 = vadd.f32 %v2056, %v2138
      %v2151 = vadd.f32 %v2057, %v2141
      %v2152 = vpack.c.bf16 %v375, %v373
      %v2153 = vpack.c.bf16 %v379, %v377
      %v2154 = vpack.c.bf16 %v383, %v381
      %v2155 = vpack.c.bf16 %v387, %v385
      %s2156 = scalar_lea.vmem %s4, 32
      %v2157 = vld [vmem:[%s2156] sm:$0x3]
      %v2159 = vsel %vm400, %v2152, 0
      %v2162 = vsel %vm400, %v2153, 0
      %v2165 = vsel %vm400, %v2154, 0
      %v2168 = vsel %vm400, %v2155, 0
      %v2171 = vsel %vm413, %v2157, 0
      %2173 = vmatprep.subr.bf16.mxu0 0
      %2174 = vmatpush1.bf16.msra.mxu0 %v2171
      %2175 = vmatprep.subr.bf16.mxu0 0
      %2176 = vmatpush1.bf16.msra.mxu0 0
      %2177 = vmatprep.subr.bf16.mxu0 0
      %2178 = vmatpush1.bf16.msra.mxu0 0
      %2179 = vmatprep.subr.bf16.mxu0 0
      %2180 = vmatpush1.bf16.msra.mxu0 0
      %2181 = vmatprep.subr.bf16.mxu0 0
      %2182 = vmatpush1.bf16.msra.mxu0 0
      %2183 = vmatprep.subr.bf16.mxu0 0
      %2184 = vmatpush1.bf16.msra.mxu0 0
      %2185 = vmatprep.subr.bf16.mxu0 0
      %2186 = vmatpush1.bf16.msra.mxu0 0
      %2187 = vmatprep.subr.bf16.mxu0 0
      %2188 = vmatpush1.bf16.msra.mxu0 0
      %2189 = vmatprep.subr.bf16.mxu0 0
      %2190 = vmatpush1.bf16.msra.mxu0 0
      %2191 = vmatprep.subr.bf16.mxu0 0
      %2192 = vmatpush1.bf16.msra.mxu0 0
      %2193 = vmatprep.subr.bf16.mxu0 0
      %2194 = vmatpush1.bf16.msra.mxu0 0
      %2195 = vmatprep.subr.bf16.mxu0 0
      %2196 = vmatpush1.bf16.msra.mxu0 0
      %2197 = vmatprep.subr.bf16.mxu0 0
      %2198 = vmatpush1.bf16.msra.mxu0 0
      %2199 = vmatprep.subr.bf16.mxu0 0
      %2200 = vmatpush1.bf16.msra.mxu0 0
      %2201 = vmatprep.subr.bf16.mxu0 0
      %2202 = vmatpush1.bf16.msra.mxu0 0
      %2203 = vmatprep.subr.bf16.mxu0 0
      %2204 = vmatpush1.bf16.msra.mxu0 0
      %2205 = vmatprep.mubr.bf16.mxu0 0
      %2206 = vmatmul.mubr.bf16.gmra.mrb[0].mxu0 %v2159
      %v2207 = vpop.f32.mrb[0].mxu0
      %v2208 = vadd.f32 0.0, %v2207
      %v2209 = vpop.f32.mrb[0].mxu0
      %v2210 = vpop.f32.mrb[0].mxu0
      %v2211 = vadd.f32 0.0, %v2210
      %v2212 = vpop.f32.mrb[0].mxu0
      %2213 = vmatprep.mubr.bf16.mxu0 0
      %2214 = vmatmul.mubr.bf16.gmra.mrb[0].mxu0 %v2162
      %v2215 = vpop.f32.mrb[0].mxu0
      %v2216 = vadd.f32 0.0, %v2215
      %v2217 = vpop.f32.mrb[0].mxu0
      %v2218 = vpop.f32.mrb[0].mxu0
      %v2219 = vadd.f32 0.0, %v2218
      %v2220 = vpop.f32.mrb[0].mxu0
      %2221 = vmatprep.mubr.bf16.mxu0 0
      %2222 = vmatmul.mubr.bf16.gmra.mrb[0].mxu0 %v2165
      %v2223 = vpop.f32.mrb[0].mxu0
      %v2224 = vadd.f32 0.0, %v2223
      %v2225 = vpop.f32.mrb[0].mxu0
      %v2226 = vpop.f32.mrb[0].mxu0
      %v2227 = vadd.f32 0.0, %v2226
      %v2228 = vpop.f32.mrb[0].mxu0
      %2229 = vmatprep.mubr.bf16.mxu0 0
      %2230 = vmatmul.mubr.bf16.gmra.mrb[0].mxu0 %v2168
      %v2231 = vpop.f32.mrb[0].mxu0
      %v2232 = vadd.f32 0.0, %v2231
      %v2233 = vpop.f32.mrb[0].mxu0
      %v2234 = vpop.f32.mrb[0].mxu0
      %v2235 = vadd.f32 0.0, %v2234
      %v2236 = vpop.f32.mrb[0].mxu0
      %2237 = vdwg.mxu0
      %v2238 = vadd.f32 %v2144, %v2208
      %v2239 = vadd.f32 %v2145, %v2211
      %v2240 = vadd.f32 %v2146, %v2216
      %v2241 = vadd.f32 %v2147, %v2219
      %v2242 = vadd.f32 %v2148, %v2224
      %v2243 = vadd.f32 %v2149, %v2227
      %v2244 = vadd.f32 %v2150, %v2232
      %v2245 = vadd.f32 %v2151, %v2235
      %v2248 = vrot.slane %v369, 1
      %v2249 = vrot.slane %v370, 1
      %v2250 = vsel %vm578, %v2248, %v2249
      %v2252 = vpack.c.bf16 %v1186, %v1183
      %v2253 = vpack.c.bf16 %v1192, %v1189
      %v2254 = vpack.c.bf16 %v1198, %v1195
      %v2255 = vpack.c.bf16 %v2250, %v1201
      %s2256 = scalar_lea.vmem %s4, 34
      %v2257 = vld [vmem:[%s2256] sm:$0x3]
      %v2259 = vsel %vm400, %v2252, 0
      %v2262 = vsel %vm400, %v2253, 0
      %v2265 = vsel %vm400, %v2254, 0
      %v2268 = vsel %vm400, %v2255, 0
      %v2271 = vsel %vm413, %v2257, 0
      %2273 = vmatprep.subr.bf16.mxu0 0
      %2274 = vmatpush1.bf16.msra.mxu0 %v2271
      %2275 = vmatprep.subr.bf16.mxu0 0
      %2276 = vmatpush1.bf16.msra.mxu0 0
      %2277 = vmatprep.subr.bf16.mxu0 0
      %2278 = vmatpush1.bf16.msra.mxu0 0
      %2279 = vmatprep.subr.bf16.mxu0 0
      %2280 = vmatpush1.bf16.msra.mxu0 0
      %2281 = vmatprep.subr.bf16.mxu0 0
      %2282 = vmatpush1.bf16.msra.mxu0 0
      %2283 = vmatprep.subr.bf16.mxu0 0
      %2284 = vmatpush1.bf16.msra.mxu0 0
      %2285 = vmatprep.subr.bf16.mxu0 0
      %2286 = vmatpush1.bf16.msra.mxu0 0
      %2287 = vmatprep.subr.bf16.mxu0 0
      %2288 = vmatpush1.bf16.msra.mxu0 0
      %2289 = vmatprep.subr.bf16.mxu0 0
      %2290 = vmatpush1.bf16.msra.mxu0 0
      %2291 = vmatprep.subr.bf16.mxu0 0
      %2292 = vmatpush1.bf16.msra.mxu0 0
      %2293 = vmatprep.subr.bf16.mxu0 0
      %2294 = vmatpush1.bf16.msra.mxu0 0
      %2295 = vmatprep.subr.bf16.mxu0 0
      %2296 = vmatpush1.bf16.msra.mxu0 0
      %2297 = vmatprep.subr.bf16.mxu0 0
      %2298 = vmatpush1.bf16.msra.mxu0 0
      %2299 = vmatprep.subr.bf16.mxu0 0
      %2300 = vmatpush1.bf16.msra.mxu0 0
      %2301 = vmatprep.subr.bf16.mxu0 0
      %2302 = vmatpush1.bf16.msra.mxu0 0
      %2303 = vmatprep.subr.bf16.mxu0 0
      %2304 = vmatpush1.bf16.msra.mxu0 0
      %2305 = vmatprep.mubr.bf16.mxu0 0
      %2306 = vmatmul.mubr.bf16.gmra.mrb[0].mxu0 %v2259
      %v2307 = vpop.f32.mrb[0].mxu0
      %v2308 = vadd.f32 0.0, %v2307
      %v2309 = vpop.f32.mrb[0].mxu0
      %v2310 = vpop.f32.mrb[0].mxu0
      %v2311 = vadd.f32 0.0, %v2310
      %v2312 = vpop.f32.mrb[0].mxu0
      %2313 = vmatprep.mubr.bf16.mxu0 0
      %2314 = vmatmul.mubr.bf16.gmra.mrb[0].mxu0 %v2262
      %v2315 = vpop.f32.mrb[0].mxu0
      %v2316 = vadd.f32 0.0, %v2315
      %v2317 = vpop.f32.mrb[0].mxu0
      %v2318 = vpop.f32.mrb[0].mxu0
      %v2319 = vadd.f32 0.0, %v2318
      %v2320 = vpop.f32.mrb[0].mxu0
      %2321 = vmatprep.mubr.bf16.mxu0 0
      %2322 = vmatmul.mubr.bf16.gmra.mrb[0].mxu0 %v2265
      %v2323 = vpop.f32.mrb[0].mxu0
      %v2324 = vadd.f32 0.0, %v2323
      %v2325 = vpop.f32.mrb[0].mxu0
      %v2326 = vpop.f32.mrb[0].mxu0
      %v2327 = vadd.f32 0.0, %v2326
      %v2328 = vpop.f32.mrb[0].mxu0
      %2329 = vmatprep.mubr.bf16.mxu0 0
      %2330 = vmatmul.mubr.bf16.gmra.mrb[0].mxu0 %v2268
      %v2331 = vpop.f32.mrb[0].mxu0
      %v2332 = vadd.f32 0.0, %v2331
      %v2333 = vpop.f32.mrb[0].mxu0
      %v2334 = vpop.f32.mrb[0].mxu0
      %v2335 = vadd.f32 0.0, %v2334
      %v2336 = vpop.f32.mrb[0].mxu0
      %2337 = vdwg.mxu0
      %v2338 = vadd.f32 %v2238, %v2308
      %v2339 = vadd.f32 %v2239, %v2311
      %v2340 = vadd.f32 %v2240, %v2316
      %v2341 = vadd.f32 %v2241, %v2319
      %v2342 = vadd.f32 %v2242, %v2324
      %v2343 = vadd.f32 %v2243, %v2327
      %v2344 = vadd.f32 %v2244, %v2332
      %v2345 = vadd.f32 %v2245, %v2335
      %v2348 = vrot.slane %v387, 1
      %v2349 = vrot.slane %v388, 1
      %v2350 = vsel %vm578, %v2348, %v2349
      %v2352 = vpack.c.bf16 %v1328, %v1325
      %v2353 = vpack.c.bf16 %v1334, %v1331
      %v2354 = vpack.c.bf16 %v1340, %v1337
      %v2355 = vpack.c.bf16 %v2350, %v1343
      %s2356 = scalar_lea.vmem %s4, 36
      %v2357 = vld [vmem:[%s2356] sm:$0x3]
      %v2359 = vsel %vm400, %v2352, 0
      %v2362 = vsel %vm400, %v2353, 0
      %v2365 = vsel %vm400, %v2354, 0
      %v2368 = vsel %vm400, %v2355, 0
      %v2371 = vsel %vm413, %v2357, 0
      %2373 = vmatprep.subr.bf16.mxu0 0
      %2374 = vmatpush1.bf16.msra.mxu0 %v2371
      %2375 = vmatprep.subr.bf16.mxu0 0
      %2376 = vmatpush1.bf16.msra.mxu0 0
      %2377 = vmatprep.subr.bf16.mxu0 0
      %2378 = vmatpush1.bf16.msra.mxu0 0
      %2379 = vmatprep.subr.bf16.mxu0 0
      %2380 = vmatpush1.bf16.msra.mxu0 0
      %2381 = vmatprep.subr.bf16.mxu0 0
      %2382 = vmatpush1.bf16.msra.mxu0 0
      %2383 = vmatprep.subr.bf16.mxu0 0
      %2384 = vmatpush1.bf16.msra.mxu0 0
      %2385 = vmatprep.subr.bf16.mxu0 0
      %2386 = vmatpush1.bf16.msra.mxu0 0
      %2387 = vmatprep.subr.bf16.mxu0 0
      %2388 = vmatpush1.bf16.msra.mxu0 0
      %2389 = vmatprep.subr.bf16.mxu0 0
      %2390 = vmatpush1.bf16.msra.mxu0 0
      %2391 = vmatprep.subr.bf16.mxu0 0
      %2392 = vmatpush1.bf16.msra.mxu0 0
      %2393 = vmatprep.subr.bf16.mxu0 0
      %2394 = vmatpush1.bf16.msra.mxu0 0
      %2395 = vmatprep.subr.bf16.mxu0 0
      %2396 = vmatpush1.bf16.msra.mxu0 0
      %2397 = vmatprep.subr.bf16.mxu0 0
      %2398 = vmatpush1.bf16.msra.mxu0 0
      %2399 = vmatprep.subr.bf16.mxu0 0
      %2400 = vmatpush1.bf16.msra.mxu0 0
      %2401 = vmatprep.subr.bf16.mxu0 0
      %2402 = vmatpush1.bf16.msra.mxu0 0
      %2403 = vmatprep.subr.bf16.mxu0 0
      %2404 = vmatpush1.bf16.msra.mxu0 0
      %2405 = vmatprep.mubr.bf16.mxu0 0
      %2406 = vmatmul.mubr.bf16.gmra.mrb[0].mxu0 %v2359
      %v2407 = vpop.f32.mrb[0].mxu0
      %v2408 = vadd.f32 0.0, %v2407
      %v2409 = vpop.f32.mrb[0].mxu0
      %v2410 = vpop.f32.mrb[0].mxu0
      %v2411 = vadd.f32 0.0, %v2410
      %v2412 = vpop.f32.mrb[0].mxu0
      %2413 = vmatprep.mubr.bf16.mxu0 0
      %2414 = vmatmul.mubr.bf16.gmra.mrb[0].mxu0 %v2362
      %v2415 = vpop.f32.mrb[0].mxu0
      %v2416 = vadd.f32 0.0, %v2415
      %v2417 = vpop.f32.mrb[0].mxu0
      %v2418 = vpop.f32.mrb[0].mxu0
      %v2419 = vadd.f32 0.0, %v2418
      %v2420 = vpop.f32.mrb[0].mxu0
      %2421 = vmatprep.mubr.bf16.mxu0 0
      %2422 = vmatmul.mubr.bf16.gmra.mrb[0].mxu0 %v2365
      %v2423 = vpop.f32.mrb[0].mxu0
      %v2424 = vadd.f32 0.0, %v2423
      %v2425 = vpop.f32.mrb[0].mxu0
      %v2426 = vpop.f32.mrb[0].mxu0
      %v2427 = vadd.f32 0.0, %v2426
      %v2428 = vpop.f32.mrb[0].mxu0
      %2429 = vmatprep.mubr.bf16.mxu0 0
      %2430 = vmatmul.mubr.bf16.gmra.mrb[0].mxu0 %v2368
      %v2431 = vpop.f32.mrb[0].mxu0
      %v2432 = vadd.f32 0.0, %v2431
      %v2433 = vpop.f32.mrb[0].mxu0
      %v2434 = vpop.f32.mrb[0].mxu0
      %v2435 = vadd.f32 0.0, %v2434
      %v2436 = vpop.f32.mrb[0].mxu0
      %2437 = vdwg.mxu0
      %v2438 = vadd.f32 %v2338, %v2408
      %v2439 = vadd.f32 %v2339, %v2411
      %v2440 = vadd.f32 %v2340, %v2416
      %v2441 = vadd.f32 %v2341, %v2419
      %v2442 = vadd.f32 %v2342, %v2424
      %v2443 = vadd.f32 %v2343, %v2427
      %v2444 = vadd.f32 %v2344, %v2432
      %v2445 = vadd.f32 %v2345, %v2435
      %v2446 = vrot.slane %v369, 2
      %v2447 = vrot.slane %v370, 2
      %v2448 = vsel %vm847, %v2446, %v2447
      %v2450 = vpack.c.bf16 %v1454, %v1451
      %v2451 = vpack.c.bf16 %v1460, %v1457
      %v2452 = vpack.c.bf16 %v1466, %v1463
      %v2453 = vpack.c.bf16 %v2448, %v1469
      %s2454 = scalar_lea.vmem %s4, 38
      %v2455 = vld [vmem:[%s2454] sm:$0x3]
      %v2457 = vsel %vm400, %v2450, 0
      %v2460 = vsel %vm400, %v2451, 0
      %v2463 = vsel %vm400, %v2452, 0
      %v2466 = vsel %vm400, %v2453, 0
      %v2469 = vsel %vm413, %v2455, 0
      %2471 = vmatprep.subr.bf16.mxu0 0
      %2472 = vmatpush1.bf16.msra.mxu0 %v2469
      %2473 = vmatprep.subr.bf16.mxu0 0
      %2474 = vmatpush1.bf16.msra.mxu0 0
      %2475 = vmatprep.subr.bf16.mxu0 0
      %2476 = vmatpush1.bf16.msra.mxu0 0
      %2477 = vmatprep.subr.bf16.mxu0 0
      %2478 = vmatpush1.bf16.msra.mxu0 0
      %2479 = vmatprep.subr.bf16.mxu0 0
      %2480 = vmatpush1.bf16.msra.mxu0 0
      %2481 = vmatprep.subr.bf16.mxu0 0
      %2482 = vmatpush1.bf16.msra.mxu0 0
      %2483 = vmatprep.subr.bf16.mxu0 0
      %2484 = vmatpush1.bf16.msra.mxu0 0
      %2485 = vmatprep.subr.bf16.mxu0 0
      %2486 = vmatpush1.bf16.msra.mxu0 0
      %2487 = vmatprep.subr.bf16.mxu0 0
      %2488 = vmatpush1.bf16.msra.mxu0 0
      %2489 = vmatprep.subr.bf16.mxu0 0
      %2490 = vmatpush1.bf16.msra.mxu0 0
      %2491 = vmatprep.subr.bf16.mxu0 0
      %2492 = vmatpush1.bf16.msra.mxu0 0
      %2493 = vmatprep.subr.bf16.mxu0 0
      %2494 = vmatpush1.bf16.msra.mxu0 0
      %2495 = vmatprep.subr.bf16.mxu0 0
      %2496 = vmatpush1.bf16.msra.mxu0 0
      %2497 = vmatprep.subr.bf16.mxu0 0
      %2498 = vmatpush1.bf16.msra.mxu0 0
      %2499 = vmatprep.subr.bf16.mxu0 0
      %2500 = vmatpush1.bf16.msra.mxu0 0
      %2501 = vmatprep.subr.bf16.mxu0 0
      %2502 = vmatpush1.bf16.msra.mxu0 0
      %2503 = vmatprep.mubr.bf16.mxu0 0
      %2504 = vmatmul.mubr.bf16.gmra.mrb[0].mxu0 %v2457
      %v2505 = vpop.f32.mrb[0].mxu0
      %v2506 = vadd.f32 0.0, %v2505
      %v2507 = vpop.f32.mrb[0].mxu0
      %v2508 = vpop.f32.mrb[0].mxu0
      %v2509 = vadd.f32 0.0, %v2508
      %v2510 = vpop.f32.mrb[0].mxu0
      %2511 = vmatprep.mubr.bf16.mxu0 0
      %2512 = vmatmul.mubr.bf16.gmra.mrb[0].mxu0 %v2460
      %v2513 = vpop.f32.mrb[0].mxu0
      %v2514 = vadd.f32 0.0, %v2513
      %v2515 = vpop.f32.mrb[0].mxu0
      %v2516 = vpop.f32.mrb[0].mxu0
      %v2517 = vadd.f32 0.0, %v2516
      %v2518 = vpop.f32.mrb[0].mxu0
      %2519 = vmatprep.mubr.bf16.mxu0 0
      %2520 = vmatmul.mubr.bf16.gmra.mrb[0].mxu0 %v2463
      %v2521 = vpop.f32.mrb[0].mxu0
      %v2522 = vadd.f32 0.0, %v2521
      %v2523 = vpop.f32.mrb[0].mxu0
      %v2524 = vpop.f32.mrb[0].mxu0
      %v2525 = vadd.f32 0.0, %v2524
      %v2526 = vpop.f32.mrb[0].mxu0
      %2527 = vmatprep.mubr.bf16.mxu0 0
      %2528 = vmatmul.mubr.bf16.gmra.mrb[0].mxu0 %v2466
      %v2529 = vpop.f32.mrb[0].mxu0
      %v2530 = vadd.f32 0.0, %v2529
      %v2531 = vpop.f32.mrb[0].mxu0
      %v2532 = vpop.f32.mrb[0].mxu0
      %v2533 = vadd.f32 0.0, %v2532
      %v2534 = vpop.f32.mrb[0].mxu0
      %2535 = vdwg.mxu0
      %v2536 = vadd.f32 %v2438, %v2506
      %v2537 = vadd.f32 %v2439, %v2509
      %v2538 = vadd.f32 %v2440, %v2514
      %v2539 = vadd.f32 %v2441, %v2517
      %v2540 = vadd.f32 %v2442, %v2522
      %v2541 = vadd.f32 %v2443, %v2525
      %v2542 = vadd.f32 %v2444, %v2530
      %v2543 = vadd.f32 %v2445, %v2533
      %v2544 = vpack.c.bf16 %v331, %v329
      %s2545 = scalar_lea.vmem %s4, 40
      %v2546 = vld [vmem:[%s2545] sm:$0x3]
      %v2548 = vsel %vm400, %v2544, 0
      %v2551 = vsel %vm413, %v2546, 0
      %2553 = vmatprep.subr.bf16.mxu0 0
      %2554 = vmatpush1.bf16.msra.mxu0 %v2551
      %2555 = vmatprep.subr.bf16.mxu0 0
      %2556 = vmatpush1.bf16.msra.mxu0 0
      %2557 = vmatprep.subr.bf16.mxu0 0
      %2558 = vmatpush1.bf16.msra.mxu0 0
      %2559 = vmatprep.subr.bf16.mxu0 0
      %2560 = vmatpush1.bf16.msra.mxu0 0
      %2561 = vmatprep.subr.bf16.mxu0 0
      %2562 = vmatpush1.bf16.msra.mxu0 0
      %2563 = vmatprep.subr.bf16.mxu0 0
      %2564 = vmatpush1.bf16.msra.mxu0 0
      %2565 = vmatprep.subr.bf16.mxu0 0
      %2566 = vmatpush1.bf16.msra.mxu0 0
      %2567 = vmatprep.subr.bf16.mxu0 0
      %2568 = vmatpush1.bf16.msra.mxu0 0
      %2569 = vmatprep.subr.bf16.mxu0 0
      %2570 = vmatpush1.bf16.msra.mxu0 0
      %2571 = vmatprep.subr.bf16.mxu0 0
      %2572 = vmatpush1.bf16.msra.mxu0 0
      %2573 = vmatprep.subr.bf16.mxu0 0
      %2574 = vmatpush1.bf16.msra.mxu0 0
      %2575 = vmatprep.subr.bf16.mxu0 0
      %2576 = vmatpush1.bf16.msra.mxu0 0
      %2577 = vmatprep.subr.bf16.mxu0 0
      %2578 = vmatpush1.bf16.msra.mxu0 0
      %2579 = vmatprep.subr.bf16.mxu0 0
      %2580 = vmatpush1.bf16.msra.mxu0 0
      %2581 = vmatprep.subr.bf16.mxu0 0
      %2582 = vmatpush1.bf16.msra.mxu0 0
      %2583 = vmatprep.subr.bf16.mxu0 0
      %2584 = vmatpush1.bf16.msra.mxu0 0
      %2585 = vmatprep.mubr.bf16.mxu0 0
      %2586 = vmatmul.mubr.bf16.gmra.mrb[0].mxu0 %v486
      %v2587 = vpop.f32.mrb[0].mxu0
      %v2588 = vadd.f32 0.0, %v2587
      %v2589 = vpop.f32.mrb[0].mxu0
      %v2590 = vpop.f32.mrb[0].mxu0
      %v2591 = vadd.f32 0.0, %v2590
      %v2592 = vpop.f32.mrb[0].mxu0
      %2593 = vmatprep.mubr.bf16.mxu0 0
      %2594 = vmatmul.mubr.bf16.gmra.mrb[0].mxu0 %v489
      %v2595 = vpop.f32.mrb[0].mxu0
      %v2596 = vadd.f32 0.0, %v2595
      %v2597 = vpop.f32.mrb[0].mxu0
      %v2598 = vpop.f32.mrb[0].mxu0
      %v2599 = vadd.f32 0.0, %v2598
      %v2600 = vpop.f32.mrb[0].mxu0
      %2601 = vmatprep.mubr.bf16.mxu0 0
      %2602 = vmatmul.mubr.bf16.gmra.mrb[0].mxu0 %v492
      %v2603 = vpop.f32.mrb[0].mxu0
      %v2604 = vadd.f32 0.0, %v2603
      %v2605 = vpop.f32.mrb[0].mxu0
      %v2606 = vpop.f32.mrb[0].mxu0
      %v2607 = vadd.f32 0.0, %v2606
      %v2608 = vpop.f32.mrb[0].mxu0
      %2609 = vmatprep.mubr.bf16.mxu0 0
      %2610 = vmatmul.mubr.bf16.gmra.mrb[0].mxu0 %v2548
      %v2611 = vpop.f32.mrb[0].mxu0
      %v2612 = vadd.f32 0.0, %v2611
      %v2613 = vpop.f32.mrb[0].mxu0
      %v2614 = vpop.f32.mrb[0].mxu0
      %v2615 = vadd.f32 0.0, %v2614
      %v2616 = vpop.f32.mrb[0].mxu0
      %2617 = vdwg.mxu0
      %v2618 = vadd.f32 %v2536, %v2588
      %v2619 = vadd.f32 %v2537, %v2591
      %v2620 = vadd.f32 %v2538, %v2596
      %v2621 = vadd.f32 %v2539, %v2599
      %v2622 = vadd.f32 %v2540, %v2604
      %v2623 = vadd.f32 %v2541, %v2607
      %v2624 = vadd.f32 %v2542, %v2612
      %v2625 = vadd.f32 %v2543, %v2615
      %v2626 = vpack.c.bf16 %v351, %v349
      %s2627 = scalar_lea.vmem %s4, 42
      %v2628 = vld [vmem:[%s2627] sm:$0x3]
      %v2630 = vsel %vm400, %v2626, 0
      %v2633 = vsel %vm413, %v2628, 0
      %2635 = vmatprep.subr.bf16.mxu0 0
      %2636 = vmatpush1.bf16.msra.mxu0 %v2633
      %2637 = vmatprep.subr.bf16.mxu0 0
      %2638 = vmatpush1.bf16.msra.mxu0 0
      %2639 = vmatprep.subr.bf16.mxu0 0
      %2640 = vmatpush1.bf16.msra.mxu0 0
      %2641 = vmatprep.subr.bf16.mxu0 0
      %2642 = vmatpush1.bf16.msra.mxu0 0
      %2643 = vmatprep.subr.bf16.mxu0 0
      %2644 = vmatpush1.bf16.msra.mxu0 0
      %2645 = vmatprep.subr.bf16.mxu0 0
      %2646 = vmatpush1.bf16.msra.mxu0 0
      %2647 = vmatprep.subr.bf16.mxu0 0
      %2648 = vmatpush1.bf16.msra.mxu0 0
      %2649 = vmatprep.subr.bf16.mxu0 0
      %2650 = vmatpush1.bf16.msra.mxu0 0
      %2651 = vmatprep.subr.bf16.mxu0 0
      %2652 = vmatpush1.bf16.msra.mxu0 0
      %2653 = vmatprep.subr.bf16.mxu0 0
      %2654 = vmatpush1.bf16.msra.mxu0 0
      %2655 = vmatprep.subr.bf16.mxu0 0
      %2656 = vmatpush1.bf16.msra.mxu0 0
      %2657 = vmatprep.subr.bf16.mxu0 0
      %2658 = vmatpush1.bf16.msra.mxu0 0
      %2659 = vmatprep.subr.bf16.mxu0 0
      %2660 = vmatpush1.bf16.msra.mxu0 0
      %2661 = vmatprep.subr.bf16.mxu0 0
      %2662 = vmatpush1.bf16.msra.mxu0 0
      %2663 = vmatprep.subr.bf16.mxu0 0
      %2664 = vmatpush1.bf16.msra.mxu0 0
      %2665 = vmatprep.subr.bf16.mxu0 0
      %2666 = vmatpush1.bf16.msra.mxu0 0
      %2667 = vmatprep.mubr.bf16.mxu0 0
      %2668 = vmatmul.mubr.bf16.gmra.mrb[0].mxu0 %v405
      %v2669 = vpop.f32.mrb[0].mxu0
      %v2670 = vadd.f32 0.0, %v2669
      %v2671 = vpop.f32.mrb[0].mxu0
      %v2672 = vpop.f32.mrb[0].mxu0
      %v2673 = vadd.f32 0.0, %v2672
      %v2674 = vpop.f32.mrb[0].mxu0
      %2675 = vmatprep.mubr.bf16.mxu0 0
      %2676 = vmatmul.mubr.bf16.gmra.mrb[0].mxu0 %v408
      %v2677 = vpop.f32.mrb[0].mxu0
      %v2678 = vadd.f32 0.0, %v2677
      %v2679 = vpop.f32.mrb[0].mxu0
      %v2680 = vpop.f32.mrb[0].mxu0
      %v2681 = vadd.f32 0.0, %v2680
      %v2682 = vpop.f32.mrb[0].mxu0
      %2683 = vmatprep.mubr.bf16.mxu0 0
      %2684 = vmatmul.mubr.bf16.gmra.mrb[0].mxu0 %v411
      %v2685 = vpop.f32.mrb[0].mxu0
      %v2686 = vadd.f32 0.0, %v2685
      %v2687 = vpop.f32.mrb[0].mxu0
      %v2688 = vpop.f32.mrb[0].mxu0
      %v2689 = vadd.f32 0.0, %v2688
      %v2690 = vpop.f32.mrb[0].mxu0
      %2691 = vmatprep.mubr.bf16.mxu0 0
      %2692 = vmatmul.mubr.bf16.gmra.mrb[0].mxu0 %v2630
      %v2693 = vpop.f32.mrb[0].mxu0
      %v2694 = vadd.f32 0.0, %v2693
      %v2695 = vpop.f32.mrb[0].mxu0
      %v2696 = vpop.f32.mrb[0].mxu0
      %v2697 = vadd.f32 0.0, %v2696
      %v2698 = vpop.f32.mrb[0].mxu0
      %2699 = vdwg.mxu0
      %v2700 = vadd.f32 %v2618, %v2670
      %v2701 = vadd.f32 %v2619, %v2673
      %v2702 = vadd.f32 %v2620, %v2678
      %v2703 = vadd.f32 %v2621, %v2681
      %v2704 = vadd.f32 %v2622, %v2686
      %v2705 = vadd.f32 %v2623, %v2689
      %v2706 = vadd.f32 %v2624, %v2694
      %v2707 = vadd.f32 %v2625, %v2697
      %v2710 = vrot.slane %v331, 1
      %v2711 = vrot.slane %v332, 1
      %v2712 = vsel %vm578, %v2710, %v2711
      %v2714 = vpack.c.bf16 %v2712, %v1764
      %s2715 = scalar_lea.vmem %s4, 44
      %v2716 = vld [vmem:[%s2715] sm:$0x3]
      %v2718 = vsel %vm400, %v2714, 0
      %v2721 = vsel %vm413, %v2716, 0
      %2723 = vmatprep.subr.bf16.mxu0 0
      %2724 = vmatpush1.bf16.msra.mxu0 %v2721
      %2725 = vmatprep.subr.bf16.mxu0 0
      %2726 = vmatpush1.bf16.msra.mxu0 0
      %2727 = vmatprep.subr.bf16.mxu0 0
      %2728 = vmatpush1.bf16.msra.mxu0 0
      %2729 = vmatprep.subr.bf16.mxu0 0
      %2730 = vmatpush1.bf16.msra.mxu0 0
      %2731 = vmatprep.subr.bf16.mxu0 0
      %2732 = vmatpush1.bf16.msra.mxu0 0
      %2733 = vmatprep.subr.bf16.mxu0 0
      %2734 = vmatpush1.bf16.msra.mxu0 0
      %2735 = vmatprep.subr.bf16.mxu0 0
      %2736 = vmatpush1.bf16.msra.mxu0 0
      %2737 = vmatprep.subr.bf16.mxu0 0
      %2738 = vmatpush1.bf16.msra.mxu0 0
      %2739 = vmatprep.subr.bf16.mxu0 0
      %2740 = vmatpush1.bf16.msra.mxu0 0
      %2741 = vmatprep.subr.bf16.mxu0 0
      %2742 = vmatpush1.bf16.msra.mxu0 0
      %2743 = vmatprep.subr.bf16.mxu0 0
      %2744 = vmatpush1.bf16.msra.mxu0 0
      %2745 = vmatprep.subr.bf16.mxu0 0
      %2746 = vmatpush1.bf16.msra.mxu0 0
      %2747 = vmatprep.subr.bf16.mxu0 0
      %2748 = vmatpush1.bf16.msra.mxu0 0
      %2749 = vmatprep.subr.bf16.mxu0 0
      %2750 = vmatpush1.bf16.msra.mxu0 0
      %2751 = vmatprep.subr.bf16.mxu0 0
      %2752 = vmatpush1.bf16.msra.mxu0 0
      %2753 = vmatprep.subr.bf16.mxu0 0
      %2754 = vmatpush1.bf16.msra.mxu0 0
      %2755 = vmatprep.mubr.bf16.mxu0 0
      %2756 = vmatmul.mubr.bf16.gmra.mrb[0].mxu0 %v621
      %v2757 = vpop.f32.mrb[0].mxu0
      %v2758 = vadd.f32 0.0, %v2757
      %v2759 = vpop.f32.mrb[0].mxu0
      %v2760 = vpop.f32.mrb[0].mxu0
      %v2761 = vadd.f32 0.0, %v2760
      %v2762 = vpop.f32.mrb[0].mxu0
      %2763 = vmatprep.mubr.bf16.mxu0 0
      %2764 = vmatmul.mubr.bf16.gmra.mrb[0].mxu0 %v624
      %v2765 = vpop.f32.mrb[0].mxu0
      %v2766 = vadd.f32 0.0, %v2765
      %v2767 = vpop.f32.mrb[0].mxu0
      %v2768 = vpop.f32.mrb[0].mxu0
      %v2769 = vadd.f32 0.0, %v2768
      %v2770 = vpop.f32.mrb[0].mxu0
      %2771 = vmatprep.mubr.bf16.mxu0 0
      %2772 = vmatmul.mubr.bf16.gmra.mrb[0].mxu0 %v627
      %v2773 = vpop.f32.mrb[0].mxu0
      %v2774 = vadd.f32 0.0, %v2773
      %v2775 = vpop.f32.mrb[0].mxu0
      %v2776 = vpop.f32.mrb[0].mxu0
      %v2777 = vadd.f32 0.0, %v2776
      %v2778 = vpop.f32.mrb[0].mxu0
      %2779 = vmatprep.mubr.bf16.mxu0 0
      %2780 = vmatmul.mubr.bf16.gmra.mrb[0].mxu0 %v2718
      %v2781 = vpop.f32.mrb[0].mxu0
      %v2782 = vadd.f32 0.0, %v2781
      %v2783 = vpop.f32.mrb[0].mxu0
      %v2784 = vpop.f32.mrb[0].mxu0
      %v2785 = vadd.f32 0.0, %v2784
      %v2786 = vpop.f32.mrb[0].mxu0
      %2787 = vdwg.mxu0
      %v2788 = vadd.f32 %v2700, %v2758
      %v2789 = vadd.f32 %v2701, %v2761
      %v2790 = vadd.f32 %v2702, %v2766
      %v2791 = vadd.f32 %v2703, %v2769
      %v2792 = vadd.f32 %v2704, %v2774
      %v2793 = vadd.f32 %v2705, %v2777
      %v2794 = vadd.f32 %v2706, %v2782
      %v2795 = vadd.f32 %v2707, %v2785
      %v2798 = vrot.slane %v351, 1
      %v2799 = vrot.slane %v352, 1
      %v2800 = vsel %vm578, %v2798, %v2799
      %v2802 = vpack.c.bf16 %v2800, %v1864
      %s2803 = scalar_lea.vmem %s4, 46
      %v2804 = vld [vmem:[%s2803] sm:$0x3]
      %v2806 = vsel %vm400, %v2802, 0
      %v2809 = vsel %vm413, %v2804, 0
      %2811 = vmatprep.subr.bf16.mxu0 0
      %2812 = vmatpush1.bf16.msra.mxu0 %v2809
      %2813 = vmatprep.subr.bf16.mxu0 0
      %2814 = vmatpush1.bf16.msra.mxu0 0
      %2815 = vmatprep.subr.bf16.mxu0 0
      %2816 = vmatpush1.bf16.msra.mxu0 0
      %2817 = vmatprep.subr.bf16.mxu0 0
      %2818 = vmatpush1.bf16.msra.mxu0 0
      %2819 = vmatprep.subr.bf16.mxu0 0
      %2820 = vmatpush1.bf16.msra.mxu0 0
      %2821 = vmatprep.subr.bf16.mxu0 0
      %2822 = vmatpush1.bf16.msra.mxu0 0
      %2823 = vmatprep.subr.bf16.mxu0 0
      %2824 = vmatpush1.bf16.msra.mxu0 0
      %2825 = vmatprep.subr.bf16.mxu0 0
      %2826 = vmatpush1.bf16.msra.mxu0 0
      %2827 = vmatprep.subr.bf16.mxu0 0
      %2828 = vmatpush1.bf16.msra.mxu0 0
      %2829 = vmatprep.subr.bf16.mxu0 0
      %2830 = vmatpush1.bf16.msra.mxu0 0
      %2831 = vmatprep.subr.bf16.mxu0 0
      %2832 = vmatpush1.bf16.msra.mxu0 0
      %2833 = vmatprep.subr.bf16.mxu0 0
      %2834 = vmatpush1.bf16.msra.mxu0 0
      %2835 = vmatprep.subr.bf16.mxu0 0
      %2836 = vmatpush1.bf16.msra.mxu0 0
      %2837 = vmatprep.subr.bf16.mxu0 0
      %2838 = vmatpush1.bf16.msra.mxu0 0
      %2839 = vmatprep.subr.bf16.mxu0 0
      %2840 = vmatpush1.bf16.msra.mxu0 0
      %2841 = vmatprep.subr.bf16.mxu0 0
      %2842 = vmatpush1.bf16.msra.mxu0 0
      %2843 = vmatprep.mubr.bf16.mxu0 0
      %2844 = vmatmul.mubr.bf16.gmra.mrb[0].mxu0 %v763
      %v2845 = vpop.f32.mrb[0].mxu0
      %v2846 = vadd.f32 0.0, %v2845
      %v2847 = vpop.f32.mrb[0].mxu0
      %v2848 = vpop.f32.mrb[0].mxu0
      %v2849 = vadd.f32 0.0, %v2848
      %v2850 = vpop.f32.mrb[0].mxu0
      %2851 = vmatprep.mubr.bf16.mxu0 0
      %2852 = vmatmul.mubr.bf16.gmra.mrb[0].mxu0 %v766
      %v2853 = vpop.f32.mrb[0].mxu0
      %v2854 = vadd.f32 0.0, %v2853
      %v2855 = vpop.f32.mrb[0].mxu0
      %v2856 = vpop.f32.mrb[0].mxu0
      %v2857 = vadd.f32 0.0, %v2856
      %v2858 = vpop.f32.mrb[0].mxu0
      %2859 = vmatprep.mubr.bf16.mxu0 0
      %2860 = vmatmul.mubr.bf16.gmra.mrb[0].mxu0 %v769
      %v2861 = vpop.f32.mrb[0].mxu0
      %v2862 = vadd.f32 0.0, %v2861
      %v2863 = vpop.f32.mrb[0].mxu0
      %v2864 = vpop.f32.mrb[0].mxu0
      %v2865 = vadd.f32 0.0, %v2864
      %v2866 = vpop.f32.mrb[0].mxu0
      %2867 = vmatprep.mubr.bf16.mxu0 0
      %2868 = vmatmul.mubr.bf16.gmra.mrb[0].mxu0 %v2806
      %v2869 = vpop.f32.mrb[0].mxu0
      %v2870 = vadd.f32 0.0, %v2869
      %v2871 = vpop.f32.mrb[0].mxu0
      %v2872 = vpop.f32.mrb[0].mxu0
      %v2873 = vadd.f32 0.0, %v2872
      %v2874 = vpop.f32.mrb[0].mxu0
      %2875 = vdwg.mxu0
      %v2876 = vadd.f32 %v2788, %v2846
      %v2877 = vadd.f32 %v2789, %v2849
      %v2878 = vadd.f32 %v2790, %v2854
      %v2879 = vadd.f32 %v2791, %v2857
      %v2880 = vadd.f32 %v2792, %v2862
      %v2881 = vadd.f32 %v2793, %v2865
      %v2882 = vadd.f32 %v2794, %v2870
      %v2883 = vadd.f32 %v2795, %v2873
      %v2884 = vrot.slane %v331, 2
      %v2885 = vrot.slane %v332, 2
      %v2886 = vsel %vm847, %v2884, %v2885
      %v2888 = vpack.c.bf16 %v2886, %v1962
      %s2889 = scalar_lea.vmem %s4, 48
      %v2890 = vld [vmem:[%s2889] sm:$0x3]
      %v2892 = vsel %vm400, %v2888, 0
      %v2895 = vsel %vm413, %v2890, 0
      %2897 = vmatprep.subr.bf16.mxu0 0
      %2898 = vmatpush1.bf16.msra.mxu0 %v2895
      %2899 = vmatprep.subr.bf16.mxu0 0
      %2900 = vmatpush1.bf16.msra.mxu0 0
      %2901 = vmatprep.subr.bf16.mxu0 0
      %2902 = vmatpush1.bf16.msra.mxu0 0
      %2903 = vmatprep.subr.bf16.mxu0 0
      %2904 = vmatpush1.bf16.msra.mxu0 0
      %2905 = vmatprep.subr.bf16.mxu0 0
      %2906 = vmatpush1.bf16.msra.mxu0 0
      %2907 = vmatprep.subr.bf16.mxu0 0
      %2908 = vmatpush1.bf16.msra.mxu0 0
      %2909 = vmatprep.subr.bf16.mxu0 0
      %2910 = vmatpush1.bf16.msra.mxu0 0
      %2911 = vmatprep.subr.bf16.mxu0 0
      %2912 = vmatpush1.bf16.msra.mxu0 0
      %2913 = vmatprep.subr.bf16.mxu0 0
      %2914 = vmatpush1.bf16.msra.mxu0 0
      %2915 = vmatprep.subr.bf16.mxu0 0
      %2916 = vmatpush1.bf16.msra.mxu0 0
      %2917 = vmatprep.subr.bf16.mxu0 0
      %2918 = vmatpush1.bf16.msra.mxu0 0
      %2919 = vmatprep.subr.bf16.mxu0 0
      %2920 = vmatpush1.bf16.msra.mxu0 0
      %2921 = vmatprep.subr.bf16.mxu0 0
      %2922 = vmatpush1.bf16.msra.mxu0 0
      %2923 = vmatprep.subr.bf16.mxu0 0
      %2924 = vmatpush1.bf16.msra.mxu0 0
      %2925 = vmatprep.subr.bf16.mxu0 0
      %2926 = vmatpush1.bf16.msra.mxu0 0
      %2927 = vmatprep.subr.bf16.mxu0 0
      %2928 = vmatpush1.bf16.msra.mxu0 0
      %2929 = vmatprep.mubr.bf16.mxu0 0
      %2930 = vmatmul.mubr.bf16.gmra.mrb[0].mxu0 %v890
      %v2931 = vpop.f32.mrb[0].mxu0
      %v2932 = vadd.f32 0.0, %v2931
      %v2933 = vpop.f32.mrb[0].mxu0
      %v2934 = vpop.f32.mrb[0].mxu0
      %v2935 = vadd.f32 0.0, %v2934
      %v2936 = vpop.f32.mrb[0].mxu0
      %2937 = vmatprep.mubr.bf16.mxu0 0
      %2938 = vmatmul.mubr.bf16.gmra.mrb[0].mxu0 %v893
      %v2939 = vpop.f32.mrb[0].mxu0
      %v2940 = vadd.f32 0.0, %v2939
      %v2941 = vpop.f32.mrb[0].mxu0
      %v2942 = vpop.f32.mrb[0].mxu0
      %v2943 = vadd.f32 0.0, %v2942
      %v2944 = vpop.f32.mrb[0].mxu0
      %2945 = vmatprep.mubr.bf16.mxu0 0
      %2946 = vmatmul.mubr.bf16.gmra.mrb[0].mxu0 %v896
      %v2947 = vpop.f32.mrb[0].mxu0
      %v2948 = vadd.f32 0.0, %v2947
      %v2949 = vpop.f32.mrb[0].mxu0
      %v2950 = vpop.f32.mrb[0].mxu0
      %v2951 = vadd.f32 0.0, %v2950
      %v2952 = vpop.f32.mrb[0].mxu0
      %2953 = vmatprep.mubr.bf16.mxu0 0
      %2954 = vmatmul.mubr.bf16.gmra.mrb[0].mxu0 %v2892
      %v2955 = vpop.f32.mrb[0].mxu0
      %v2956 = vadd.f32 0.0, %v2955
      %v2957 = vpop.f32.mrb[0].mxu0
      %v2958 = vpop.f32.mrb[0].mxu0
      %v2959 = vadd.f32 0.0, %v2958
      %v2960 = vpop.f32.mrb[0].mxu0
      %2961 = vdwg.mxu0
      %v2962 = vadd.f32 %v2876, %v2932
      %v2963 = vadd.f32 %v2877, %v2935
      %v2964 = vadd.f32 %v2878, %v2940
      %v2965 = vadd.f32 %v2879, %v2943
      %v2966 = vadd.f32 %v2880, %v2948
      %v2967 = vadd.f32 %v2881, %v2951
      %v2968 = vadd.f32 %v2882, %v2956
      %v2969 = vadd.f32 %v2883, %v2959
      %v2970 = vld [vmem:[%s5] sm:$0x1]
      %v2972 = vlaneseq
      %v2973 = vshrl.u32 %v2972, 7
      %v2974 = vsub.s32 0, %v2973
      %v2975 = vrot.slane %v2970, %v2974
      %v2977 = vadd.f32 %v2962, %v2975
      %v2978 = vadd.f32 %v2963, %v2975
      %v2979 = vadd.f32 %v2964, %v2975
      %v2980 = vadd.f32 %v2965, %v2975
      %v2981 = vadd.f32 %v2966, %v2975
      %v2982 = vadd.f32 %v2967, %v2975
      %v2983 = vadd.f32 %v2968, %v2975
      %v2984 = vadd.f32 %v2969, %v2975
      %vm2985 = vcmask 64512
      %2986 = vst.msk [vmem:[%s311] sm:$0xff] %vm2985, %v2977
      %2987 = vst.msk [vmem:[%s311 + $0x8] sm:$0xff] %vm2985, %v2978
      %2988 = vst.msk [vmem:[%s311 + $0x10] sm:$0xff] %vm2985, %v2979
      %2989 = vst.msk [vmem:[%s311 + $0x18] sm:$0xff] %vm2985, %v2980
      %2990 = vst.msk [vmem:[%s311 + $0x20] sm:$0xff] %vm2985, %v2981
      %2991 = vst.msk [vmem:[%s311 + $0x28] sm:$0xff] %vm2985, %v2982
      %2992 = vst.msk [vmem:[%s311 + $0x30] sm:$0xff] %vm2985, %v2983
      %2993 = vst.msk [vmem:[%s311 + $0x38] sm:$0xff] %vm2985, %v2984
      %p2994 = scmp.lt.s32.totalorder %s17, 1
      %s2995 = scalar_select %p2994, %s17, 1
      %s2996 = smul.addr %s2995, 8
      %s2997 = smul.addr %s2996, 8
      %s2998 = scalar_lea.vmem %s6, %s2997
      // Predicated region
      $region45: #{encoder_forward.3} parent=43 // pred_check
        %p2999 = pneg %p181
      $region46: #{encoder_forward.3} parent=43 // pred_check_branch
        %3001 = sbr.rel (%p2999) target = $region48
      $region47: #{encoder_forward.3} parent=43 // pred_region
        _
      $region48: #{encoder_forward.3} parent=43 // pred_fallthru
        _
    $region44: #{encoder_forward.3} parent=5 // pred_fallthru
      _
    %p3002 = scmp.le.s32.totalorder 2, %s12
    // Predicated region
    $region49: #{encoder_forward.3} parent=5 // pred_check
      %p3003 = pneg %p3002
    $region50: #{encoder_forward.3} parent=5 // pred_check_branch
      %3005 = sbr.rel (%p3003) target = $region52
    $region51: #{encoder_forward.3} parent=5 // pred_region
      %s3006 = ssub.s32 %s12, 2
      // Predicated region
      $region53: #{encoder_forward.3} parent=51 // pred_check
        %p3007 = pneg %p187
      $region54: #{encoder_forward.3} parent=51 // pred_check_branch
        %3009 = sbr.rel (%p3007) target = $region56
      $region55: #{encoder_forward.3} parent=51 // pred_region
        %p3010 = scmp.lt.s32.totalorder %s18, 1
        %s3011 = scalar_select %p3010, %s18, 1
        %s3012 = smul.addr %s3011, 8
        %s3013 = smul.addr %s3012, 8
        %s3014 = scalar_lea.vmem %s6, %s3013
      $region56: #{encoder_forward.3} parent=51 // pred_fallthru
        _
    $region52: #{encoder_forward.3} parent=5 // pred_fallthru
      _
  $region6: #{encoder_forward.3} parent=0 // loop_footer
    %s16 = sadd.s32 1, %s12
  $region7: #{encoder_forward.3} parent=0 // loop_footer_branch
    %11 = sbr.rel target = $region3
  $region8: #{encoder_forward.3} parent=0 // loop_exit
    _

</llo_original>
